<compile_context>
chip_gen: v7x
topology: tpu7x:2x2x1
jax: 0.10.0
libtpu: 0.0.40
codegen_flags: <defaults>
</compile_context>

<pallas_src>
import jax
import jax.numpy as jnp
from jax.experimental import pallas as pl
from jax.experimental.pallas import tpu as pltpu

NUM_CLASSES = 4
HIDDEN = 16          # LSTM hidden size per direction
CONV_OUT = 32        # Conv1d out_channels == LSTM input_size
KSIZE = 5            # Conv1d kernel_size
BN_EPS = 1e-5


def cnn_bilstm_kernel(x_ref, convw_ref, convb_ref,
                      wih_f_ref, whh_f_ref, b_f_ref,
                      wih_b_ref, b_b_ref,
                      wfc_ref, bfc_ref,
                      out_ref, gates_x_ref):
    BB, L = x_ref.shape
    K, C = convw_ref.shape
    T = L - K + 1
    H = whh_f_ref.shape[0]

    # ---- Conv1d ("valid") + folded eval-mode BatchNorm + ReLU, built time-major ----
    # Only x (a tiny (BB, L) tile) is transposed; everything downstream is already time-major
    # so the recurrence reads clean (BB, 4H) tiles with no large relayout.
    x_t = x_ref[...].T                               # (L, BB)
    conv_w = convw_ref[...]                          # (K, C), BN scale folded in (f32)
    acc = jnp.zeros((T, BB, C), jnp.float32)
    for k in range(K):                               # K == 5, static Python unroll
        acc = acc + x_t[k:k + T, :, None] * conv_w[k:k + 1, :][None]   # (T,BB,1)*(1,1,C)
    feat = jnp.maximum(acc + convb_ref[...], 0.0)    # conv bias + BN shift folded; Dropout = id (eval)

    # ---- backward-direction LSTM (only its FIRST step is observable) ----
    # PyTorch's output[:, -1, H:2H] is the backward cell after consuming only timestep T-1,
    # starting from h0 = c0 = 0; the h @ W_hh_b term is exactly 0, so W_hh_b never matters.
    # Computed here (prologue) so `feat` is dead before the unrolled recurrence.
    feat_last = feat[T - 1]                          # (BB, C)
    gates_b = jnp.dot(feat_last.astype(jnp.bfloat16), wih_b_ref[...],
                      preferred_element_type=jnp.float32) + b_b_ref[...]
    tb = jnp.tanh(gates_b)                           # single EUP push; i/f/o cols pre-scaled by 0.5
    ifo_b = 0.5 * tb[:, :3 * H] + 0.5                # sigmoid(x) = 0.5*tanh(x/2) + 0.5
    g_b = tb[:, 3 * H:]
    c_b = ifo_b[:, :H] * g_b                         # f * c0 == 0
    h_bwd = ifo_b[:, 2 * H:3 * H] * jnp.tanh(c_b)

    # ---- Hoisted LSTM input projection: ONE MXU matmul covers all T timesteps ----
    feat2d = feat.reshape(T * BB, C)                 # free: same physical layout as (T, BB, C)
    gates_x = jnp.dot(feat2d.astype(jnp.bfloat16), wih_f_ref[...],
                      preferred_element_type=jnp.float32) + b_f_ref[...]
    gates_x_ref[...] = gates_x.reshape(T, BB, 4 * H)  # time-major (T, BB, 4H) VMEM scratch
    # (feat / gates_x SSA values are dead past this point -> no spill pressure in the loop)

    # ---- forward-direction LSTM: per-step work is only h @ W_hh + cell update ----
    whh_f = whh_f_ref[...]                           # (H, 4H) bf16, loaded once
    h0 = jnp.zeros((BB, H), jnp.float32)
    c0 = jnp.zeros((BB, H), jnp.float32)

    def step(t, carry):
        h, c = carry
        gates = gates_x_ref[t] + jnp.dot(h.astype(jnp.bfloat16), whh_f,
                                         preferred_element_type=jnp.float32)
        t_all = jnp.tanh(gates)                      # one EUP push over the full (BB, 4H) tile
        ifo = 0.5 * t_all[:, :3 * H] + 0.5           # (i, f, o) — columns pre-scaled by 0.5
        g = t_all[:, 3 * H:]
        c_new = ifo[:, H:2 * H] * c + ifo[:, :H] * g
        h_new = ifo[:, 2 * H:3 * H] * jnp.tanh(c_new)
        return h_new, c_new

    h_fwd, _ = jax.lax.fori_loop(0, T, step, (h0, c0), unroll=True)

    # ---- Linear(2H -> num_classes) + softmax over classes ----
    last = jnp.concatenate([h_fwd, h_bwd], axis=-1)           # (BB, 2H) == output[:, -1, :]
    logits = jnp.dot(last.astype(jnp.bfloat16), wfc_ref[...],
                     preferred_element_type=jnp.float32) + bfc_ref[...]
    m = jnp.max(logits, axis=-1, keepdims=True)
    e = jnp.exp(logits - m)
    denom = jnp.sum(e, axis=-1, keepdims=True)
    # approx reciprocal (EUP slot): rows sum to ~1 within the EUP approximation error;
    # fine for inference/argmax.  Use exact 1/denom if calibrated probabilities matter.
    out_ref[...] = e * pl.reciprocal(denom, approx=True)


def cnn_bilstm_forward(x, params, *, block_b=None, core_parallel=False):
    """x: (B, 1, L) float32 (PyTorch NCW conv input). Returns (B, NUM_CLASSES) softmax probs.

    block_b=None      -> single grid step over the whole batch (best on single-TC v5e/v6e).
    core_parallel=True -> intended for v7x: pass block_b=B//2 so each TensorCore runs exactly
                          one block; uses pltpu.CORE_PARALLEL on the batch grid axis.
    """
    B, c_in, L = x.shape
    assert c_in == 1, "Conv1d has in_channels=1"
    if block_b is None:
        block_b = B
    assert B % block_b == 0, "batch must be a multiple of the batch block"
    T = L - KSIZE + 1
    x2 = x.reshape(B, L).astype(jnp.float32)

    args = (x2,
            params["conv_w"], params["conv_b"],
            params["wih_f"], params["whh_f"], params["b_f"],
            params["wih_b"], params["b_b"],
            params["fc_w"], params["fc_b"])

    def full2d(a):  # whole (2-D) parameter array, same block for every grid step
        return pl.BlockSpec(a.shape, lambda i: (0, 0))

    grid_spec = pltpu.PrefetchScalarGridSpec(
        num_scalar_prefetch=0,
        grid=(B // block_b,),
        in_specs=[pl.BlockSpec((block_b, L), lambda i: (i, 0))]
                 + [full2d(a) for a in args[1:]],
        out_specs=pl.BlockSpec((block_b, NUM_CLASSES), lambda i: (i, 0)),
        scratch_shapes=[pltpu.VMEM((T, block_b, 4 * HIDDEN), jnp.float32)],
    )
    if core_parallel:
        dim_sem = (pltpu.CORE_PARALLEL,)     # v7x: shard batch blocks across the 2 TensorCores
    else:
        dim_sem = ("arbitrary",)             # grid is (usually) a single step anyway
    return pl.pallas_call(
        cnn_bilstm_kernel,
        out_shape=jax.ShapeDtypeStruct((B, NUM_CLASSES), jnp.float32),
        grid_spec=grid_spec,
        compiler_params=pltpu.CompilerParams(dimension_semantics=dim_sem),
    )(*args)


def init_raw_params(key):
    """Raw parameters in PyTorch-equivalent layout (weights pre-transposed, gate order i,f,g,o)."""
    ks = jax.random.split(key, 14)

    def rn(k, shape, scale):
        return jax.random.normal(k, shape, jnp.float32) * scale

    H = HIDDEN
    s = 1.0 / float(H) ** 0.5
    return {
        # Conv1d(1, 32, 5): PyTorch weight (32,1,5) stored transposed as (5, 32)
        "conv_w": rn(ks[0], (KSIZE, CONV_OUT), 0.3),
        "conv_b": rn(ks[1], (1, CONV_OUT), 0.1),
        # BatchNorm1d(32) eval-mode parameters
        "bn_gamma": 1.0 + 0.1 * jax.random.normal(ks[2], (1, CONV_OUT), jnp.float32),
        "bn_beta": 0.1 * jax.random.normal(ks[3], (1, CONV_OUT), jnp.float32),
        "bn_mean": 0.1 * jax.random.normal(ks[4], (1, CONV_OUT), jnp.float32),
        "bn_var": 1.0 + 0.1 * jnp.abs(jax.random.normal(ks[5], (1, CONV_OUT), jnp.float32)),
        # BiLSTM(32 -> 16): W_ih^T (32,64), W_hh^T (16,64), combined bias (b_ih+b_hh) (1,64)
        "wih_f": rn(ks[6], (CONV_OUT, 4 * H), s),
        "whh_f": rn(ks[7], (H, 4 * H), s),
        "b_f": rn(ks[8], (1, 4 * H), 0.1),
        "wih_b": rn(ks[9], (CONV_OUT, 4 * H), s),
        "whh_b": rn(ks[10], (H, 4 * H), s),   # never affects output[:, -1, H:] (h0 == 0)
        "b_b": rn(ks[11], (1, 4 * H), 0.1),
        # Linear(32, num_classes), weight stored transposed (32, 4)
        "fc_w": rn(ks[12], (2 * H, NUM_CLASSES), 0.2),
        "fc_b": rn(ks[13], (1, NUM_CLASSES), 0.1),
        # NOTE: `fc.weight_regularizer` in the PyTorch module is unused in forward -> omitted.
    }


def prepare_kernel_params(raw):
    """Host-side folding:
       * BatchNorm (eval) folded into conv weight/bias.
       * LSTM gate columns permuted (i,f,g,o) -> (i,f,o,g).
       * i/f/o gate columns pre-scaled by 0.5 so the kernel uses a single tanh per step
         (sigmoid(x) = 0.5*tanh(x/2) + 0.5).
       * MXU-side weights cast to bf16 (accumulation stays f32 via preferred_element_type).
    """
    H = HIDDEN
    scale = raw["bn_gamma"] / jnp.sqrt(raw["bn_var"] + BN_EPS)      # (1, C)
    shift = raw["bn_beta"] - raw["bn_mean"] * scale                 # (1, C)

    def perm(m):  # permute gate columns: (i, f, g, o) -> (i, f, o, g)
        return jnp.concatenate([m[..., :2 * H], m[..., 3 * H:], m[..., 2 * H:3 * H]], axis=-1)

    def halve_ifo(m):  # pre-scale (i, f, o) columns by 0.5 for the single-tanh activation
        return jnp.concatenate([0.5 * m[..., :3 * H], m[..., 3 * H:]], axis=-1)

    bf16 = lambda m: m.astype(jnp.bfloat16)

    return {
        "conv_w": raw["conv_w"] * scale,                    # (K, C) f32, BN scale folded
        "conv_b": raw["conv_b"] * scale + shift,            # (1, C) f32, conv bias + BN folded
        "wih_f": bf16(halve_ifo(perm(raw["wih_f"]))),
        "whh_f": bf16(halve_ifo(perm(raw["whh_f"]))),
        "b_f": halve_ifo(perm(raw["b_f"])),                 # biases stay f32
        "wih_b": bf16(halve_ifo(perm(raw["wih_b"]))),
        "b_b": halve_ifo(perm(raw["b_b"])),
        # whh_b intentionally dropped: backward cell's only relevant step starts from h = 0.
        "fc_w": bf16(raw["fc_w"]),
        "fc_b": raw["fc_b"],
    }


def reference_forward(x, raw):
    """Pure-JAX f32 reference with PyTorch eval semantics (unfolded params, gate order i,f,g,o)."""
    B, _, L = x.shape
    T = L - KSIZE + 1
    H = HIDDEN
    xx = x.reshape(B, L).astype(jnp.float32)

    feat = jnp.zeros((B, T, CONV_OUT), jnp.float32)
    for k in range(KSIZE):
        feat = feat + xx[:, k:k + T, None] * raw["conv_w"][k][None, None, :]
    feat = feat + raw["conv_b"]
    scale = raw["bn_gamma"] / jnp.sqrt(raw["bn_var"] + BN_EPS)
    feat = (feat - raw["bn_mean"]) * scale + raw["bn_beta"]
    feat = jnp.maximum(feat, 0.0)

    def cell(xt, h, c, wih, whh, b):
        gates = xt @ wih + h @ whh + b
        i = jax.nn.sigmoid(gates[:, :H])
        f = jax.nn.sigmoid(gates[:, H:2 * H])
        g = jnp.tanh(gates[:, 2 * H:3 * H])
        o = jax.nn.sigmoid(gates[:, 3 * H:])
        c = f * c + i * g
        return o * jnp.tanh(c), c

    h = jnp.zeros((B, H), jnp.float32)
    c = jnp.zeros((B, H), jnp.float32)
    for t in range(T):
        h, c = cell(feat[:, t], h, c, raw["wih_f"], raw["whh_f"], raw["b_f"])
    hb, _ = cell(feat[:, T - 1], jnp.zeros((B, H), jnp.float32), jnp.zeros((B, H), jnp.float32),
                 raw["wih_b"], raw["whh_b"], raw["b_b"])
    last = jnp.concatenate([h, hb], axis=-1)
    logits = last @ raw["fc_w"] + raw["fc_b"]
    return jax.nn.softmax(logits, axis=-1)


if __name__ == "__main__":
    key = jax.random.PRNGKey(0)
    pkey, xkey = jax.random.split(key)

    raw = init_raw_params(pkey)
    params = prepare_kernel_params(raw)

    B, L = 16, 32                       # conv input (B, 1, L); T = 28
    x = jax.random.normal(xkey, (B, 1, L), jnp.float32)

    # Default path: block_b = B -> single grid step (best on single-TC v5e/v6e, and safe
    # everywhere).  On v7x use: cnn_bilstm_forward(x, params, block_b=B // 2, core_parallel=True)
    out = cnn_bilstm_forward(x, params)
    out = jax.block_until_ready(out)

    assert out.shape == (B, NUM_CLASSES)
    assert bool(jnp.all(jnp.isfinite(out)))
    row_sums = jnp.sum(out, axis=1)
    assert bool(jnp.all(jnp.abs(row_sums - 1.0) < 1e-2)), "softmax rows must sum to ~1"

    ref = reference_forward(x, raw)
    # 2.5e-2 tolerance: headroom for bf16 MXU operands over the 28-step chain + approx recip.
    assert bool(jnp.all(jnp.abs(out - ref) < 2.5e-2)), "kernel deviates from pure-JAX reference"

    print("KERNEL_OK")
</pallas_src>

<mosaic_0001>
module attributes {stable_mosaic.version = 11 : i64} {
  func.func @cnn_bilstm_kernel(%arg0: i32, %arg1: memref<16x32xf32, #tpu.memory_space<vmem>>, %arg2: memref<5x32xf32, #tpu.memory_space<vmem>>, %arg3: memref<1x32xf32, #tpu.memory_space<vmem>>, %arg4: memref<32x64xbf16, #tpu.memory_space<vmem>>, %arg5: memref<16x64xbf16, #tpu.memory_space<vmem>>, %arg6: memref<1x64xf32, #tpu.memory_space<vmem>>, %arg7: memref<32x64xbf16, #tpu.memory_space<vmem>>, %arg8: memref<1x64xf32, #tpu.memory_space<vmem>>, %arg9: memref<32x4xbf16, #tpu.memory_space<vmem>>, %arg10: memref<1x4xf32, #tpu.memory_space<vmem>>, %arg11: memref<16x4xf32, #tpu.memory_space<vmem>>, %arg12: memref<28x16x64xf32, #tpu.memory_space<vmem>>) attributes {dimension_semantics = [#tpu.dimension_semantics<arbitrary>], iteration_bounds = array<i64: 1>, scalar_prefetch = 0 : i64, scratch_operands = 1 : i64, tpu.core_type = #tpu.core_type<tc>, window_params = [{transform_indices = @transform_0, window_bounds = array<i64: 16, 32>}, {pipeline_mode = #tpu.pipeline_mode<synchronous>, transform_indices = @transform_1, window_bounds = array<i64: 5, 32>}, {pipeline_mode = #tpu.pipeline_mode<synchronous>, transform_indices = @transform_2, window_bounds = array<i64: 1, 32>}, {pipeline_mode = #tpu.pipeline_mode<synchronous>, transform_indices = @transform_3, window_bounds = array<i64: 32, 64>}, {pipeline_mode = #tpu.pipeline_mode<synchronous>, transform_indices = @transform_4, window_bounds = array<i64: 16, 64>}, {pipeline_mode = #tpu.pipeline_mode<synchronous>, transform_indices = @transform_5, window_bounds = array<i64: 1, 64>}, {pipeline_mode = #tpu.pipeline_mode<synchronous>, transform_indices = @transform_6, window_bounds = array<i64: 32, 64>}, {pipeline_mode = #tpu.pipeline_mode<synchronous>, transform_indices = @transform_7, window_bounds = array<i64: 1, 64>}, {pipeline_mode = #tpu.pipeline_mode<synchronous>, transform_indices = @transform_8, window_bounds = array<i64: 32, 4>}, {pipeline_mode = #tpu.pipeline_mode<synchronous>, transform_indices = @transform_9, window_bounds = array<i64: 1, 4>}, {transform_indices = @transform_10, window_bounds = array<i64: 16, 4>}]} {
    %c0 = arith.constant 0 : index
    %c0_0 = arith.constant 0 : index
    %0 = vector.load %arg1[%c0, %c0_0] : memref<16x32xf32, #tpu.memory_space<vmem>>, vector<16x32xf32>
    %1 = tpu.transpose %0, [1, 0] : vector<16x32xf32> -> vector<32x16xf32>
    %c0_1 = arith.constant 0 : index
    %c0_2 = arith.constant 0 : index
    %2 = vector.load %arg2[%c0_1, %c0_2] : memref<5x32xf32, #tpu.memory_space<vmem>>, vector<5x32xf32>
    %cst = arith.constant 0.000000e+00 : f32
    %3 = vector.broadcast %cst : f32 to vector<28x16x32xf32>
    %4 = vector.extract_strided_slice %1 {offsets = [0, 0], sizes = [28, 16], strides = [1, 1]} : vector<32x16xf32> to vector<28x16xf32>
    %5 = vector.shape_cast %4 : vector<28x16xf32> to vector<28x16x1xf32>
    %6 = vector.extract_strided_slice %2 {offsets = [0, 0], sizes = [1, 32], strides = [1, 1]} : vector<5x32xf32> to vector<1x32xf32>
    %7 = vector.shape_cast %6 : vector<1x32xf32> to vector<1x1x32xf32>
    %8 = vector.broadcast %5 : vector<28x16x1xf32> to vector<28x16x32xf32>
    %9 = vector.broadcast %7 : vector<1x1x32xf32> to vector<28x16x32xf32>
    %10 = arith.mulf %8, %9 : vector<28x16x32xf32>
    %11 = arith.addf %3, %10 : vector<28x16x32xf32>
    %12 = vector.extract_strided_slice %1 {offsets = [1, 0], sizes = [28, 16], strides = [1, 1]} : vector<32x16xf32> to vector<28x16xf32>
    %13 = vector.shape_cast %12 : vector<28x16xf32> to vector<28x16x1xf32>
    %14 = vector.extract_strided_slice %2 {offsets = [1, 0], sizes = [1, 32], strides = [1, 1]} : vector<5x32xf32> to vector<1x32xf32>
    %15 = vector.shape_cast %14 : vector<1x32xf32> to vector<1x1x32xf32>
    %16 = vector.broadcast %13 : vector<28x16x1xf32> to vector<28x16x32xf32>
    %17 = vector.broadcast %15 : vector<1x1x32xf32> to vector<28x16x32xf32>
    %18 = arith.mulf %16, %17 : vector<28x16x32xf32>
    %19 = arith.addf %11, %18 : vector<28x16x32xf32>
    %20 = vector.extract_strided_slice %1 {offsets = [2, 0], sizes = [28, 16], strides = [1, 1]} : vector<32x16xf32> to vector<28x16xf32>
    %21 = vector.shape_cast %20 : vector<28x16xf32> to vector<28x16x1xf32>
    %22 = vector.extract_strided_slice %2 {offsets = [2, 0], sizes = [1, 32], strides = [1, 1]} : vector<5x32xf32> to vector<1x32xf32>
    %23 = vector.shape_cast %22 : vector<1x32xf32> to vector<1x1x32xf32>
    %24 = vector.broadcast %21 : vector<28x16x1xf32> to vector<28x16x32xf32>
    %25 = vector.broadcast %23 : vector<1x1x32xf32> to vector<28x16x32xf32>
    %26 = arith.mulf %24, %25 : vector<28x16x32xf32>
    %27 = arith.addf %19, %26 : vector<28x16x32xf32>
    %28 = vector.extract_strided_slice %1 {offsets = [3, 0], sizes = [28, 16], strides = [1, 1]} : vector<32x16xf32> to vector<28x16xf32>
    %29 = vector.shape_cast %28 : vector<28x16xf32> to vector<28x16x1xf32>
    %30 = vector.extract_strided_slice %2 {offsets = [3, 0], sizes = [1, 32], strides = [1, 1]} : vector<5x32xf32> to vector<1x32xf32>
    %31 = vector.shape_cast %30 : vector<1x32xf32> to vector<1x1x32xf32>
    %32 = vector.broadcast %29 : vector<28x16x1xf32> to vector<28x16x32xf32>
    %33 = vector.broadcast %31 : vector<1x1x32xf32> to vector<28x16x32xf32>
    %34 = arith.mulf %32, %33 : vector<28x16x32xf32>
    %35 = arith.addf %27, %34 : vector<28x16x32xf32>
    %36 = vector.extract_strided_slice %1 {offsets = [4, 0], sizes = [28, 16], strides = [1, 1]} : vector<32x16xf32> to vector<28x16xf32>
    %37 = vector.shape_cast %36 : vector<28x16xf32> to vector<28x16x1xf32>
    %38 = vector.extract_strided_slice %2 {offsets = [4, 0], sizes = [1, 32], strides = [1, 1]} : vector<5x32xf32> to vector<1x32xf32>
    %39 = vector.shape_cast %38 : vector<1x32xf32> to vector<1x1x32xf32>
    %40 = vector.broadcast %37 : vector<28x16x1xf32> to vector<28x16x32xf32>
    %41 = vector.broadcast %39 : vector<1x1x32xf32> to vector<28x16x32xf32>
    %42 = arith.mulf %40, %41 : vector<28x16x32xf32>
    %43 = arith.addf %35, %42 : vector<28x16x32xf32>
    %c0_3 = arith.constant 0 : index
    %c0_4 = arith.constant 0 : index
    %44 = vector.load %arg3[%c0_3, %c0_4] : memref<1x32xf32, #tpu.memory_space<vmem>>, vector<1x32xf32>
    %45 = vector.shape_cast %44 : vector<1x32xf32> to vector<1x1x32xf32>
    %46 = vector.broadcast %45 : vector<1x1x32xf32> to vector<28x16x32xf32>
    %47 = arith.addf %43, %46 : vector<28x16x32xf32>
    %cst_5 = arith.constant 0.000000e+00 : f32
    %48 = vector.broadcast %cst_5 : f32 to vector<28x16x32xf32>
    %49 = arith.maximumf %47, %48 : vector<28x16x32xf32>
    %50 = vector.extract_strided_slice %49 {offsets = [27, 0, 0], sizes = [1, 16, 32], strides = [1, 1, 1]} : vector<28x16x32xf32> to vector<1x16x32xf32>
    %51 = vector.shape_cast %50 : vector<1x16x32xf32> to vector<16x32xf32>
    %52 = arith.truncf %51 : vector<16x32xf32> to vector<16x32xbf16>
    %c0_6 = arith.constant 0 : index
    %c0_7 = arith.constant 0 : index
    %53 = vector.load %arg7[%c0_6, %c0_7] : memref<32x64xbf16, #tpu.memory_space<vmem>>, vector<32x64xbf16>
    %cst_8 = arith.constant dense<0.000000e+00> : vector<16x64xf32>
    %54 = tpu.matmul %52, %53, %cst_8 {dimension_numbers = #tpu.dot_dimension_numbers<[1], [0], [0], [1], [0, 0, 1, 1], [], []>} : vector<16x32xbf16>, vector<32x64xbf16>, vector<16x64xf32> -> vector<16x64xf32>
    %c0_9 = arith.constant 0 : index
    %c0_10 = arith.constant 0 : index
    %55 = vector.load %arg8[%c0_9, %c0_10] : memref<1x64xf32, #tpu.memory_space<vmem>>, vector<1x64xf32>
    %56 = vector.broadcast %55 : vector<1x64xf32> to vector<16x64xf32>
    %57 = arith.addf %54, %56 : vector<16x64xf32>
    %58 = math.tanh %57 : vector<16x64xf32>
    %59 = vector.extract_strided_slice %58 {offsets = [0, 0], sizes = [16, 48], strides = [1, 1]} : vector<16x64xf32> to vector<16x48xf32>
    %cst_11 = arith.constant 5.000000e-01 : f32
    %60 = vector.broadcast %cst_11 : f32 to vector<16x48xf32>
    %61 = arith.mulf %60, %59 : vector<16x48xf32>
    %cst_12 = arith.constant 5.000000e-01 : f32
    %62 = vector.broadcast %cst_12 : f32 to vector<16x48xf32>
    %63 = arith.addf %61, %62 : vector<16x48xf32>
    %64 = vector.extract_strided_slice %58 {offsets = [0, 48], sizes = [16, 16], strides = [1, 1]} : vector<16x64xf32> to vector<16x16xf32>
    %65 = vector.extract_strided_slice %63 {offsets = [0, 0], sizes = [16, 16], strides = [1, 1]} : vector<16x48xf32> to vector<16x16xf32>
    %66 = arith.mulf %65, %64 : vector<16x16xf32>
    %67 = vector.extract_strided_slice %63 {offsets = [0, 32], sizes = [16, 16], strides = [1, 1]} : vector<16x48xf32> to vector<16x16xf32>
    %68 = math.tanh %66 : vector<16x16xf32>
    %69 = arith.mulf %67, %68 : vector<16x16xf32>
    %70 = vector.shape_cast %49 : vector<28x16x32xf32> to vector<448x32xf32>
    %71 = arith.truncf %70 : vector<448x32xf32> to vector<448x32xbf16>
    %c0_13 = arith.constant 0 : index
    %c0_14 = arith.constant 0 : index
    %72 = vector.load %arg4[%c0_13, %c0_14] : memref<32x64xbf16, #tpu.memory_space<vmem>>, vector<32x64xbf16>
    %cst_15 = arith.constant dense<0.000000e+00> : vector<448x64xf32>
    %73 = tpu.matmul %71, %72, %cst_15 {dimension_numbers = #tpu.dot_dimension_numbers<[1], [0], [0], [1], [0, 0, 1, 1], [], []>} : vector<448x32xbf16>, vector<32x64xbf16>, vector<448x64xf32> -> vector<448x64xf32>
    %c0_16 = arith.constant 0 : index
    %c0_17 = arith.constant 0 : index
    %74 = vector.load %arg6[%c0_16, %c0_17] : memref<1x64xf32, #tpu.memory_space<vmem>>, vector<1x64xf32>
    %75 = vector.broadcast %74 : vector<1x64xf32> to vector<448x64xf32>
    %76 = arith.addf %73, %75 : vector<448x64xf32>
    %77 = vector.shape_cast %76 : vector<448x64xf32> to vector<28x16x64xf32>
    %c0_18 = arith.constant 0 : index
    %c0_19 = arith.constant 0 : index
    %c0_20 = arith.constant 0 : index
    %78 = vector.load %arg12[%c0_18, %c0_19, %c0_20] : memref<28x16x64xf32, #tpu.memory_space<vmem>>, vector<28x16x64xf32>
    tpu.vector_store %arg12[%c0_18, %c0_19, %c0_20], %77 {strides = array<i32>} : memref<28x16x64xf32, #tpu.memory_space<vmem>>, vector<28x16x64xf32>,
    %c0_21 = arith.constant 0 : index
    %c0_22 = arith.constant 0 : index
    %79 = vector.load %arg5[%c0_21, %c0_22] : memref<16x64xbf16, #tpu.memory_space<vmem>>, vector<16x64xbf16>
    %cst_23 = arith.constant 0.000000e+00 : f32
    %80 = vector.broadcast %cst_23 : f32 to vector<16x16xf32>
    %cst_24 = arith.constant 0.000000e+00 : f32
    %81 = vector.broadcast %cst_24 : f32 to vector<16x16xf32>
    %c0_i32 = arith.constant 0 : i32
    %82 = arith.index_cast %c0_i32 : i32 to index
    %c0_25 = arith.constant 0 : index
    %c0_26 = arith.constant 0 : index
    %83 = vector.load %arg12[%82, %c0_25, %c0_26] : memref<28x16x64xf32, #tpu.memory_space<vmem>>, vector<1x16x64xf32>
    %84 = vector.shape_cast %83 : vector<1x16x64xf32> to vector<16x64xf32>
    %85 = arith.truncf %80 : vector<16x16xf32> to vector<16x16xbf16>
    %cst_27 = arith.constant dense<0.000000e+00> : vector<16x64xf32>
    %86 = tpu.matmul %85, %79, %cst_27 {dimension_numbers = #tpu.dot_dimension_numbers<[1], [0], [0], [1], [0, 0, 1, 1], [], []>} : vector<16x16xbf16>, vector<16x64xbf16>, vector<16x64xf32> -> vector<16x64xf32>
    %87 = arith.addf %84, %86 : vector<16x64xf32>
    %88 = math.tanh %87 : vector<16x64xf32>
    %89 = vector.extract_strided_slice %88 {offsets = [0, 0], sizes = [16, 48], strides = [1, 1]} : vector<16x64xf32> to vector<16x48xf32>
    %cst_28 = arith.constant 5.000000e-01 : f32
    %90 = vector.broadcast %cst_28 : f32 to vector<16x48xf32>
    %91 = arith.mulf %90, %89 : vector<16x48xf32>
    %cst_29 = arith.constant 5.000000e-01 : f32
    %92 = vector.broadcast %cst_29 : f32 to vector<16x48xf32>
    %93 = arith.addf %91, %92 : vector<16x48xf32>
    %94 = vector.extract_strided_slice %88 {offsets = [0, 48], sizes = [16, 16], strides = [1, 1]} : vector<16x64xf32> to vector<16x16xf32>
    %95 = vector.extract_strided_slice %93 {offsets = [0, 16], sizes = [16, 16], strides = [1, 1]} : vector<16x48xf32> to vector<16x16xf32>
    %96 = arith.mulf %95, %81 : vector<16x16xf32>
    %97 = vector.extract_strided_slice %93 {offsets = [0, 0], sizes = [16, 16], strides = [1, 1]} : vector<16x48xf32> to vector<16x16xf32>
    %98 = arith.mulf %97, %94 : vector<16x16xf32>
    %99 = arith.addf %96, %98 : vector<16x16xf32>
    %100 = vector.extract_strided_slice %93 {offsets = [0, 32], sizes = [16, 16], strides = [1, 1]} : vector<16x48xf32> to vector<16x16xf32>
    %101 = math.tanh %99 : vector<16x16xf32>
    %102 = arith.mulf %100, %101 : vector<16x16xf32>
    %c1_i32 = arith.constant 1 : i32
    %103 = arith.index_cast %c1_i32 : i32 to index
    %c0_30 = arith.constant 0 : index
    %c0_31 = arith.constant 0 : index
    %104 = vector.load %arg12[%103, %c0_30, %c0_31] : memref<28x16x64xf32, #tpu.memory_space<vmem>>, vector<1x16x64xf32>
    %105 = vector.shape_cast %104 : vector<1x16x64xf32> to vector<16x64xf32>
    %106 = arith.truncf %102 : vector<16x16xf32> to vector<16x16xbf16>
    %cst_32 = arith.constant dense<0.000000e+00> : vector<16x64xf32>
    %107 = tpu.matmul %106, %79, %cst_32 {dimension_numbers = #tpu.dot_dimension_numbers<[1], [0], [0], [1], [0, 0, 1, 1], [], []>} : vector<16x16xbf16>, vector<16x64xbf16>, vector<16x64xf32> -> vector<16x64xf32>
    %108 = arith.addf %105, %107 : vector<16x64xf32>
    %109 = math.tanh %108 : vector<16x64xf32>
    %110 = vector.extract_strided_slice %109 {offsets = [0, 0], sizes = [16, 48], strides = [1, 1]} : vector<16x64xf32> to vector<16x48xf32>
    %cst_33 = arith.constant 5.000000e-01 : f32
    %111 = vector.broadcast %cst_33 : f32 to vector<16x48xf32>
    %112 = arith.mulf %111, %110 : vector<16x48xf32>
    %cst_34 = arith.constant 5.000000e-01 : f32
    %113 = vector.broadcast %cst_34 : f32 to vector<16x48xf32>
    %114 = arith.addf %112, %113 : vector<16x48xf32>
    %115 = vector.extract_strided_slice %109 {offsets = [0, 48], sizes = [16, 16], strides = [1, 1]} : vector<16x64xf32> to vector<16x16xf32>
    %116 = vector.extract_strided_slice %114 {offsets = [0, 16], sizes = [16, 16], strides = [1, 1]} : vector<16x48xf32> to vector<16x16xf32>
    %117 = arith.mulf %116, %99 : vector<16x16xf32>
    %118 = vector.extract_strided_slice %114 {offsets = [0, 0], sizes = [16, 16], strides = [1, 1]} : vector<16x48xf32> to vector<16x16xf32>
    %119 = arith.mulf %118, %115 : vector<16x16xf32>
    %120 = arith.addf %117, %119 : vector<16x16xf32>
    %121 = vector.extract_strided_slice %114 {offsets = [0, 32], sizes = [16, 16], strides = [1, 1]} : vector<16x48xf32> to vector<16x16xf32>
    %122 = math.tanh %120 : vector<16x16xf32>
    %123 = arith.mulf %121, %122 : vector<16x16xf32>
    %c2_i32 = arith.constant 2 : i32
    %124 = arith.index_cast %c2_i32 : i32 to index
    %c0_35 = arith.constant 0 : index
    %c0_36 = arith.constant 0 : index
    %125 = vector.load %arg12[%124, %c0_35, %c0_36] : memref<28x16x64xf32, #tpu.memory_space<vmem>>, vector<1x16x64xf32>
    %126 = vector.shape_cast %125 : vector<1x16x64xf32> to vector<16x64xf32>
    %127 = arith.truncf %123 : vector<16x16xf32> to vector<16x16xbf16>
    %cst_37 = arith.constant dense<0.000000e+00> : vector<16x64xf32>
    %128 = tpu.matmul %127, %79, %cst_37 {dimension_numbers = #tpu.dot_dimension_numbers<[1], [0], [0], [1], [0, 0, 1, 1], [], []>} : vector<16x16xbf16>, vector<16x64xbf16>, vector<16x64xf32> -> vector<16x64xf32>
    %129 = arith.addf %126, %128 : vector<16x64xf32>
    %130 = math.tanh %129 : vector<16x64xf32>
    %131 = vector.extract_strided_slice %130 {offsets = [0, 0], sizes = [16, 48], strides = [1, 1]} : vector<16x64xf32> to vector<16x48xf32>
    %cst_38 = arith.constant 5.000000e-01 : f32
    %132 = vector.broadcast %cst_38 : f32 to vector<16x48xf32>
    %133 = arith.mulf %132, %131 : vector<16x48xf32>
    %cst_39 = arith.constant 5.000000e-01 : f32
    %134 = vector.broadcast %cst_39 : f32 to vector<16x48xf32>
    %135 = arith.addf %133, %134 : vector<16x48xf32>
    %136 = vector.extract_strided_slice %130 {offsets = [0, 48], sizes = [16, 16], strides = [1, 1]} : vector<16x64xf32> to vector<16x16xf32>
    %137 = vector.extract_strided_slice %135 {offsets = [0, 16], sizes = [16, 16], strides = [1, 1]} : vector<16x48xf32> to vector<16x16xf32>
    %138 = arith.mulf %137, %120 : vector<16x16xf32>
    %139 = vector.extract_strided_slice %135 {offsets = [0, 0], sizes = [16, 16], strides = [1, 1]} : vector<16x48xf32> to vector<16x16xf32>
    %140 = arith.mulf %139, %136 : vector<16x16xf32>
    %141 = arith.addf %138, %140 : vector<16x16xf32>
    %142 = vector.extract_strided_slice %135 {offsets = [0, 32], sizes = [16, 16], strides = [1, 1]} : vector<16x48xf32> to vector<16x16xf32>
    %143 = math.tanh %141 : vector<16x16xf32>
    %144 = arith.mulf %142, %143 : vector<16x16xf32>
    %c3_i32 = arith.constant 3 : i32
    %145 = arith.index_cast %c3_i32 : i32 to index
    %c0_40 = arith.constant 0 : index
    %c0_41 = arith.constant 0 : index
    %146 = vector.load %arg12[%145, %c0_40, %c0_41] : memref<28x16x64xf32, #tpu.memory_space<vmem>>, vector<1x16x64xf32>
    %147 = vector.shape_cast %146 : vector<1x16x64xf32> to vector<16x64xf32>
    %148 = arith.truncf %144 : vector<16x16xf32> to vector<16x16xbf16>
    %cst_42 = arith.constant dense<0.000000e+00> : vector<16x64xf32>
    %149 = tpu.matmul %148, %79, %cst_42 {dimension_numbers = #tpu.dot_dimension_numbers<[1], [0], [0], [1], [0, 0, 1, 1], [], []>} : vector<16x16xbf16>, vector<16x64xbf16>, vector<16x64xf32> -> vector<16x64xf32>
    %150 = arith.addf %147, %149 : vector<16x64xf32>
    %151 = math.tanh %150 : vector<16x64xf32>
    %152 = vector.extract_strided_slice %151 {offsets = [0, 0], sizes = [16, 48], strides = [1, 1]} : vector<16x64xf32> to vector<16x48xf32>
    %cst_43 = arith.constant 5.000000e-01 : f32
    %153 = vector.broadcast %cst_43 : f32 to vector<16x48xf32>
    %154 = arith.mulf %153, %152 : vector<16x48xf32>
    %cst_44 = arith.constant 5.000000e-01 : f32
    %155 = vector.broadcast %cst_44 : f32 to vector<16x48xf32>
    %156 = arith.addf %154, %155 : vector<16x48xf32>
    %157 = vector.extract_strided_slice %151 {offsets = [0, 48], sizes = [16, 16], strides = [1, 1]} : vector<16x64xf32> to vector<16x16xf32>
    %158 = vector.extract_strided_slice %156 {offsets = [0, 16], sizes = [16, 16], strides = [1, 1]} : vector<16x48xf32> to vector<16x16xf32>
    %159 = arith.mulf %158, %141 : vector<16x16xf32>
    %160 = vector.extract_strided_slice %156 {offsets = [0, 0], sizes = [16, 16], strides = [1, 1]} : vector<16x48xf32> to vector<16x16xf32>
    %161 = arith.mulf %160, %157 : vector<16x16xf32>
    %162 = arith.addf %159, %161 : vector<16x16xf32>
    %163 = vector.extract_strided_slice %156 {offsets = [0, 32], sizes = [16, 16], strides = [1, 1]} : vector<16x48xf32> to vector<16x16xf32>
    %164 = math.tanh %162 : vector<16x16xf32>
    %165 = arith.mulf %163, %164 : vector<16x16xf32>
    %c4_i32 = arith.constant 4 : i32
    %166 = arith.index_cast %c4_i32 : i32 to index
    %c0_45 = arith.constant 0 : index
    %c0_46 = arith.constant 0 : index
    %167 = vector.load %arg12[%166, %c0_45, %c0_46] : memref<28x16x64xf32, #tpu.memory_space<vmem>>, vector<1x16x64xf32>
    %168 = vector.shape_cast %167 : vector<1x16x64xf32> to vector<16x64xf32>
    %169 = arith.truncf %165 : vector<16x16xf32> to vector<16x16xbf16>
    %cst_47 = arith.constant dense<0.000000e+00> : vector<16x64xf32>
    %170 = tpu.matmul %169, %79, %cst_47 {dimension_numbers = #tpu.dot_dimension_numbers<[1], [0], [0], [1], [0, 0, 1, 1], [], []>} : vector<16x16xbf16>, vector<16x64xbf16>, vector<16x64xf32> -> vector<16x64xf32>
    %171 = arith.addf %168, %170 : vector<16x64xf32>
    %172 = math.tanh %171 : vector<16x64xf32>
    %173 = vector.extract_strided_slice %172 {offsets = [0, 0], sizes = [16, 48], strides = [1, 1]} : vector<16x64xf32> to vector<16x48xf32>
    %cst_48 = arith.constant 5.000000e-01 : f32
    %174 = vector.broadcast %cst_48 : f32 to vector<16x48xf32>
    %175 = arith.mulf %174, %173 : vector<16x48xf32>
    %cst_49 = arith.constant 5.000000e-01 : f32
    %176 = vector.broadcast %cst_49 : f32 to vector<16x48xf32>
    %177 = arith.addf %175, %176 : vector<16x48xf32>
    %178 = vector.extract_strided_slice %172 {offsets = [0, 48], sizes = [16, 16], strides = [1, 1]} : vector<16x64xf32> to vector<16x16xf32>
    %179 = vector.extract_strided_slice %177 {offsets = [0, 16], sizes = [16, 16], strides = [1, 1]} : vector<16x48xf32> to vector<16x16xf32>
    %180 = arith.mulf %179, %162 : vector<16x16xf32>
    %181 = vector.extract_strided_slice %177 {offsets = [0, 0], sizes = [16, 16], strides = [1, 1]} : vector<16x48xf32> to vector<16x16xf32>
    %182 = arith.mulf %181, %178 : vector<16x16xf32>
    %183 = arith.addf %180, %182 : vector<16x16xf32>
    %184 = vector.extract_strided_slice %177 {offsets = [0, 32], sizes = [16, 16], strides = [1, 1]} : vector<16x48xf32> to vector<16x16xf32>
    %185 = math.tanh %183 : vector<16x16xf32>
    %186 = arith.mulf %184, %185 : vector<16x16xf32>
    %c5_i32 = arith.constant 5 : i32
    %187 = arith.index_cast %c5_i32 : i32 to index
    %c0_50 = arith.constant 0 : index
    %c0_51 = arith.constant 0 : index
    %188 = vector.load %arg12[%187, %c0_50, %c0_51] : memref<28x16x64xf32, #tpu.memory_space<vmem>>, vector<1x16x64xf32>
    %189 = vector.shape_cast %188 : vector<1x16x64xf32> to vector<16x64xf32>
    %190 = arith.truncf %186 : vector<16x16xf32> to vector<16x16xbf16>
    %cst_52 = arith.constant dense<0.000000e+00> : vector<16x64xf32>
    %191 = tpu.matmul %190, %79, %cst_52 {dimension_numbers = #tpu.dot_dimension_numbers<[1], [0], [0], [1], [0, 0, 1, 1], [], []>} : vector<16x16xbf16>, vector<16x64xbf16>, vector<16x64xf32> -> vector<16x64xf32>
    %192 = arith.addf %189, %191 : vector<16x64xf32>
    %193 = math.tanh %192 : vector<16x64xf32>
    %194 = vector.extract_strided_slice %193 {offsets = [0, 0], sizes = [16, 48], strides = [1, 1]} : vector<16x64xf32> to vector<16x48xf32>
    %cst_53 = arith.constant 5.000000e-01 : f32
    %195 = vector.broadcast %cst_53 : f32 to vector<16x48xf32>
    %196 = arith.mulf %195, %194 : vector<16x48xf32>
    %cst_54 = arith.constant 5.000000e-01 : f32
    %197 = vector.broadcast %cst_54 : f32 to vector<16x48xf32>
    %198 = arith.addf %196, %197 : vector<16x48xf32>
    %199 = vector.extract_strided_slice %193 {offsets = [0, 48], sizes = [16, 16], strides = [1, 1]} : vector<16x64xf32> to vector<16x16xf32>
    %200 = vector.extract_strided_slice %198 {offsets = [0, 16], sizes = [16, 16], strides = [1, 1]} : vector<16x48xf32> to vector<16x16xf32>
    %201 = arith.mulf %200, %183 : vector<16x16xf32>
    %202 = vector.extract_strided_slice %198 {offsets = [0, 0], sizes = [16, 16], strides = [1, 1]} : vector<16x48xf32> to vector<16x16xf32>
    %203 = arith.mulf %202, %199 : vector<16x16xf32>
    %204 = arith.addf %201, %203 : vector<16x16xf32>
    %205 = vector.extract_strided_slice %198 {offsets = [0, 32], sizes = [16, 16], strides = [1, 1]} : vector<16x48xf32> to vector<16x16xf32>
    %206 = math.tanh %204 : vector<16x16xf32>
    %207 = arith.mulf %205, %206 : vector<16x16xf32>
    %c6_i32 = arith.constant 6 : i32
    %208 = arith.index_cast %c6_i32 : i32 to index
    %c0_55 = arith.constant 0 : index
    %c0_56 = arith.constant 0 : index
    %209 = vector.load %arg12[%208, %c0_55, %c0_56] : memref<28x16x64xf32, #tpu.memory_space<vmem>>, vector<1x16x64xf32>
    %210 = vector.shape_cast %209 : vector<1x16x64xf32> to vector<16x64xf32>
    %211 = arith.truncf %207 : vector<16x16xf32> to vector<16x16xbf16>
    %cst_57 = arith.constant dense<0.000000e+00> : vector<16x64xf32>
    %212 = tpu.matmul %211, %79, %cst_57 {dimension_numbers = #tpu.dot_dimension_numbers<[1], [0], [0], [1], [0, 0, 1, 1], [], []>} : vector<16x16xbf16>, vector<16x64xbf16>, vector<16x64xf32> -> vector<16x64xf32>
    %213 = arith.addf %210, %212 : vector<16x64xf32>
    %214 = math.tanh %213 : vector<16x64xf32>
    %215 = vector.extract_strided_slice %214 {offsets = [0, 0], sizes = [16, 48], strides = [1, 1]} : vector<16x64xf32> to vector<16x48xf32>
    %cst_58 = arith.constant 5.000000e-01 : f32
    %216 = vector.broadcast %cst_58 : f32 to vector<16x48xf32>
    %217 = arith.mulf %216, %215 : vector<16x48xf32>
    %cst_59 = arith.constant 5.000000e-01 : f32
    %218 = vector.broadcast %cst_59 : f32 to vector<16x48xf32>
    %219 = arith.addf %217, %218 : vector<16x48xf32>
    %220 = vector.extract_strided_slice %214 {offsets = [0, 48], sizes = [16, 16], strides = [1, 1]} : vector<16x64xf32> to vector<16x16xf32>
    %221 = vector.extract_strided_slice %219 {offsets = [0, 16], sizes = [16, 16], strides = [1, 1]} : vector<16x48xf32> to vector<16x16xf32>
    %222 = arith.mulf %221, %204 : vector<16x16xf32>
    %223 = vector.extract_strided_slice %219 {offsets = [0, 0], sizes = [16, 16], strides = [1, 1]} : vector<16x48xf32> to vector<16x16xf32>
    %224 = arith.mulf %223, %220 : vector<16x16xf32>
    %225 = arith.addf %222, %224 : vector<16x16xf32>
    %226 = vector.extract_strided_slice %219 {offsets = [0, 32], sizes = [16, 16], strides = [1, 1]} : vector<16x48xf32> to vector<16x16xf32>
    %227 = math.tanh %225 : vector<16x16xf32>
    %228 = arith.mulf %226, %227 : vector<16x16xf32>
    %c7_i32 = arith.constant 7 : i32
    %229 = arith.index_cast %c7_i32 : i32 to index
    %c0_60 = arith.constant 0 : index
    %c0_61 = arith.constant 0 : index
    %230 = vector.load %arg12[%229, %c0_60, %c0_61] : memref<28x16x64xf32, #tpu.memory_space<vmem>>, vector<1x16x64xf32>
    %231 = vector.shape_cast %230 : vector<1x16x64xf32> to vector<16x64xf32>
    %232 = arith.truncf %228 : vector<16x16xf32> to vector<16x16xbf16>
    %cst_62 = arith.constant dense<0.000000e+00> : vector<16x64xf32>
    %233 = tpu.matmul %232, %79, %cst_62 {dimension_numbers = #tpu.dot_dimension_numbers<[1], [0], [0], [1], [0, 0, 1, 1], [], []>} : vector<16x16xbf16>, vector<16x64xbf16>, vector<16x64xf32> -> vector<16x64xf32>
    %234 = arith.addf %231, %233 : vector<16x64xf32>
    %235 = math.tanh %234 : vector<16x64xf32>
    %236 = vector.extract_strided_slice %235 {offsets = [0, 0], sizes = [16, 48], strides = [1, 1]} : vector<16x64xf32> to vector<16x48xf32>
    %cst_63 = arith.constant 5.000000e-01 : f32
    %237 = vector.broadcast %cst_63 : f32 to vector<16x48xf32>
    %238 = arith.mulf %237, %236 : vector<16x48xf32>
    %cst_64 = arith.constant 5.000000e-01 : f32
    %239 = vector.broadcast %cst_64 : f32 to vector<16x48xf32>
    %240 = arith.addf %238, %239 : vector<16x48xf32>
    %241 = vector.extract_strided_slice %235 {offsets = [0, 48], sizes = [16, 16], strides = [1, 1]} : vector<16x64xf32> to vector<16x16xf32>
    %242 = vector.extract_strided_slice %240 {offsets = [0, 16], sizes = [16, 16], strides = [1, 1]} : vector<16x48xf32> to vector<16x16xf32>
    %243 = arith.mulf %242, %225 : vector<16x16xf32>
    %244 = vector.extract_strided_slice %240 {offsets = [0, 0], sizes = [16, 16], strides = [1, 1]} : vector<16x48xf32> to vector<16x16xf32>
    %245 = arith.mulf %244, %241 : vector<16x16xf32>
    %246 = arith.addf %243, %245 : vector<16x16xf32>
    %247 = vector.extract_strided_slice %240 {offsets = [0, 32], sizes = [16, 16], strides = [1, 1]} : vector<16x48xf32> to vector<16x16xf32>
    %248 = math.tanh %246 : vector<16x16xf32>
    %249 = arith.mulf %247, %248 : vector<16x16xf32>
    %c8_i32 = arith.constant 8 : i32
    %250 = arith.index_cast %c8_i32 : i32 to index
    %c0_65 = arith.constant 0 : index
    %c0_66 = arith.constant 0 : index
    %251 = vector.load %arg12[%250, %c0_65, %c0_66] : memref<28x16x64xf32, #tpu.memory_space<vmem>>, vector<1x16x64xf32>
    %252 = vector.shape_cast %251 : vector<1x16x64xf32> to vector<16x64xf32>
    %253 = arith.truncf %249 : vector<16x16xf32> to vector<16x16xbf16>
    %cst_67 = arith.constant dense<0.000000e+00> : vector<16x64xf32>
    %254 = tpu.matmul %253, %79, %cst_67 {dimension_numbers = #tpu.dot_dimension_numbers<[1], [0], [0], [1], [0, 0, 1, 1], [], []>} : vector<16x16xbf16>, vector<16x64xbf16>, vector<16x64xf32> -> vector<16x64xf32>
    %255 = arith.addf %252, %254 : vector<16x64xf32>
    %256 = math.tanh %255 : vector<16x64xf32>
    %257 = vector.extract_strided_slice %256 {offsets = [0, 0], sizes = [16, 48], strides = [1, 1]} : vector<16x64xf32> to vector<16x48xf32>
    %cst_68 = arith.constant 5.000000e-01 : f32
    %258 = vector.broadcast %cst_68 : f32 to vector<16x48xf32>
    %259 = arith.mulf %258, %257 : vector<16x48xf32>
    %cst_69 = arith.constant 5.000000e-01 : f32
    %260 = vector.broadcast %cst_69 : f32 to vector<16x48xf32>
    %261 = arith.addf %259, %260 : vector<16x48xf32>
    %262 = vector.extract_strided_slice %256 {offsets = [0, 48], sizes = [16, 16], strides = [1, 1]} : vector<16x64xf32> to vector<16x16xf32>
    %263 = vector.extract_strided_slice %261 {offsets = [0, 16], sizes = [16, 16], strides = [1, 1]} : vector<16x48xf32> to vector<16x16xf32>
    %264 = arith.mulf %263, %246 : vector<16x16xf32>
    %265 = vector.extract_strided_slice %261 {offsets = [0, 0], sizes = [16, 16], strides = [1, 1]} : vector<16x48xf32> to vector<16x16xf32>
    %266 = arith.mulf %265, %262 : vector<16x16xf32>
    %267 = arith.addf %264, %266 : vector<16x16xf32>
    %268 = vector.extract_strided_slice %261 {offsets = [0, 32], sizes = [16, 16], strides = [1, 1]} : vector<16x48xf32> to vector<16x16xf32>
    %269 = math.tanh %267 : vector<16x16xf32>
    %270 = arith.mulf %268, %269 : vector<16x16xf32>
    %c9_i32 = arith.constant 9 : i32
    %271 = arith.index_cast %c9_i32 : i32 to index
    %c0_70 = arith.constant 0 : index
    %c0_71 = arith.constant 0 : index
    %272 = vector.load %arg12[%271, %c0_70, %c0_71] : memref<28x16x64xf32, #tpu.memory_space<vmem>>, vector<1x16x64xf32>
    %273 = vector.shape_cast %272 : vector<1x16x64xf32> to vector<16x64xf32>
    %274 = arith.truncf %270 : vector<16x16xf32> to vector<16x16xbf16>
    %cst_72 = arith.constant dense<0.000000e+00> : vector<16x64xf32>
    %275 = tpu.matmul %274, %79, %cst_72 {dimension_numbers = #tpu.dot_dimension_numbers<[1], [0], [0], [1], [0, 0, 1, 1], [], []>} : vector<16x16xbf16>, vector<16x64xbf16>, vector<16x64xf32> -> vector<16x64xf32>
    %276 = arith.addf %273, %275 : vector<16x64xf32>
    %277 = math.tanh %276 : vector<16x64xf32>
    %278 = vector.extract_strided_slice %277 {offsets = [0, 0], sizes = [16, 48], strides = [1, 1]} : vector<16x64xf32> to vector<16x48xf32>
    %cst_73 = arith.constant 5.000000e-01 : f32
    %279 = vector.broadcast %cst_73 : f32 to vector<16x48xf32>
    %280 = arith.mulf %279, %278 : vector<16x48xf32>
    %cst_74 = arith.constant 5.000000e-01 : f32
    %281 = vector.broadcast %cst_74 : f32 to vector<16x48xf32>
    %282 = arith.addf %280, %281 : vector<16x48xf32>
    %283 = vector.extract_strided_slice %277 {offsets = [0, 48], sizes = [16, 16], strides = [1, 1]} : vector<16x64xf32> to vector<16x16xf32>
    %284 = vector.extract_strided_slice %282 {offsets = [0, 16], sizes = [16, 16], strides = [1, 1]} : vector<16x48xf32> to vector<16x16xf32>
    %285 = arith.mulf %284, %267 : vector<16x16xf32>
    %286 = vector.extract_strided_slice %282 {offsets = [0, 0], sizes = [16, 16], strides = [1, 1]} : vector<16x48xf32> to vector<16x16xf32>
    %287 = arith.mulf %286, %283 : vector<16x16xf32>
    %288 = arith.addf %285, %287 : vector<16x16xf32>
    %289 = vector.extract_strided_slice %282 {offsets = [0, 32], sizes = [16, 16], strides = [1, 1]} : vector<16x48xf32> to vector<16x16xf32>
    %290 = math.tanh %288 : vector<16x16xf32>
    %291 = arith.mulf %289, %290 : vector<16x16xf32>
    %c10_i32 = arith.constant 10 : i32
    %292 = arith.index_cast %c10_i32 : i32 to index
    %c0_75 = arith.constant 0 : index
    %c0_76 = arith.constant 0 : index
    %293 = vector.load %arg12[%292, %c0_75, %c0_76] : memref<28x16x64xf32, #tpu.memory_space<vmem>>, vector<1x16x64xf32>
    %294 = vector.shape_cast %293 : vector<1x16x64xf32> to vector<16x64xf32>
    %295 = arith.truncf %291 : vector<16x16xf32> to vector<16x16xbf16>
    %cst_77 = arith.constant dense<0.000000e+00> : vector<16x64xf32>
    %296 = tpu.matmul %295, %79, %cst_77 {dimension_numbers = #tpu.dot_dimension_numbers<[1], [0], [0], [1], [0, 0, 1, 1], [], []>} : vector<16x16xbf16>, vector<16x64xbf16>, vector<16x64xf32> -> vector<16x64xf32>
    %297 = arith.addf %294, %296 : vector<16x64xf32>
    %298 = math.tanh %297 : vector<16x64xf32>
    %299 = vector.extract_strided_slice %298 {offsets = [0, 0], sizes = [16, 48], strides = [1, 1]} : vector<16x64xf32> to vector<16x48xf32>
    %cst_78 = arith.constant 5.000000e-01 : f32
    %300 = vector.broadcast %cst_78 : f32 to vector<16x48xf32>
    %301 = arith.mulf %300, %299 : vector<16x48xf32>
    %cst_79 = arith.constant 5.000000e-01 : f32
    %302 = vector.broadcast %cst_79 : f32 to vector<16x48xf32>
    %303 = arith.addf %301, %302 : vector<16x48xf32>
    %304 = vector.extract_strided_slice %298 {offsets = [0, 48], sizes = [16, 16], strides = [1, 1]} : vector<16x64xf32> to vector<16x16xf32>
    %305 = vector.extract_strided_slice %303 {offsets = [0, 16], sizes = [16, 16], strides = [1, 1]} : vector<16x48xf32> to vector<16x16xf32>
    %306 = arith.mulf %305, %288 : vector<16x16xf32>
    %307 = vector.extract_strided_slice %303 {offsets = [0, 0], sizes = [16, 16], strides = [1, 1]} : vector<16x48xf32> to vector<16x16xf32>
    %308 = arith.mulf %307, %304 : vector<16x16xf32>
    %309 = arith.addf %306, %308 : vector<16x16xf32>
    %310 = vector.extract_strided_slice %303 {offsets = [0, 32], sizes = [16, 16], strides = [1, 1]} : vector<16x48xf32> to vector<16x16xf32>
    %311 = math.tanh %309 : vector<16x16xf32>
    %312 = arith.mulf %310, %311 : vector<16x16xf32>
    %c11_i32 = arith.constant 11 : i32
    %313 = arith.index_cast %c11_i32 : i32 to index
    %c0_80 = arith.constant 0 : index
    %c0_81 = arith.constant 0 : index
    %314 = vector.load %arg12[%313, %c0_80, %c0_81] : memref<28x16x64xf32, #tpu.memory_space<vmem>>, vector<1x16x64xf32>
    %315 = vector.shape_cast %314 : vector<1x16x64xf32> to vector<16x64xf32>
    %316 = arith.truncf %312 : vector<16x16xf32> to vector<16x16xbf16>
    %cst_82 = arith.constant dense<0.000000e+00> : vector<16x64xf32>
    %317 = tpu.matmul %316, %79, %cst_82 {dimension_numbers = #tpu.dot_dimension_numbers<[1], [0], [0], [1], [0, 0, 1, 1], [], []>} : vector<16x16xbf16>, vector<16x64xbf16>, vector<16x64xf32> -> vector<16x64xf32>
    %318 = arith.addf %315, %317 : vector<16x64xf32>
    %319 = math.tanh %318 : vector<16x64xf32>
    %320 = vector.extract_strided_slice %319 {offsets = [0, 0], sizes = [16, 48], strides = [1, 1]} : vector<16x64xf32> to vector<16x48xf32>
    %cst_83 = arith.constant 5.000000e-01 : f32
    %321 = vector.broadcast %cst_83 : f32 to vector<16x48xf32>
    %322 = arith.mulf %321, %320 : vector<16x48xf32>
    %cst_84 = arith.constant 5.000000e-01 : f32
    %323 = vector.broadcast %cst_84 : f32 to vector<16x48xf32>
    %324 = arith.addf %322, %323 : vector<16x48xf32>
    %325 = vector.extract_strided_slice %319 {offsets = [0, 48], sizes = [16, 16], strides = [1, 1]} : vector<16x64xf32> to vector<16x16xf32>
    %326 = vector.extract_strided_slice %324 {offsets = [0, 16], sizes = [16, 16], strides = [1, 1]} : vector<16x48xf32> to vector<16x16xf32>
    %327 = arith.mulf %326, %309 : vector<16x16xf32>
    %328 = vector.extract_strided_slice %324 {offsets = [0, 0], sizes = [16, 16], strides = [1, 1]} : vector<16x48xf32> to vector<16x16xf32>
    %329 = arith.mulf %328, %325 : vector<16x16xf32>
    %330 = arith.addf %327, %329 : vector<16x16xf32>
    %331 = vector.extract_strided_slice %324 {offsets = [0, 32], sizes = [16, 16], strides = [1, 1]} : vector<16x48xf32> to vector<16x16xf32>
    %332 = math.tanh %330 : vector<16x16xf32>
    %333 = arith.mulf %331, %332 : vector<16x16xf32>
    %c12_i32 = arith.constant 12 : i32
    %334 = arith.index_cast %c12_i32 : i32 to index
    %c0_85 = arith.constant 0 : index
    %c0_86 = arith.constant 0 : index
    %335 = vector.load %arg12[%334, %c0_85, %c0_86] : memref<28x16x64xf32, #tpu.memory_space<vmem>>, vector<1x16x64xf32>
    %336 = vector.shape_cast %335 : vector<1x16x64xf32> to vector<16x64xf32>
    %337 = arith.truncf %333 : vector<16x16xf32> to vector<16x16xbf16>
    %cst_87 = arith.constant dense<0.000000e+00> : vector<16x64xf32>
    %338 = tpu.matmul %337, %79, %cst_87 {dimension_numbers = #tpu.dot_dimension_numbers<[1], [0], [0], [1], [0, 0, 1, 1], [], []>} : vector<16x16xbf16>, vector<16x64xbf16>, vector<16x64xf32> -> vector<16x64xf32>
    %339 = arith.addf %336, %338 : vector<16x64xf32>
    %340 = math.tanh %339 : vector<16x64xf32>
    %341 = vector.extract_strided_slice %340 {offsets = [0, 0], sizes = [16, 48], strides = [1, 1]} : vector<16x64xf32> to vector<16x48xf32>
    %cst_88 = arith.constant 5.000000e-01 : f32
    %342 = vector.broadcast %cst_88 : f32 to vector<16x48xf32>
    %343 = arith.mulf %342, %341 : vector<16x48xf32>
    %cst_89 = arith.constant 5.000000e-01 : f32
    %344 = vector.broadcast %cst_89 : f32 to vector<16x48xf32>
    %345 = arith.addf %343, %344 : vector<16x48xf32>
    %346 = vector.extract_strided_slice %340 {offsets = [0, 48], sizes = [16, 16], strides = [1, 1]} : vector<16x64xf32> to vector<16x16xf32>
    %347 = vector.extract_strided_slice %345 {offsets = [0, 16], sizes = [16, 16], strides = [1, 1]} : vector<16x48xf32> to vector<16x16xf32>
    %348 = arith.mulf %347, %330 : vector<16x16xf32>
    %349 = vector.extract_strided_slice %345 {offsets = [0, 0], sizes = [16, 16], strides = [1, 1]} : vector<16x48xf32> to vector<16x16xf32>
    %350 = arith.mulf %349, %346 : vector<16x16xf32>
    %351 = arith.addf %348, %350 : vector<16x16xf32>
    %352 = vector.extract_strided_slice %345 {offsets = [0, 32], sizes = [16, 16], strides = [1, 1]} : vector<16x48xf32> to vector<16x16xf32>
    %353 = math.tanh %351 : vector<16x16xf32>
    %354 = arith.mulf %352, %353 : vector<16x16xf32>
    %c13_i32 = arith.constant 13 : i32
    %355 = arith.index_cast %c13_i32 : i32 to index
    %c0_90 = arith.constant 0 : index
    %c0_91 = arith.constant 0 : index
    %356 = vector.load %arg12[%355, %c0_90, %c0_91] : memref<28x16x64xf32, #tpu.memory_space<vmem>>, vector<1x16x64xf32>
    %357 = vector.shape_cast %356 : vector<1x16x64xf32> to vector<16x64xf32>
    %358 = arith.truncf %354 : vector<16x16xf32> to vector<16x16xbf16>
    %cst_92 = arith.constant dense<0.000000e+00> : vector<16x64xf32>
    %359 = tpu.matmul %358, %79, %cst_92 {dimension_numbers = #tpu.dot_dimension_numbers<[1], [0], [0], [1], [0, 0, 1, 1], [], []>} : vector<16x16xbf16>, vector<16x64xbf16>, vector<16x64xf32> -> vector<16x64xf32>
    %360 = arith.addf %357, %359 : vector<16x64xf32>
    %361 = math.tanh %360 : vector<16x64xf32>
    %362 = vector.extract_strided_slice %361 {offsets = [0, 0], sizes = [16, 48], strides = [1, 1]} : vector<16x64xf32> to vector<16x48xf32>
    %cst_93 = arith.constant 5.000000e-01 : f32
    %363 = vector.broadcast %cst_93 : f32 to vector<16x48xf32>
    %364 = arith.mulf %363, %362 : vector<16x48xf32>
    %cst_94 = arith.constant 5.000000e-01 : f32
    %365 = vector.broadcast %cst_94 : f32 to vector<16x48xf32>
    %366 = arith.addf %364, %365 : vector<16x48xf32>
    %367 = vector.extract_strided_slice %361 {offsets = [0, 48], sizes = [16, 16], strides = [1, 1]} : vector<16x64xf32> to vector<16x16xf32>
    %368 = vector.extract_strided_slice %366 {offsets = [0, 16], sizes = [16, 16], strides = [1, 1]} : vector<16x48xf32> to vector<16x16xf32>
    %369 = arith.mulf %368, %351 : vector<16x16xf32>
    %370 = vector.extract_strided_slice %366 {offsets = [0, 0], sizes = [16, 16], strides = [1, 1]} : vector<16x48xf32> to vector<16x16xf32>
    %371 = arith.mulf %370, %367 : vector<16x16xf32>
    %372 = arith.addf %369, %371 : vector<16x16xf32>
    %373 = vector.extract_strided_slice %366 {offsets = [0, 32], sizes = [16, 16], strides = [1, 1]} : vector<16x48xf32> to vector<16x16xf32>
    %374 = math.tanh %372 : vector<16x16xf32>
    %375 = arith.mulf %373, %374 : vector<16x16xf32>
    %c14_i32 = arith.constant 14 : i32
    %376 = arith.index_cast %c14_i32 : i32 to index
    %c0_95 = arith.constant 0 : index
    %c0_96 = arith.constant 0 : index
    %377 = vector.load %arg12[%376, %c0_95, %c0_96] : memref<28x16x64xf32, #tpu.memory_space<vmem>>, vector<1x16x64xf32>
    %378 = vector.shape_cast %377 : vector<1x16x64xf32> to vector<16x64xf32>
    %379 = arith.truncf %375 : vector<16x16xf32> to vector<16x16xbf16>
    %cst_97 = arith.constant dense<0.000000e+00> : vector<16x64xf32>
    %380 = tpu.matmul %379, %79, %cst_97 {dimension_numbers = #tpu.dot_dimension_numbers<[1], [0], [0], [1], [0, 0, 1, 1], [], []>} : vector<16x16xbf16>, vector<16x64xbf16>, vector<16x64xf32> -> vector<16x64xf32>
    %381 = arith.addf %378, %380 : vector<16x64xf32>
    %382 = math.tanh %381 : vector<16x64xf32>
    %383 = vector.extract_strided_slice %382 {offsets = [0, 0], sizes = [16, 48], strides = [1, 1]} : vector<16x64xf32> to vector<16x48xf32>
    %cst_98 = arith.constant 5.000000e-01 : f32
    %384 = vector.broadcast %cst_98 : f32 to vector<16x48xf32>
    %385 = arith.mulf %384, %383 : vector<16x48xf32>
    %cst_99 = arith.constant 5.000000e-01 : f32
    %386 = vector.broadcast %cst_99 : f32 to vector<16x48xf32>
    %387 = arith.addf %385, %386 : vector<16x48xf32>
    %388 = vector.extract_strided_slice %382 {offsets = [0, 48], sizes = [16, 16], strides = [1, 1]} : vector<16x64xf32> to vector<16x16xf32>
    %389 = vector.extract_strided_slice %387 {offsets = [0, 16], sizes = [16, 16], strides = [1, 1]} : vector<16x48xf32> to vector<16x16xf32>
    %390 = arith.mulf %389, %372 : vector<16x16xf32>
    %391 = vector.extract_strided_slice %387 {offsets = [0, 0], sizes = [16, 16], strides = [1, 1]} : vector<16x48xf32> to vector<16x16xf32>
    %392 = arith.mulf %391, %388 : vector<16x16xf32>
    %393 = arith.addf %390, %392 : vector<16x16xf32>
    %394 = vector.extract_strided_slice %387 {offsets = [0, 32], sizes = [16, 16], strides = [1, 1]} : vector<16x48xf32> to vector<16x16xf32>
    %395 = math.tanh %393 : vector<16x16xf32>
    %396 = arith.mulf %394, %395 : vector<16x16xf32>
    %c15_i32 = arith.constant 15 : i32
    %397 = arith.index_cast %c15_i32 : i32 to index
    %c0_100 = arith.constant 0 : index
    %c0_101 = arith.constant 0 : index
    %398 = vector.load %arg12[%397, %c0_100, %c0_101] : memref<28x16x64xf32, #tpu.memory_space<vmem>>, vector<1x16x64xf32>
    %399 = vector.shape_cast %398 : vector<1x16x64xf32> to vector<16x64xf32>
    %400 = arith.truncf %396 : vector<16x16xf32> to vector<16x16xbf16>
    %cst_102 = arith.constant dense<0.000000e+00> : vector<16x64xf32>
    %401 = tpu.matmul %400, %79, %cst_102 {dimension_numbers = #tpu.dot_dimension_numbers<[1], [0], [0], [1], [0, 0, 1, 1], [], []>} : vector<16x16xbf16>, vector<16x64xbf16>, vector<16x64xf32> -> vector<16x64xf32>
    %402 = arith.addf %399, %401 : vector<16x64xf32>
    %403 = math.tanh %402 : vector<16x64xf32>
    %404 = vector.extract_strided_slice %403 {offsets = [0, 0], sizes = [16, 48], strides = [1, 1]} : vector<16x64xf32> to vector<16x48xf32>
    %cst_103 = arith.constant 5.000000e-01 : f32
    %405 = vector.broadcast %cst_103 : f32 to vector<16x48xf32>
    %406 = arith.mulf %405, %404 : vector<16x48xf32>
    %cst_104 = arith.constant 5.000000e-01 : f32
    %407 = vector.broadcast %cst_104 : f32 to vector<16x48xf32>
    %408 = arith.addf %406, %407 : vector<16x48xf32>
    %409 = vector.extract_strided_slice %403 {offsets = [0, 48], sizes = [16, 16], strides = [1, 1]} : vector<16x64xf32> to vector<16x16xf32>
    %410 = vector.extract_strided_slice %408 {offsets = [0, 16], sizes = [16, 16], strides = [1, 1]} : vector<16x48xf32> to vector<16x16xf32>
    %411 = arith.mulf %410, %393 : vector<16x16xf32>
    %412 = vector.extract_strided_slice %408 {offsets = [0, 0], sizes = [16, 16], strides = [1, 1]} : vector<16x48xf32> to vector<16x16xf32>
    %413 = arith.mulf %412, %409 : vector<16x16xf32>
    %414 = arith.addf %411, %413 : vector<16x16xf32>
    %415 = vector.extract_strided_slice %408 {offsets = [0, 32], sizes = [16, 16], strides = [1, 1]} : vector<16x48xf32> to vector<16x16xf32>
    %416 = math.tanh %414 : vector<16x16xf32>
    %417 = arith.mulf %415, %416 : vector<16x16xf32>
    %c16_i32 = arith.constant 16 : i32
    %418 = arith.index_cast %c16_i32 : i32 to index
    %c0_105 = arith.constant 0 : index
    %c0_106 = arith.constant 0 : index
    %419 = vector.load %arg12[%418, %c0_105, %c0_106] : memref<28x16x64xf32, #tpu.memory_space<vmem>>, vector<1x16x64xf32>
    %420 = vector.shape_cast %419 : vector<1x16x64xf32> to vector<16x64xf32>
    %421 = arith.truncf %417 : vector<16x16xf32> to vector<16x16xbf16>
    %cst_107 = arith.constant dense<0.000000e+00> : vector<16x64xf32>
    %422 = tpu.matmul %421, %79, %cst_107 {dimension_numbers = #tpu.dot_dimension_numbers<[1], [0], [0], [1], [0, 0, 1, 1], [], []>} : vector<16x16xbf16>, vector<16x64xbf16>, vector<16x64xf32> -> vector<16x64xf32>
    %423 = arith.addf %420, %422 : vector<16x64xf32>
    %424 = math.tanh %423 : vector<16x64xf32>
    %425 = vector.extract_strided_slice %424 {offsets = [0, 0], sizes = [16, 48], strides = [1, 1]} : vector<16x64xf32> to vector<16x48xf32>
    %cst_108 = arith.constant 5.000000e-01 : f32
    %426 = vector.broadcast %cst_108 : f32 to vector<16x48xf32>
    %427 = arith.mulf %426, %425 : vector<16x48xf32>
    %cst_109 = arith.constant 5.000000e-01 : f32
    %428 = vector.broadcast %cst_109 : f32 to vector<16x48xf32>
    %429 = arith.addf %427, %428 : vector<16x48xf32>
    %430 = vector.extract_strided_slice %424 {offsets = [0, 48], sizes = [16, 16], strides = [1, 1]} : vector<16x64xf32> to vector<16x16xf32>
    %431 = vector.extract_strided_slice %429 {offsets = [0, 16], sizes = [16, 16], strides = [1, 1]} : vector<16x48xf32> to vector<16x16xf32>
    %432 = arith.mulf %431, %414 : vector<16x16xf32>
    %433 = vector.extract_strided_slice %429 {offsets = [0, 0], sizes = [16, 16], strides = [1, 1]} : vector<16x48xf32> to vector<16x16xf32>
    %434 = arith.mulf %433, %430 : vector<16x16xf32>
    %435 = arith.addf %432, %434 : vector<16x16xf32>
    %436 = vector.extract_strided_slice %429 {offsets = [0, 32], sizes = [16, 16], strides = [1, 1]} : vector<16x48xf32> to vector<16x16xf32>
    %437 = math.tanh %435 : vector<16x16xf32>
    %438 = arith.mulf %436, %437 : vector<16x16xf32>
    %c17_i32 = arith.constant 17 : i32
    %439 = arith.index_cast %c17_i32 : i32 to index
    %c0_110 = arith.constant 0 : index
    %c0_111 = arith.constant 0 : index
    %440 = vector.load %arg12[%439, %c0_110, %c0_111] : memref<28x16x64xf32, #tpu.memory_space<vmem>>, vector<1x16x64xf32>
    %441 = vector.shape_cast %440 : vector<1x16x64xf32> to vector<16x64xf32>
    %442 = arith.truncf %438 : vector<16x16xf32> to vector<16x16xbf16>
    %cst_112 = arith.constant dense<0.000000e+00> : vector<16x64xf32>
    %443 = tpu.matmul %442, %79, %cst_112 {dimension_numbers = #tpu.dot_dimension_numbers<[1], [0], [0], [1], [0, 0, 1, 1], [], []>} : vector<16x16xbf16>, vector<16x64xbf16>, vector<16x64xf32> -> vector<16x64xf32>
    %444 = arith.addf %441, %443 : vector<16x64xf32>
    %445 = math.tanh %444 : vector<16x64xf32>
    %446 = vector.extract_strided_slice %445 {offsets = [0, 0], sizes = [16, 48], strides = [1, 1]} : vector<16x64xf32> to vector<16x48xf32>
    %cst_113 = arith.constant 5.000000e-01 : f32
    %447 = vector.broadcast %cst_113 : f32 to vector<16x48xf32>
    %448 = arith.mulf %447, %446 : vector<16x48xf32>
    %cst_114 = arith.constant 5.000000e-01 : f32
    %449 = vector.broadcast %cst_114 : f32 to vector<16x48xf32>
    %450 = arith.addf %448, %449 : vector<16x48xf32>
    %451 = vector.extract_strided_slice %445 {offsets = [0, 48], sizes = [16, 16], strides = [1, 1]} : vector<16x64xf32> to vector<16x16xf32>
    %452 = vector.extract_strided_slice %450 {offsets = [0, 16], sizes = [16, 16], strides = [1, 1]} : vector<16x48xf32> to vector<16x16xf32>
    %453 = arith.mulf %452, %435 : vector<16x16xf32>
    %454 = vector.extract_strided_slice %450 {offsets = [0, 0], sizes = [16, 16], strides = [1, 1]} : vector<16x48xf32> to vector<16x16xf32>
    %455 = arith.mulf %454, %451 : vector<16x16xf32>
    %456 = arith.addf %453, %455 : vector<16x16xf32>
    %457 = vector.extract_strided_slice %450 {offsets = [0, 32], sizes = [16, 16], strides = [1, 1]} : vector<16x48xf32> to vector<16x16xf32>
    %458 = math.tanh %456 : vector<16x16xf32>
    %459 = arith.mulf %457, %458 : vector<16x16xf32>
    %c18_i32 = arith.constant 18 : i32
    %460 = arith.index_cast %c18_i32 : i32 to index
    %c0_115 = arith.constant 0 : index
    %c0_116 = arith.constant 0 : index
    %461 = vector.load %arg12[%460, %c0_115, %c0_116] : memref<28x16x64xf32, #tpu.memory_space<vmem>>, vector<1x16x64xf32>
    %462 = vector.shape_cast %461 : vector<1x16x64xf32> to vector<16x64xf32>
    %463 = arith.truncf %459 : vector<16x16xf32> to vector<16x16xbf16>
    %cst_117 = arith.constant dense<0.000000e+00> : vector<16x64xf32>
    %464 = tpu.matmul %463, %79, %cst_117 {dimension_numbers = #tpu.dot_dimension_numbers<[1], [0], [0], [1], [0, 0, 1, 1], [], []>} : vector<16x16xbf16>, vector<16x64xbf16>, vector<16x64xf32> -> vector<16x64xf32>
    %465 = arith.addf %462, %464 : vector<16x64xf32>
    %466 = math.tanh %465 : vector<16x64xf32>
    %467 = vector.extract_strided_slice %466 {offsets = [0, 0], sizes = [16, 48], strides = [1, 1]} : vector<16x64xf32> to vector<16x48xf32>
    %cst_118 = arith.constant 5.000000e-01 : f32
    %468 = vector.broadcast %cst_118 : f32 to vector<16x48xf32>
    %469 = arith.mulf %468, %467 : vector<16x48xf32>
    %cst_119 = arith.constant 5.000000e-01 : f32
    %470 = vector.broadcast %cst_119 : f32 to vector<16x48xf32>
    %471 = arith.addf %469, %470 : vector<16x48xf32>
    %472 = vector.extract_strided_slice %466 {offsets = [0, 48], sizes = [16, 16], strides = [1, 1]} : vector<16x64xf32> to vector<16x16xf32>
    %473 = vector.extract_strided_slice %471 {offsets = [0, 16], sizes = [16, 16], strides = [1, 1]} : vector<16x48xf32> to vector<16x16xf32>
    %474 = arith.mulf %473, %456 : vector<16x16xf32>
    %475 = vector.extract_strided_slice %471 {offsets = [0, 0], sizes = [16, 16], strides = [1, 1]} : vector<16x48xf32> to vector<16x16xf32>
    %476 = arith.mulf %475, %472 : vector<16x16xf32>
    %477 = arith.addf %474, %476 : vector<16x16xf32>
    %478 = vector.extract_strided_slice %471 {offsets = [0, 32], sizes = [16, 16], strides = [1, 1]} : vector<16x48xf32> to vector<16x16xf32>
    %479 = math.tanh %477 : vector<16x16xf32>
    %480 = arith.mulf %478, %479 : vector<16x16xf32>
    %c19_i32 = arith.constant 19 : i32
    %481 = arith.index_cast %c19_i32 : i32 to index
    %c0_120 = arith.constant 0 : index
    %c0_121 = arith.constant 0 : index
    %482 = vector.load %arg12[%481, %c0_120, %c0_121] : memref<28x16x64xf32, #tpu.memory_space<vmem>>, vector<1x16x64xf32>
    %483 = vector.shape_cast %482 : vector<1x16x64xf32> to vector<16x64xf32>
    %484 = arith.truncf %480 : vector<16x16xf32> to vector<16x16xbf16>
    %cst_122 = arith.constant dense<0.000000e+00> : vector<16x64xf32>
    %485 = tpu.matmul %484, %79, %cst_122 {dimension_numbers = #tpu.dot_dimension_numbers<[1], [0], [0], [1], [0, 0, 1, 1], [], []>} : vector<16x16xbf16>, vector<16x64xbf16>, vector<16x64xf32> -> vector<16x64xf32>
    %486 = arith.addf %483, %485 : vector<16x64xf32>
    %487 = math.tanh %486 : vector<16x64xf32>
    %488 = vector.extract_strided_slice %487 {offsets = [0, 0], sizes = [16, 48], strides = [1, 1]} : vector<16x64xf32> to vector<16x48xf32>
    %cst_123 = arith.constant 5.000000e-01 : f32
    %489 = vector.broadcast %cst_123 : f32 to vector<16x48xf32>
    %490 = arith.mulf %489, %488 : vector<16x48xf32>
    %cst_124 = arith.constant 5.000000e-01 : f32
    %491 = vector.broadcast %cst_124 : f32 to vector<16x48xf32>
    %492 = arith.addf %490, %491 : vector<16x48xf32>
    %493 = vector.extract_strided_slice %487 {offsets = [0, 48], sizes = [16, 16], strides = [1, 1]} : vector<16x64xf32> to vector<16x16xf32>
    %494 = vector.extract_strided_slice %492 {offsets = [0, 16], sizes = [16, 16], strides = [1, 1]} : vector<16x48xf32> to vector<16x16xf32>
    %495 = arith.mulf %494, %477 : vector<16x16xf32>
    %496 = vector.extract_strided_slice %492 {offsets = [0, 0], sizes = [16, 16], strides = [1, 1]} : vector<16x48xf32> to vector<16x16xf32>
    %497 = arith.mulf %496, %493 : vector<16x16xf32>
    %498 = arith.addf %495, %497 : vector<16x16xf32>
    %499 = vector.extract_strided_slice %492 {offsets = [0, 32], sizes = [16, 16], strides = [1, 1]} : vector<16x48xf32> to vector<16x16xf32>
    %500 = math.tanh %498 : vector<16x16xf32>
    %501 = arith.mulf %499, %500 : vector<16x16xf32>
    %c20_i32 = arith.constant 20 : i32
    %502 = arith.index_cast %c20_i32 : i32 to index
    %c0_125 = arith.constant 0 : index
    %c0_126 = arith.constant 0 : index
    %503 = vector.load %arg12[%502, %c0_125, %c0_126] : memref<28x16x64xf32, #tpu.memory_space<vmem>>, vector<1x16x64xf32>
    %504 = vector.shape_cast %503 : vector<1x16x64xf32> to vector<16x64xf32>
    %505 = arith.truncf %501 : vector<16x16xf32> to vector<16x16xbf16>
    %cst_127 = arith.constant dense<0.000000e+00> : vector<16x64xf32>
    %506 = tpu.matmul %505, %79, %cst_127 {dimension_numbers = #tpu.dot_dimension_numbers<[1], [0], [0], [1], [0, 0, 1, 1], [], []>} : vector<16x16xbf16>, vector<16x64xbf16>, vector<16x64xf32> -> vector<16x64xf32>
    %507 = arith.addf %504, %506 : vector<16x64xf32>
    %508 = math.tanh %507 : vector<16x64xf32>
    %509 = vector.extract_strided_slice %508 {offsets = [0, 0], sizes = [16, 48], strides = [1, 1]} : vector<16x64xf32> to vector<16x48xf32>
    %cst_128 = arith.constant 5.000000e-01 : f32
    %510 = vector.broadcast %cst_128 : f32 to vector<16x48xf32>
    %511 = arith.mulf %510, %509 : vector<16x48xf32>
    %cst_129 = arith.constant 5.000000e-01 : f32
    %512 = vector.broadcast %cst_129 : f32 to vector<16x48xf32>
    %513 = arith.addf %511, %512 : vector<16x48xf32>
    %514 = vector.extract_strided_slice %508 {offsets = [0, 48], sizes = [16, 16], strides = [1, 1]} : vector<16x64xf32> to vector<16x16xf32>
    %515 = vector.extract_strided_slice %513 {offsets = [0, 16], sizes = [16, 16], strides = [1, 1]} : vector<16x48xf32> to vector<16x16xf32>
    %516 = arith.mulf %515, %498 : vector<16x16xf32>
    %517 = vector.extract_strided_slice %513 {offsets = [0, 0], sizes = [16, 16], strides = [1, 1]} : vector<16x48xf32> to vector<16x16xf32>
    %518 = arith.mulf %517, %514 : vector<16x16xf32>
    %519 = arith.addf %516, %518 : vector<16x16xf32>
    %520 = vector.extract_strided_slice %513 {offsets = [0, 32], sizes = [16, 16], strides = [1, 1]} : vector<16x48xf32> to vector<16x16xf32>
    %521 = math.tanh %519 : vector<16x16xf32>
    %522 = arith.mulf %520, %521 : vector<16x16xf32>
    %c21_i32 = arith.constant 21 : i32
    %523 = arith.index_cast %c21_i32 : i32 to index
    %c0_130 = arith.constant 0 : index
    %c0_131 = arith.constant 0 : index
    %524 = vector.load %arg12[%523, %c0_130, %c0_131] : memref<28x16x64xf32, #tpu.memory_space<vmem>>, vector<1x16x64xf32>
    %525 = vector.shape_cast %524 : vector<1x16x64xf32> to vector<16x64xf32>
    %526 = arith.truncf %522 : vector<16x16xf32> to vector<16x16xbf16>
    %cst_132 = arith.constant dense<0.000000e+00> : vector<16x64xf32>
    %527 = tpu.matmul %526, %79, %cst_132 {dimension_numbers = #tpu.dot_dimension_numbers<[1], [0], [0], [1], [0, 0, 1, 1], [], []>} : vector<16x16xbf16>, vector<16x64xbf16>, vector<16x64xf32> -> vector<16x64xf32>
    %528 = arith.addf %525, %527 : vector<16x64xf32>
    %529 = math.tanh %528 : vector<16x64xf32>
    %530 = vector.extract_strided_slice %529 {offsets = [0, 0], sizes = [16, 48], strides = [1, 1]} : vector<16x64xf32> to vector<16x48xf32>
    %cst_133 = arith.constant 5.000000e-01 : f32
    %531 = vector.broadcast %cst_133 : f32 to vector<16x48xf32>
    %532 = arith.mulf %531, %530 : vector<16x48xf32>
    %cst_134 = arith.constant 5.000000e-01 : f32
    %533 = vector.broadcast %cst_134 : f32 to vector<16x48xf32>
    %534 = arith.addf %532, %533 : vector<16x48xf32>
    %535 = vector.extract_strided_slice %529 {offsets = [0, 48], sizes = [16, 16], strides = [1, 1]} : vector<16x64xf32> to vector<16x16xf32>
    %536 = vector.extract_strided_slice %534 {offsets = [0, 16], sizes = [16, 16], strides = [1, 1]} : vector<16x48xf32> to vector<16x16xf32>
    %537 = arith.mulf %536, %519 : vector<16x16xf32>
    %538 = vector.extract_strided_slice %534 {offsets = [0, 0], sizes = [16, 16], strides = [1, 1]} : vector<16x48xf32> to vector<16x16xf32>
    %539 = arith.mulf %538, %535 : vector<16x16xf32>
    %540 = arith.addf %537, %539 : vector<16x16xf32>
    %541 = vector.extract_strided_slice %534 {offsets = [0, 32], sizes = [16, 16], strides = [1, 1]} : vector<16x48xf32> to vector<16x16xf32>
    %542 = math.tanh %540 : vector<16x16xf32>
    %543 = arith.mulf %541, %542 : vector<16x16xf32>
    %c22_i32 = arith.constant 22 : i32
    %544 = arith.index_cast %c22_i32 : i32 to index
    %c0_135 = arith.constant 0 : index
    %c0_136 = arith.constant 0 : index
    %545 = vector.load %arg12[%544, %c0_135, %c0_136] : memref<28x16x64xf32, #tpu.memory_space<vmem>>, vector<1x16x64xf32>
    %546 = vector.shape_cast %545 : vector<1x16x64xf32> to vector<16x64xf32>
    %547 = arith.truncf %543 : vector<16x16xf32> to vector<16x16xbf16>
    %cst_137 = arith.constant dense<0.000000e+00> : vector<16x64xf32>
    %548 = tpu.matmul %547, %79, %cst_137 {dimension_numbers = #tpu.dot_dimension_numbers<[1], [0], [0], [1], [0, 0, 1, 1], [], []>} : vector<16x16xbf16>, vector<16x64xbf16>, vector<16x64xf32> -> vector<16x64xf32>
    %549 = arith.addf %546, %548 : vector<16x64xf32>
    %550 = math.tanh %549 : vector<16x64xf32>
    %551 = vector.extract_strided_slice %550 {offsets = [0, 0], sizes = [16, 48], strides = [1, 1]} : vector<16x64xf32> to vector<16x48xf32>
    %cst_138 = arith.constant 5.000000e-01 : f32
    %552 = vector.broadcast %cst_138 : f32 to vector<16x48xf32>
    %553 = arith.mulf %552, %551 : vector<16x48xf32>
    %cst_139 = arith.constant 5.000000e-01 : f32
    %554 = vector.broadcast %cst_139 : f32 to vector<16x48xf32>
    %555 = arith.addf %553, %554 : vector<16x48xf32>
    %556 = vector.extract_strided_slice %550 {offsets = [0, 48], sizes = [16, 16], strides = [1, 1]} : vector<16x64xf32> to vector<16x16xf32>
    %557 = vector.extract_strided_slice %555 {offsets = [0, 16], sizes = [16, 16], strides = [1, 1]} : vector<16x48xf32> to vector<16x16xf32>
    %558 = arith.mulf %557, %540 : vector<16x16xf32>
    %559 = vector.extract_strided_slice %555 {offsets = [0, 0], sizes = [16, 16], strides = [1, 1]} : vector<16x48xf32> to vector<16x16xf32>
    %560 = arith.mulf %559, %556 : vector<16x16xf32>
    %561 = arith.addf %558, %560 : vector<16x16xf32>
    %562 = vector.extract_strided_slice %555 {offsets = [0, 32], sizes = [16, 16], strides = [1, 1]} : vector<16x48xf32> to vector<16x16xf32>
    %563 = math.tanh %561 : vector<16x16xf32>
    %564 = arith.mulf %562, %563 : vector<16x16xf32>
    %c23_i32 = arith.constant 23 : i32
    %565 = arith.index_cast %c23_i32 : i32 to index
    %c0_140 = arith.constant 0 : index
    %c0_141 = arith.constant 0 : index
    %566 = vector.load %arg12[%565, %c0_140, %c0_141] : memref<28x16x64xf32, #tpu.memory_space<vmem>>, vector<1x16x64xf32>
    %567 = vector.shape_cast %566 : vector<1x16x64xf32> to vector<16x64xf32>
    %568 = arith.truncf %564 : vector<16x16xf32> to vector<16x16xbf16>
    %cst_142 = arith.constant dense<0.000000e+00> : vector<16x64xf32>
    %569 = tpu.matmul %568, %79, %cst_142 {dimension_numbers = #tpu.dot_dimension_numbers<[1], [0], [0], [1], [0, 0, 1, 1], [], []>} : vector<16x16xbf16>, vector<16x64xbf16>, vector<16x64xf32> -> vector<16x64xf32>
    %570 = arith.addf %567, %569 : vector<16x64xf32>
    %571 = math.tanh %570 : vector<16x64xf32>
    %572 = vector.extract_strided_slice %571 {offsets = [0, 0], sizes = [16, 48], strides = [1, 1]} : vector<16x64xf32> to vector<16x48xf32>
    %cst_143 = arith.constant 5.000000e-01 : f32
    %573 = vector.broadcast %cst_143 : f32 to vector<16x48xf32>
    %574 = arith.mulf %573, %572 : vector<16x48xf32>
    %cst_144 = arith.constant 5.000000e-01 : f32
    %575 = vector.broadcast %cst_144 : f32 to vector<16x48xf32>
    %576 = arith.addf %574, %575 : vector<16x48xf32>
    %577 = vector.extract_strided_slice %571 {offsets = [0, 48], sizes = [16, 16], strides = [1, 1]} : vector<16x64xf32> to vector<16x16xf32>
    %578 = vector.extract_strided_slice %576 {offsets = [0, 16], sizes = [16, 16], strides = [1, 1]} : vector<16x48xf32> to vector<16x16xf32>
    %579 = arith.mulf %578, %561 : vector<16x16xf32>
    %580 = vector.extract_strided_slice %576 {offsets = [0, 0], sizes = [16, 16], strides = [1, 1]} : vector<16x48xf32> to vector<16x16xf32>
    %581 = arith.mulf %580, %577 : vector<16x16xf32>
    %582 = arith.addf %579, %581 : vector<16x16xf32>
    %583 = vector.extract_strided_slice %576 {offsets = [0, 32], sizes = [16, 16], strides = [1, 1]} : vector<16x48xf32> to vector<16x16xf32>
    %584 = math.tanh %582 : vector<16x16xf32>
    %585 = arith.mulf %583, %584 : vector<16x16xf32>
    %c24_i32 = arith.constant 24 : i32
    %586 = arith.index_cast %c24_i32 : i32 to index
    %c0_145 = arith.constant 0 : index
    %c0_146 = arith.constant 0 : index
    %587 = vector.load %arg12[%586, %c0_145, %c0_146] : memref<28x16x64xf32, #tpu.memory_space<vmem>>, vector<1x16x64xf32>
    %588 = vector.shape_cast %587 : vector<1x16x64xf32> to vector<16x64xf32>
    %589 = arith.truncf %585 : vector<16x16xf32> to vector<16x16xbf16>
    %cst_147 = arith.constant dense<0.000000e+00> : vector<16x64xf32>
    %590 = tpu.matmul %589, %79, %cst_147 {dimension_numbers = #tpu.dot_dimension_numbers<[1], [0], [0], [1], [0, 0, 1, 1], [], []>} : vector<16x16xbf16>, vector<16x64xbf16>, vector<16x64xf32> -> vector<16x64xf32>
    %591 = arith.addf %588, %590 : vector<16x64xf32>
    %592 = math.tanh %591 : vector<16x64xf32>
    %593 = vector.extract_strided_slice %592 {offsets = [0, 0], sizes = [16, 48], strides = [1, 1]} : vector<16x64xf32> to vector<16x48xf32>
    %cst_148 = arith.constant 5.000000e-01 : f32
    %594 = vector.broadcast %cst_148 : f32 to vector<16x48xf32>
    %595 = arith.mulf %594, %593 : vector<16x48xf32>
    %cst_149 = arith.constant 5.000000e-01 : f32
    %596 = vector.broadcast %cst_149 : f32 to vector<16x48xf32>
    %597 = arith.addf %595, %596 : vector<16x48xf32>
    %598 = vector.extract_strided_slice %592 {offsets = [0, 48], sizes = [16, 16], strides = [1, 1]} : vector<16x64xf32> to vector<16x16xf32>
    %599 = vector.extract_strided_slice %597 {offsets = [0, 16], sizes = [16, 16], strides = [1, 1]} : vector<16x48xf32> to vector<16x16xf32>
    %600 = arith.mulf %599, %582 : vector<16x16xf32>
    %601 = vector.extract_strided_slice %597 {offsets = [0, 0], sizes = [16, 16], strides = [1, 1]} : vector<16x48xf32> to vector<16x16xf32>
    %602 = arith.mulf %601, %598 : vector<16x16xf32>
    %603 = arith.addf %600, %602 : vector<16x16xf32>
    %604 = vector.extract_strided_slice %597 {offsets = [0, 32], sizes = [16, 16], strides = [1, 1]} : vector<16x48xf32> to vector<16x16xf32>
    %605 = math.tanh %603 : vector<16x16xf32>
    %606 = arith.mulf %604, %605 : vector<16x16xf32>
    %c25_i32 = arith.constant 25 : i32
    %607 = arith.index_cast %c25_i32 : i32 to index
    %c0_150 = arith.constant 0 : index
    %c0_151 = arith.constant 0 : index
    %608 = vector.load %arg12[%607, %c0_150, %c0_151] : memref<28x16x64xf32, #tpu.memory_space<vmem>>, vector<1x16x64xf32>
    %609 = vector.shape_cast %608 : vector<1x16x64xf32> to vector<16x64xf32>
    %610 = arith.truncf %606 : vector<16x16xf32> to vector<16x16xbf16>
    %cst_152 = arith.constant dense<0.000000e+00> : vector<16x64xf32>
    %611 = tpu.matmul %610, %79, %cst_152 {dimension_numbers = #tpu.dot_dimension_numbers<[1], [0], [0], [1], [0, 0, 1, 1], [], []>} : vector<16x16xbf16>, vector<16x64xbf16>, vector<16x64xf32> -> vector<16x64xf32>
    %612 = arith.addf %609, %611 : vector<16x64xf32>
    %613 = math.tanh %612 : vector<16x64xf32>
    %614 = vector.extract_strided_slice %613 {offsets = [0, 0], sizes = [16, 48], strides = [1, 1]} : vector<16x64xf32> to vector<16x48xf32>
    %cst_153 = arith.constant 5.000000e-01 : f32
    %615 = vector.broadcast %cst_153 : f32 to vector<16x48xf32>
    %616 = arith.mulf %615, %614 : vector<16x48xf32>
    %cst_154 = arith.constant 5.000000e-01 : f32
    %617 = vector.broadcast %cst_154 : f32 to vector<16x48xf32>
    %618 = arith.addf %616, %617 : vector<16x48xf32>
    %619 = vector.extract_strided_slice %613 {offsets = [0, 48], sizes = [16, 16], strides = [1, 1]} : vector<16x64xf32> to vector<16x16xf32>
    %620 = vector.extract_strided_slice %618 {offsets = [0, 16], sizes = [16, 16], strides = [1, 1]} : vector<16x48xf32> to vector<16x16xf32>
    %621 = arith.mulf %620, %603 : vector<16x16xf32>
    %622 = vector.extract_strided_slice %618 {offsets = [0, 0], sizes = [16, 16], strides = [1, 1]} : vector<16x48xf32> to vector<16x16xf32>
    %623 = arith.mulf %622, %619 : vector<16x16xf32>
    %624 = arith.addf %621, %623 : vector<16x16xf32>
    %625 = vector.extract_strided_slice %618 {offsets = [0, 32], sizes = [16, 16], strides = [1, 1]} : vector<16x48xf32> to vector<16x16xf32>
    %626 = math.tanh %624 : vector<16x16xf32>
    %627 = arith.mulf %625, %626 : vector<16x16xf32>
    %c26_i32 = arith.constant 26 : i32
    %628 = arith.index_cast %c26_i32 : i32 to index
    %c0_155 = arith.constant 0 : index
    %c0_156 = arith.constant 0 : index
    %629 = vector.load %arg12[%628, %c0_155, %c0_156] : memref<28x16x64xf32, #tpu.memory_space<vmem>>, vector<1x16x64xf32>
    %630 = vector.shape_cast %629 : vector<1x16x64xf32> to vector<16x64xf32>
    %631 = arith.truncf %627 : vector<16x16xf32> to vector<16x16xbf16>
    %cst_157 = arith.constant dense<0.000000e+00> : vector<16x64xf32>
    %632 = tpu.matmul %631, %79, %cst_157 {dimension_numbers = #tpu.dot_dimension_numbers<[1], [0], [0], [1], [0, 0, 1, 1], [], []>} : vector<16x16xbf16>, vector<16x64xbf16>, vector<16x64xf32> -> vector<16x64xf32>
    %633 = arith.addf %630, %632 : vector<16x64xf32>
    %634 = math.tanh %633 : vector<16x64xf32>
    %635 = vector.extract_strided_slice %634 {offsets = [0, 0], sizes = [16, 48], strides = [1, 1]} : vector<16x64xf32> to vector<16x48xf32>
    %cst_158 = arith.constant 5.000000e-01 : f32
    %636 = vector.broadcast %cst_158 : f32 to vector<16x48xf32>
    %637 = arith.mulf %636, %635 : vector<16x48xf32>
    %cst_159 = arith.constant 5.000000e-01 : f32
    %638 = vector.broadcast %cst_159 : f32 to vector<16x48xf32>
    %639 = arith.addf %637, %638 : vector<16x48xf32>
    %640 = vector.extract_strided_slice %634 {offsets = [0, 48], sizes = [16, 16], strides = [1, 1]} : vector<16x64xf32> to vector<16x16xf32>
    %641 = vector.extract_strided_slice %639 {offsets = [0, 16], sizes = [16, 16], strides = [1, 1]} : vector<16x48xf32> to vector<16x16xf32>
    %642 = arith.mulf %641, %624 : vector<16x16xf32>
    %643 = vector.extract_strided_slice %639 {offsets = [0, 0], sizes = [16, 16], strides = [1, 1]} : vector<16x48xf32> to vector<16x16xf32>
    %644 = arith.mulf %643, %640 : vector<16x16xf32>
    %645 = arith.addf %642, %644 : vector<16x16xf32>
    %646 = vector.extract_strided_slice %639 {offsets = [0, 32], sizes = [16, 16], strides = [1, 1]} : vector<16x48xf32> to vector<16x16xf32>
    %647 = math.tanh %645 : vector<16x16xf32>
    %648 = arith.mulf %646, %647 : vector<16x16xf32>
    %c27_i32 = arith.constant 27 : i32
    %649 = arith.index_cast %c27_i32 : i32 to index
    %c0_160 = arith.constant 0 : index
    %c0_161 = arith.constant 0 : index
    %650 = vector.load %arg12[%649, %c0_160, %c0_161] : memref<28x16x64xf32, #tpu.memory_space<vmem>>, vector<1x16x64xf32>
    %651 = vector.shape_cast %650 : vector<1x16x64xf32> to vector<16x64xf32>
    %652 = arith.truncf %648 : vector<16x16xf32> to vector<16x16xbf16>
    %cst_162 = arith.constant dense<0.000000e+00> : vector<16x64xf32>
    %653 = tpu.matmul %652, %79, %cst_162 {dimension_numbers = #tpu.dot_dimension_numbers<[1], [0], [0], [1], [0, 0, 1, 1], [], []>} : vector<16x16xbf16>, vector<16x64xbf16>, vector<16x64xf32> -> vector<16x64xf32>
    %654 = arith.addf %651, %653 : vector<16x64xf32>
    %655 = math.tanh %654 : vector<16x64xf32>
    %656 = vector.extract_strided_slice %655 {offsets = [0, 0], sizes = [16, 48], strides = [1, 1]} : vector<16x64xf32> to vector<16x48xf32>
    %cst_163 = arith.constant 5.000000e-01 : f32
    %657 = vector.broadcast %cst_163 : f32 to vector<16x48xf32>
    %658 = arith.mulf %657, %656 : vector<16x48xf32>
    %cst_164 = arith.constant 5.000000e-01 : f32
    %659 = vector.broadcast %cst_164 : f32 to vector<16x48xf32>
    %660 = arith.addf %658, %659 : vector<16x48xf32>
    %661 = vector.extract_strided_slice %655 {offsets = [0, 48], sizes = [16, 16], strides = [1, 1]} : vector<16x64xf32> to vector<16x16xf32>
    %662 = vector.extract_strided_slice %660 {offsets = [0, 16], sizes = [16, 16], strides = [1, 1]} : vector<16x48xf32> to vector<16x16xf32>
    %663 = arith.mulf %662, %645 : vector<16x16xf32>
    %664 = vector.extract_strided_slice %660 {offsets = [0, 0], sizes = [16, 16], strides = [1, 1]} : vector<16x48xf32> to vector<16x16xf32>
    %665 = arith.mulf %664, %661 : vector<16x16xf32>
    %666 = arith.addf %663, %665 : vector<16x16xf32>
    %667 = vector.extract_strided_slice %660 {offsets = [0, 32], sizes = [16, 16], strides = [1, 1]} : vector<16x48xf32> to vector<16x16xf32>
    %668 = math.tanh %666 : vector<16x16xf32>
    %669 = arith.mulf %667, %668 : vector<16x16xf32>
    %c28_i32 = arith.constant 28 : i32
    %670 = tpu.concatenate %669, %69 in 1 : vector<16x16xf32>, vector<16x16xf32> -> vector<16x32xf32>
    %671 = arith.truncf %670 : vector<16x32xf32> to vector<16x32xbf16>
    %c0_165 = arith.constant 0 : index
    %c0_166 = arith.constant 0 : index
    %672 = vector.load %arg9[%c0_165, %c0_166] : memref<32x4xbf16, #tpu.memory_space<vmem>>, vector<32x4xbf16>
    %cst_167 = arith.constant dense<0.000000e+00> : vector<16x4xf32>
    %673 = tpu.matmul %671, %672, %cst_167 {dimension_numbers = #tpu.dot_dimension_numbers<[1], [0], [0], [1], [0, 0, 1, 1], [], []>} : vector<16x32xbf16>, vector<32x4xbf16>, vector<16x4xf32> -> vector<16x4xf32>
    %c0_168 = arith.constant 0 : index
    %c0_169 = arith.constant 0 : index
    %674 = vector.load %arg10[%c0_168, %c0_169] : memref<1x4xf32, #tpu.memory_space<vmem>>, vector<1x4xf32>
    %675 = vector.broadcast %674 : vector<1x4xf32> to vector<16x4xf32>
    %676 = arith.addf %673, %675 : vector<16x4xf32>
    %cst_170 = arith.constant dense<0xFF800000> : vector<16xf32>
    %677 = vector.multi_reduction <maximumf>, %676, %cst_170 [1] : vector<16x4xf32> to vector<16xf32>
    %678 = vector.shape_cast %677 : vector<16xf32> to vector<16x1xf32>
    %679 = vector.broadcast %678 : vector<16x1xf32> to vector<16x4xf32>
    %680 = arith.subf %676, %679 : vector<16x4xf32>
    %681 = math.exp %680 : vector<16x4xf32>
    %cst_171 = arith.constant dense<0.000000e+00> : vector<16xf32>
    %682 = vector.multi_reduction <add>, %681, %cst_171 [1] : vector<16x4xf32> to vector<16xf32>
    %683 = vector.shape_cast %682 : vector<16xf32> to vector<16x1xf32>
    %684 = tpu.reciprocal %683 {approx = true} : vector<16x1xf32> -> vector<16x1xf32>
    %685 = vector.broadcast %684 : vector<16x1xf32> to vector<16x4xf32>
    %686 = arith.mulf %681, %685 : vector<16x4xf32>
    %c0_172 = arith.constant 0 : index
    %c0_173 = arith.constant 0 : index
    %687 = vector.load %arg11[%c0_172, %c0_173] : memref<16x4xf32, #tpu.memory_space<vmem>>, vector<16x4xf32>
    tpu.vector_store %arg11[%c0_172, %c0_173], %686 {strides = array<i32>} : memref<16x4xf32, #tpu.memory_space<vmem>>, vector<16x4xf32>,
    return
  }
  func.func @transform_0(%arg0: i32) -> (i32, i32) {
    %c0_i32 = arith.constant 0 : i32
    %c0_i32_0 = arith.constant 0 : i32
    return %arg0, %c0_i32 : i32, i32
  }
  func.func @transform_1(%arg0: i32) -> (i32, i32) {
    %c0_i32 = arith.constant 0 : i32
    %c0_i32_0 = arith.constant 0 : i32
    %c0_i32_1 = arith.constant 0 : i32
    return %c0_i32, %c0_i32_0 : i32, i32
  }
  func.func @transform_2(%arg0: i32) -> (i32, i32) {
    %c0_i32 = arith.constant 0 : i32
    %c0_i32_0 = arith.constant 0 : i32
    %c0_i32_1 = arith.constant 0 : i32
    return %c0_i32, %c0_i32_0 : i32, i32
  }
  func.func @transform_3(%arg0: i32) -> (i32, i32) {
    %c0_i32 = arith.constant 0 : i32
    %c0_i32_0 = arith.constant 0 : i32
    %c0_i32_1 = arith.constant 0 : i32
    return %c0_i32, %c0_i32_0 : i32, i32
  }
  func.func @transform_4(%arg0: i32) -> (i32, i32) {
    %c0_i32 = arith.constant 0 : i32
    %c0_i32_0 = arith.constant 0 : i32
    %c0_i32_1 = arith.constant 0 : i32
    return %c0_i32, %c0_i32_0 : i32, i32
  }
  func.func @transform_5(%arg0: i32) -> (i32, i32) {
    %c0_i32 = arith.constant 0 : i32
    %c0_i32_0 = arith.constant 0 : i32
    %c0_i32_1 = arith.constant 0 : i32
    return %c0_i32, %c0_i32_0 : i32, i32
  }
  func.func @transform_6(%arg0: i32) -> (i32, i32) {
    %c0_i32 = arith.constant 0 : i32
    %c0_i32_0 = arith.constant 0 : i32
    %c0_i32_1 = arith.constant 0 : i32
    return %c0_i32, %c0_i32_0 : i32, i32
  }
  func.func @transform_7(%arg0: i32) -> (i32, i32) {
    %c0_i32 = arith.constant 0 : i32
    %c0_i32_0 = arith.constant 0 : i32
    %c0_i32_1 = arith.constant 0 : i32
    return %c0_i32, %c0_i32_0 : i32, i32
  }
  func.func @transform_8(%arg0: i32) -> (i32, i32) {
    %c0_i32 = arith.constant 0 : i32
    %c0_i32_0 = arith.constant 0 : i32
    %c0_i32_1 = arith.constant 0 : i32
    return %c0_i32, %c0_i32_0 : i32, i32
  }
  func.func @transform_9(%arg0: i32) -> (i32, i32) {
    %c0_i32 = arith.constant 0 : i32
    %c0_i32_0 = arith.constant 0 : i32
    %c0_i32_1 = arith.constant 0 : i32
    return %c0_i32, %c0_i32_0 : i32, i32
  }
  func.func @transform_10(%arg0: i32) -> (i32, i32) {
    %c0_i32 = arith.constant 0 : i32
    %c0_i32_0 = arith.constant 0 : i32
    return %arg0, %c0_i32 : i32, i32
  }
}

</mosaic_0001>

<llo_original>
// kernel: tpu_custom_call.1
$region0: #{tpu_custom_call.1}
  #allocation0 [shape = 'u32[]', space=smem, size = 0x4, offset = 0x4, fixed_abs, tag = 'smem constant byte address 0x4 - core index']
  #allocation1 [shape = 'u32[144,128]{1,0:T(1,128)}', space=vmem, size = 0x12000, scoped, tag = 'internal scratch']
  #allocation2 [shape = 'f32[28,16,64]{2,1,0:T(8,128)}', space=vmem, size = 0x38000, scoped, tag = 'scratch operand']
  %s0 = inlined_call_operand.vmem [shape: f32[16,32], index: 0, kind: input, shape index: {}]
  %s1 = inlined_call_operand.hbm [shape: f32[5,32], index: 1, kind: input, shape index: {}]
  %s2 = inlined_call_operand.vmem [shape: f32[1,32], index: 2, kind: input, shape index: {}]
  %s3 = inlined_call_operand.hbm [shape: bf16[32,64], index: 3, kind: input, shape index: {}]
  %s4 = inlined_call_operand.hbm [shape: bf16[16,64], index: 4, kind: input, shape index: {}]
  %s5 = inlined_call_operand.vmem [shape: f32[1,64], index: 5, kind: input, shape index: {}]
  %s6 = inlined_call_operand.vmem [shape: bf16[32,64], index: 6, kind: input, shape index: {}]
  %s7 = inlined_call_operand.vmem [shape: f32[1,64], index: 7, kind: input, shape index: {}]
  %s8 = inlined_call_operand.vmem [shape: bf16[32,4], index: 8, kind: input, shape index: {}]
  %s9 = inlined_call_operand.vmem [shape: f32[1,4], index: 9, kind: input, shape index: {}]
  %s10 = inlined_call_operand.vmem [shape: f32[16,4], index: 10, kind: output, shape index: {}]
  %s11 = sld [smem:[#allocation0]]
  $region62: #{tpu_custom_call.1} parent=0
    _
  %s13 = ssub.s32 1, %s11
  %s14 = scalar_select 0, %s13, %s11
  $region1: #{tpu_custom_call.1} parent=0
    #allocation3 [shape = 'u8[4096]{0}', space=vmem, size = 0x1000, scoped, tag = 'input window, operand 1, single buffered']
    #allocation4 [shape = 's32[1]{0}', space=sflag, size = 0x4, scoped, tag = 'scoped memory for tpu_custom_call.1']
    #allocation5 [shape = 'u8[8192]{0}', space=vmem, size = 0x2000, scoped, tag = 'input window, operand 3, single buffered']
    #allocation6 [shape = 's32[1]{0}', space=sflag, size = 0x4, scoped, tag = 'scoped memory for tpu_custom_call.1']
    #allocation7 [shape = 'u8[4096]{0}', space=vmem, size = 0x1000, scoped, tag = 'input window, operand 4, single buffered']
    %15 = vsyncpa [#allocation4], 0
    %16 = vsyncpa [#allocation6], 0
    // Predicated region
    $region2: #{tpu_custom_call.1} parent=1 // pred_check
      _
    $region3: #{tpu_custom_call.1} parent=1 // pred_check_branch
      %18 = sbr.rel (0) target = $region5
    $region4: #{tpu_custom_call.1} parent=1 // pred_region
      _
    $region5: #{tpu_custom_call.1} parent=1 // pred_fallthru
      _
    // Predicated region
    $region6: #{tpu_custom_call.1} parent=1 // pred_check
      _
    $region7: #{tpu_custom_call.1} parent=1 // pred_check_branch
      %20 = sbr.rel (0) target = $region9
    $region8: #{tpu_custom_call.1} parent=1 // pred_region
      %s22 = ssub.s32 128, 128
      %23 = vsyncadd [#allocation4], %s22
      %s25 = sshll.u32 [#allocation3], 4
      %s26 = int_to_ptr.vmem [resolvable:$true] %s25
      %28 = dma.hbm_to_vmem [thread:$0]  %s1, 128, %s26, [#allocation4]
    $region9: #{tpu_custom_call.1} parent=1 // pred_fallthru
      _
    // Predicated region
    $region10: #{tpu_custom_call.1} parent=1 // pred_check
      _
    $region11: #{tpu_custom_call.1} parent=1 // pred_check_branch
      %30 = sbr.rel (0) target = $region13
    $region12: #{tpu_custom_call.1} parent=1 // pred_region
      _
    $region13: #{tpu_custom_call.1} parent=1 // pred_fallthru
      _
    // Predicated region
    $region14: #{tpu_custom_call.1} parent=1 // pred_check
      _
    $region15: #{tpu_custom_call.1} parent=1 // pred_check_branch
      %32 = sbr.rel (0) target = $region17
    $region16: #{tpu_custom_call.1} parent=1 // pred_region
      %s34 = ssub.s32 256, 256
      %35 = vsyncadd [#allocation6], %s34
      %s36 = sshll.u32 [#allocation5], 4
      %s37 = int_to_ptr.vmem [resolvable:$true] %s36
      %42 = dma.hbm_to_vmem [thread:$0]  %s3, 256, %s37, [#allocation6], 64, 64, 4
    $region17: #{tpu_custom_call.1} parent=1 // pred_fallthru
      _
    // Predicated region
    $region18: #{tpu_custom_call.1} parent=1 // pred_check
      _
    $region19: #{tpu_custom_call.1} parent=1 // pred_check_branch
      %44 = sbr.rel (0) target = $region21
    $region20: #{tpu_custom_call.1} parent=1 // pred_region
      %s46 = ssub.s32 128, 128
      %47 = vsyncadd [#allocation6], %s46
      %s48 = sshll.u32 [#allocation7], 4
      %s49 = int_to_ptr.vmem [resolvable:$true] %s48
      %54 = dma.hbm_to_vmem [thread:$0]  %s4, 128, %s49, [#allocation6], 64, 64, 4
    $region21: #{tpu_custom_call.1} parent=1 // pred_fallthru
      _
    // Predicated region
    $region22: #{tpu_custom_call.1} parent=1 // pred_check
      _
    $region23: #{tpu_custom_call.1} parent=1 // pred_check_branch
      %56 = sbr.rel (0) target = $region25
    $region24: #{tpu_custom_call.1} parent=1 // pred_region
      _
    $region25: #{tpu_custom_call.1} parent=1 // pred_fallthru
      _
    // Predicated region
    $region26: #{tpu_custom_call.1} parent=1 // pred_check
      _
    $region27: #{tpu_custom_call.1} parent=1 // pred_check_branch
      %58 = sbr.rel (0) target = $region29
    $region28: #{tpu_custom_call.1} parent=1 // pred_region
      _
    $region29: #{tpu_custom_call.1} parent=1 // pred_fallthru
      _
    // Predicated region
    $region30: #{tpu_custom_call.1} parent=1 // pred_check
      _
    $region31: #{tpu_custom_call.1} parent=1 // pred_check_branch
      %60 = sbr.rel (0) target = $region33
    $region32: #{tpu_custom_call.1} parent=1 // pred_region
      _
    $region33: #{tpu_custom_call.1} parent=1 // pred_fallthru
      _
    // Predicated region
    $region34: #{tpu_custom_call.1} parent=1 // pred_check
      _
    $region35: #{tpu_custom_call.1} parent=1 // pred_check_branch
      %62 = sbr.rel (0) target = $region37
    $region36: #{tpu_custom_call.1} parent=1 // pred_region
      _
    $region37: #{tpu_custom_call.1} parent=1 // pred_fallthru
      _
    // Predicated region
    $region38: #{tpu_custom_call.1} parent=1 // pred_check
      _
    $region39: #{tpu_custom_call.1} parent=1 // pred_check_branch
      %64 = sbr.rel (0) target = $region41
    $region40: #{tpu_custom_call.1} parent=1 // pred_region
      _
    $region41: #{tpu_custom_call.1} parent=1 // pred_fallthru
      _
    // Predicated region
    $region42: #{tpu_custom_call.1} parent=1 // pred_check
      _
    $region43: #{tpu_custom_call.1} parent=1 // pred_check_branch
      %66 = sbr.rel (0) target = $region45
    $region44: #{tpu_custom_call.1} parent=1 // pred_region
      %67 = dma.done [#allocation4], 128
    $region45: #{tpu_custom_call.1} parent=1 // pred_fallthru
      _
    // Predicated region
    $region46: #{tpu_custom_call.1} parent=1 // pred_check
      _
    $region47: #{tpu_custom_call.1} parent=1 // pred_check_branch
      %69 = sbr.rel (0) target = $region49
    $region48: #{tpu_custom_call.1} parent=1 // pred_region
      %70 = dma.done [#allocation6], 256
    $region49: #{tpu_custom_call.1} parent=1 // pred_fallthru
      _
    // Predicated region
    $region50: #{tpu_custom_call.1} parent=1 // pred_check
      _
    $region51: #{tpu_custom_call.1} parent=1 // pred_check_branch
      %72 = sbr.rel (0) target = $region53
    $region52: #{tpu_custom_call.1} parent=1 // pred_region
      %73 = dma.done [#allocation6], 128
    $region53: #{tpu_custom_call.1} parent=1 // pred_fallthru
      _
    %v75 = vld [vmem:[%s0] sm:$0xff]
    %v76 = vld [vmem:[%s0 + $0x8] sm:$0xff]
    %77 = vxpose.xlu0.b32.start [1/16] %v75, 128
    %78 = vxpose.xlu0.b32.cont [2/16] %v76, 128
    %79 = vxpose.xlu0.b32.cont [3/16] 0.0, 128
    %80 = vxpose.xlu0.b32.cont [4/16] 0.0, 128
    %81 = vxpose.xlu0.b32.cont [5/16] 0.0, 128
    %82 = vxpose.xlu0.b32.cont [6/16] 0.0, 128
    %83 = vxpose.xlu0.b32.cont [7/16] 0.0, 128
    %84 = vxpose.xlu0.b32.cont [8/16] 0.0, 128
    %85 = vxpose.xlu0.b32.cont [9/16] 0.0, 128
    %86 = vxpose.xlu0.b32.cont [10/16] 0.0, 128
    %87 = vxpose.xlu0.b32.cont [11/16] 0.0, 128
    %88 = vxpose.xlu0.b32.cont [12/16] 0.0, 128
    %89 = vxpose.xlu0.b32.cont [13/16] 0.0, 128
    %90 = vxpose.xlu0.b32.cont [14/16] 0.0, 128
    %91 = vxpose.xlu0.b32.cont [15/16] 0.0, 128
    %92 = vxpose.xlu0.b32.end [16/16] 0.0, 128
    %v93 = vpop.trf.xlu0
    %v94 = vpop.trf.xlu0
    %v95 = vpop.trf.xlu0
    %v96 = vpop.trf.xlu0
    %v97 = vpop.trf.xlu0
    %v98 = vpop.trf.xlu0
    %v99 = vpop.trf.xlu0
    %v100 = vpop.trf.xlu0
    %v101 = vpop.trf.xlu0
    %v102 = vpop.trf.xlu0
    %v103 = vpop.trf.xlu0
    %v104 = vpop.trf.xlu0
    %v105 = vpop.trf.xlu0
    %v106 = vpop.trf.xlu0
    %v107 = vpop.trf.xlu0
    %v108 = vpop.trf.xlu0
    %v109 = vld [vmem:[#allocation3] sm:$0x1f]
    %v110 = vlaneseq
    %v111 = vshrl.u32 %v110, 7
    %v112 = vsub.s32 0, %v111
    %v113 = vrot.slane %v93, %v112
    %115 = vbcast.lane.b32.xlu0 %v113, 256
    %v116 = vpop.permute.xlu0 %115
    %s118 = sor.u32 256, 8
    %119 = vbcast.lane.b32.xlu0 %v113, %s118
    %v120 = vpop.permute.xlu0 %119
    %v121 = vlaneseq
    %v122 = vshrl.u32 %v121, 7
    %v123 = vsub.s32 1, %v122
    %v124 = vrot.slane %v93, %v123
    %126 = vbcast.lane.b32.xlu0 %v124, 256
    %v127 = vpop.permute.xlu0 %126
    %s129 = sor.u32 256, 8
    %130 = vbcast.lane.b32.xlu0 %v124, %s129
    %v131 = vpop.permute.xlu0 %130
    %v132 = vlaneseq
    %v133 = vshrl.u32 %v132, 7
    %v134 = vsub.s32 2, %v133
    %v135 = vrot.slane %v93, %v134
    %137 = vbcast.lane.b32.xlu0 %v135, 256
    %v138 = vpop.permute.xlu0 %137
    %s140 = sor.u32 256, 8
    %141 = vbcast.lane.b32.xlu0 %v135, %s140
    %v142 = vpop.permute.xlu0 %141
    %v143 = vlaneseq
    %v144 = vshrl.u32 %v143, 7
    %v145 = vsub.s32 3, %v144
    %v146 = vrot.slane %v93, %v145
    %148 = vbcast.lane.b32.xlu0 %v146, 256
    %v149 = vpop.permute.xlu0 %148
    %s151 = sor.u32 256, 8
    %152 = vbcast.lane.b32.xlu0 %v146, %s151
    %v153 = vpop.permute.xlu0 %152
    %v154 = vlaneseq
    %v155 = vshrl.u32 %v154, 7
    %v156 = vsub.s32 4, %v155
    %v157 = vrot.slane %v93, %v156
    %159 = vbcast.lane.b32.xlu0 %v157, 256
    %v160 = vpop.permute.xlu0 %159
    %s162 = sor.u32 256, 8
    %163 = vbcast.lane.b32.xlu0 %v157, %s162
    %v164 = vpop.permute.xlu0 %163
    %v165 = vlaneseq
    %v166 = vshrl.u32 %v165, 7
    %v167 = vsub.s32 5, %v166
    %v168 = vrot.slane %v93, %v167
    %170 = vbcast.lane.b32.xlu0 %v168, 256
    %v171 = vpop.permute.xlu0 %170
    %s173 = sor.u32 256, 8
    %174 = vbcast.lane.b32.xlu0 %v168, %s173
    %v175 = vpop.permute.xlu0 %174
    %v176 = vlaneseq
    %v177 = vshrl.u32 %v176, 7
    %v178 = vsub.s32 6, %v177
    %v179 = vrot.slane %v93, %v178
    %181 = vbcast.lane.b32.xlu0 %v179, 256
    %v182 = vpop.permute.xlu0 %181
    %s184 = sor.u32 256, 8
    %185 = vbcast.lane.b32.xlu0 %v179, %s184
    %v186 = vpop.permute.xlu0 %185
    %v187 = vlaneseq
    %v188 = vshrl.u32 %v187, 7
    %v189 = vsub.s32 7, %v188
    %v190 = vrot.slane %v93, %v189
    %192 = vbcast.lane.b32.xlu0 %v190, 256
    %v193 = vpop.permute.xlu0 %192
    %s195 = sor.u32 256, 8
    %196 = vbcast.lane.b32.xlu0 %v190, %s195
    %v197 = vpop.permute.xlu0 %196
    %v198 = vlaneseq
    %v199 = vshrl.u32 %v198, 7
    %v200 = vsub.s32 0, %v199
    %v201 = vrot.slane %v94, %v200
    %203 = vbcast.lane.b32.xlu0 %v201, 256
    %v204 = vpop.permute.xlu0 %203
    %s206 = sor.u32 256, 8
    %207 = vbcast.lane.b32.xlu0 %v201, %s206
    %v208 = vpop.permute.xlu0 %207
    %v209 = vlaneseq
    %v210 = vshrl.u32 %v209, 7
    %v211 = vsub.s32 1, %v210
    %v212 = vrot.slane %v94, %v211
    %214 = vbcast.lane.b32.xlu0 %v212, 256
    %v215 = vpop.permute.xlu0 %214
    %s217 = sor.u32 256, 8
    %218 = vbcast.lane.b32.xlu0 %v212, %s217
    %v219 = vpop.permute.xlu0 %218
    %v220 = vlaneseq
    %v221 = vshrl.u32 %v220, 7
    %v222 = vsub.s32 2, %v221
    %v223 = vrot.slane %v94, %v222
    %225 = vbcast.lane.b32.xlu0 %v223, 256
    %v226 = vpop.permute.xlu0 %225
    %s228 = sor.u32 256, 8
    %229 = vbcast.lane.b32.xlu0 %v223, %s228
    %v230 = vpop.permute.xlu0 %229
    %v231 = vlaneseq
    %v232 = vshrl.u32 %v231, 7
    %v233 = vsub.s32 3, %v232
    %v234 = vrot.slane %v94, %v233
    %236 = vbcast.lane.b32.xlu0 %v234, 256
    %v237 = vpop.permute.xlu0 %236
    %s239 = sor.u32 256, 8
    %240 = vbcast.lane.b32.xlu0 %v234, %s239
    %v241 = vpop.permute.xlu0 %240
    %v242 = vlaneseq
    %v243 = vshrl.u32 %v242, 7
    %v244 = vsub.s32 4, %v243
    %v245 = vrot.slane %v94, %v244
    %247 = vbcast.lane.b32.xlu0 %v245, 256
    %v248 = vpop.permute.xlu0 %247
    %s250 = sor.u32 256, 8
    %251 = vbcast.lane.b32.xlu0 %v245, %s250
    %v252 = vpop.permute.xlu0 %251
    %v253 = vlaneseq
    %v254 = vshrl.u32 %v253, 7
    %v255 = vsub.s32 5, %v254
    %v256 = vrot.slane %v94, %v255
    %258 = vbcast.lane.b32.xlu0 %v256, 256
    %v259 = vpop.permute.xlu0 %258
    %s261 = sor.u32 256, 8
    %262 = vbcast.lane.b32.xlu0 %v256, %s261
    %v263 = vpop.permute.xlu0 %262
    %v264 = vlaneseq
    %v265 = vshrl.u32 %v264, 7
    %v266 = vsub.s32 6, %v265
    %v267 = vrot.slane %v94, %v266
    %269 = vbcast.lane.b32.xlu0 %v267, 256
    %v270 = vpop.permute.xlu0 %269
    %s272 = sor.u32 256, 8
    %273 = vbcast.lane.b32.xlu0 %v267, %s272
    %v274 = vpop.permute.xlu0 %273
    %v275 = vlaneseq
    %v276 = vshrl.u32 %v275, 7
    %v277 = vsub.s32 7, %v276
    %v278 = vrot.slane %v94, %v277
    %280 = vbcast.lane.b32.xlu0 %v278, 256
    %v281 = vpop.permute.xlu0 %280
    %s283 = sor.u32 256, 8
    %284 = vbcast.lane.b32.xlu0 %v278, %s283
    %v285 = vpop.permute.xlu0 %284
    %v286 = vlaneseq
    %v287 = vshrl.u32 %v286, 7
    %v288 = vsub.s32 0, %v287
    %v289 = vrot.slane %v95, %v288
    %291 = vbcast.lane.b32.xlu0 %v289, 256
    %v292 = vpop.permute.xlu0 %291
    %s294 = sor.u32 256, 8
    %295 = vbcast.lane.b32.xlu0 %v289, %s294
    %v296 = vpop.permute.xlu0 %295
    %v297 = vlaneseq
    %v298 = vshrl.u32 %v297, 7
    %v299 = vsub.s32 1, %v298
    %v300 = vrot.slane %v95, %v299
    %302 = vbcast.lane.b32.xlu0 %v300, 256
    %v303 = vpop.permute.xlu0 %302
    %s305 = sor.u32 256, 8
    %306 = vbcast.lane.b32.xlu0 %v300, %s305
    %v307 = vpop.permute.xlu0 %306
    %v308 = vlaneseq
    %v309 = vshrl.u32 %v308, 7
    %v310 = vsub.s32 2, %v309
    %v311 = vrot.slane %v95, %v310
    %313 = vbcast.lane.b32.xlu0 %v311, 256
    %v314 = vpop.permute.xlu0 %313
    %s316 = sor.u32 256, 8
    %317 = vbcast.lane.b32.xlu0 %v311, %s316
    %v318 = vpop.permute.xlu0 %317
    %v319 = vlaneseq
    %v320 = vshrl.u32 %v319, 7
    %v321 = vsub.s32 3, %v320
    %v322 = vrot.slane %v95, %v321
    %324 = vbcast.lane.b32.xlu0 %v322, 256
    %v325 = vpop.permute.xlu0 %324
    %s327 = sor.u32 256, 8
    %328 = vbcast.lane.b32.xlu0 %v322, %s327
    %v329 = vpop.permute.xlu0 %328
    %v330 = vlaneseq
    %v331 = vshrl.u32 %v330, 7
    %v332 = vsub.s32 4, %v331
    %v333 = vrot.slane %v95, %v332
    %335 = vbcast.lane.b32.xlu0 %v333, 256
    %v336 = vpop.permute.xlu0 %335
    %s338 = sor.u32 256, 8
    %339 = vbcast.lane.b32.xlu0 %v333, %s338
    %v340 = vpop.permute.xlu0 %339
    %v341 = vlaneseq
    %v342 = vshrl.u32 %v341, 7
    %v343 = vsub.s32 5, %v342
    %v344 = vrot.slane %v95, %v343
    %346 = vbcast.lane.b32.xlu0 %v344, 256
    %v347 = vpop.permute.xlu0 %346
    %s349 = sor.u32 256, 8
    %350 = vbcast.lane.b32.xlu0 %v344, %s349
    %v351 = vpop.permute.xlu0 %350
    %v352 = vlaneseq
    %v353 = vshrl.u32 %v352, 7
    %v354 = vsub.s32 6, %v353
    %v355 = vrot.slane %v95, %v354
    %357 = vbcast.lane.b32.xlu0 %v355, 256
    %v358 = vpop.permute.xlu0 %357
    %s360 = sor.u32 256, 8
    %361 = vbcast.lane.b32.xlu0 %v355, %s360
    %v362 = vpop.permute.xlu0 %361
    %v363 = vlaneseq
    %v364 = vshrl.u32 %v363, 7
    %v365 = vsub.s32 7, %v364
    %v366 = vrot.slane %v95, %v365
    %368 = vbcast.lane.b32.xlu0 %v366, 256
    %v369 = vpop.permute.xlu0 %368
    %s371 = sor.u32 256, 8
    %372 = vbcast.lane.b32.xlu0 %v366, %s371
    %v373 = vpop.permute.xlu0 %372
    %v374 = vlaneseq
    %v375 = vshrl.u32 %v374, 7
    %v376 = vsub.s32 0, %v375
    %v377 = vrot.slane %v96, %v376
    %379 = vbcast.lane.b32.xlu0 %v377, 256
    %v380 = vpop.permute.xlu0 %379
    %s382 = sor.u32 256, 8
    %383 = vbcast.lane.b32.xlu0 %v377, %s382
    %v384 = vpop.permute.xlu0 %383
    %v385 = vlaneseq
    %v386 = vshrl.u32 %v385, 7
    %v387 = vsub.s32 1, %v386
    %v388 = vrot.slane %v96, %v387
    %390 = vbcast.lane.b32.xlu0 %v388, 256
    %v391 = vpop.permute.xlu0 %390
    %s393 = sor.u32 256, 8
    %394 = vbcast.lane.b32.xlu0 %v388, %s393
    %v395 = vpop.permute.xlu0 %394
    %v396 = vlaneseq
    %v397 = vshrl.u32 %v396, 7
    %v398 = vsub.s32 2, %v397
    %v399 = vrot.slane %v96, %v398
    %401 = vbcast.lane.b32.xlu0 %v399, 256
    %v402 = vpop.permute.xlu0 %401
    %s404 = sor.u32 256, 8
    %405 = vbcast.lane.b32.xlu0 %v399, %s404
    %v406 = vpop.permute.xlu0 %405
    %v407 = vlaneseq
    %v408 = vshrl.u32 %v407, 7
    %v409 = vsub.s32 3, %v408
    %v410 = vrot.slane %v96, %v409
    %412 = vbcast.lane.b32.xlu0 %v410, 256
    %v413 = vpop.permute.xlu0 %412
    %s415 = sor.u32 256, 8
    %416 = vbcast.lane.b32.xlu0 %v410, %s415
    %v417 = vpop.permute.xlu0 %416
    %v418 = vlaneseq
    %v419 = vshrl.u32 %v418, 7
    %v420 = vsub.s32 0, %v419
    %v421 = vrot.slane %v109, %v420
    %v422 = vmul.f32 %v116, %v421
    %v423 = vmul.f32 %v120, %v421
    %v424 = vmul.f32 %v127, %v421
    %v425 = vmul.f32 %v131, %v421
    %v426 = vmul.f32 %v138, %v421
    %v427 = vmul.f32 %v142, %v421
    %v428 = vmul.f32 %v149, %v421
    %v429 = vmul.f32 %v153, %v421
    %v430 = vmul.f32 %v160, %v421
    %v431 = vmul.f32 %v164, %v421
    %v432 = vmul.f32 %v171, %v421
    %v433 = vmul.f32 %v175, %v421
    %v434 = vmul.f32 %v182, %v421
    %v435 = vmul.f32 %v186, %v421
    %v436 = vmul.f32 %v193, %v421
    %v437 = vmul.f32 %v197, %v421
    %v438 = vmul.f32 %v204, %v421
    %v439 = vmul.f32 %v208, %v421
    %v440 = vmul.f32 %v215, %v421
    %v441 = vmul.f32 %v219, %v421
    %v442 = vmul.f32 %v226, %v421
    %v443 = vmul.f32 %v230, %v421
    %v444 = vmul.f32 %v237, %v421
    %v445 = vmul.f32 %v241, %v421
    %v446 = vmul.f32 %v248, %v421
    %v447 = vmul.f32 %v252, %v421
    %v448 = vmul.f32 %v259, %v421
    %v449 = vmul.f32 %v263, %v421
    %v450 = vmul.f32 %v270, %v421
    %v451 = vmul.f32 %v274, %v421
    %v452 = vmul.f32 %v281, %v421
    %v453 = vmul.f32 %v285, %v421
    %v454 = vmul.f32 %v292, %v421
    %v455 = vmul.f32 %v296, %v421
    %v456 = vmul.f32 %v303, %v421
    %v457 = vmul.f32 %v307, %v421
    %v458 = vmul.f32 %v314, %v421
    %v459 = vmul.f32 %v318, %v421
    %v460 = vmul.f32 %v325, %v421
    %v461 = vmul.f32 %v329, %v421
    %v462 = vmul.f32 %v336, %v421
    %v463 = vmul.f32 %v340, %v421
    %v464 = vmul.f32 %v347, %v421
    %v465 = vmul.f32 %v351, %v421
    %v466 = vmul.f32 %v358, %v421
    %v467 = vmul.f32 %v362, %v421
    %v468 = vmul.f32 %v369, %v421
    %v469 = vmul.f32 %v373, %v421
    %v470 = vmul.f32 %v380, %v421
    %v471 = vmul.f32 %v384, %v421
    %v472 = vmul.f32 %v391, %v421
    %v473 = vmul.f32 %v395, %v421
    %v474 = vmul.f32 %v402, %v421
    %v475 = vmul.f32 %v406, %v421
    %v476 = vmul.f32 %v413, %v421
    %v477 = vmul.f32 %v417, %v421
    %v478 = vadd.f32 %v422, 0.0
    %v479 = vadd.f32 %v423, 0.0
    %v480 = vadd.f32 %v424, 0.0
    %v481 = vadd.f32 %v425, 0.0
    %v482 = vadd.f32 %v426, 0.0
    %v483 = vadd.f32 %v427, 0.0
    %v484 = vadd.f32 %v428, 0.0
    %v485 = vadd.f32 %v429, 0.0
    %v486 = vadd.f32 %v430, 0.0
    %v487 = vadd.f32 %v431, 0.0
    %v488 = vadd.f32 %v432, 0.0
    %v489 = vadd.f32 %v433, 0.0
    %v490 = vadd.f32 %v434, 0.0
    %v491 = vadd.f32 %v435, 0.0
    %v492 = vadd.f32 %v436, 0.0
    %v493 = vadd.f32 %v437, 0.0
    %v494 = vadd.f32 %v438, 0.0
    %v495 = vadd.f32 %v439, 0.0
    %v496 = vadd.f32 %v440, 0.0
    %v497 = vadd.f32 %v441, 0.0
    %v498 = vadd.f32 %v442, 0.0
    %v499 = vadd.f32 %v443, 0.0
    %v500 = vadd.f32 %v444, 0.0
    %v501 = vadd.f32 %v445, 0.0
    %v502 = vadd.f32 %v446, 0.0
    %v503 = vadd.f32 %v447, 0.0
    %v504 = vadd.f32 %v448, 0.0
    %v505 = vadd.f32 %v449, 0.0
    %v506 = vadd.f32 %v450, 0.0
    %v507 = vadd.f32 %v451, 0.0
    %v508 = vadd.f32 %v452, 0.0
    %v509 = vadd.f32 %v453, 0.0
    %v510 = vadd.f32 %v454, 0.0
    %v511 = vadd.f32 %v455, 0.0
    %v512 = vadd.f32 %v456, 0.0
    %v513 = vadd.f32 %v457, 0.0
    %v514 = vadd.f32 %v458, 0.0
    %v515 = vadd.f32 %v459, 0.0
    %v516 = vadd.f32 %v460, 0.0
    %v517 = vadd.f32 %v461, 0.0
    %v518 = vadd.f32 %v462, 0.0
    %v519 = vadd.f32 %v463, 0.0
    %v520 = vadd.f32 %v464, 0.0
    %v521 = vadd.f32 %v465, 0.0
    %v522 = vadd.f32 %v466, 0.0
    %v523 = vadd.f32 %v467, 0.0
    %v524 = vadd.f32 %v468, 0.0
    %v525 = vadd.f32 %v469, 0.0
    %v526 = vadd.f32 %v470, 0.0
    %v527 = vadd.f32 %v471, 0.0
    %v528 = vadd.f32 %v472, 0.0
    %v529 = vadd.f32 %v473, 0.0
    %v530 = vadd.f32 %v474, 0.0
    %v531 = vadd.f32 %v475, 0.0
    %v532 = vadd.f32 %v476, 0.0
    %v533 = vadd.f32 %v477, 0.0
    %v534 = vlaneseq
    %v535 = vshrl.u32 %v534, 7
    %v536 = vsub.s32 4, %v535
    %v537 = vrot.slane %v96, %v536
    %539 = vbcast.lane.b32.xlu0 %v537, 256
    %v540 = vpop.permute.xlu0 %539
    %s542 = sor.u32 256, 8
    %543 = vbcast.lane.b32.xlu0 %v537, %s542
    %v544 = vpop.permute.xlu0 %543
    %v545 = vlaneseq
    %v546 = vshrl.u32 %v545, 7
    %v547 = vsub.s32 1, %v546
    %v548 = vrot.slane %v109, %v547
    %v549 = vmul.f32 %v127, %v548
    %v550 = vmul.f32 %v131, %v548
    %v551 = vmul.f32 %v138, %v548
    %v552 = vmul.f32 %v142, %v548
    %v553 = vmul.f32 %v149, %v548
    %v554 = vmul.f32 %v153, %v548
    %v555 = vmul.f32 %v160, %v548
    %v556 = vmul.f32 %v164, %v548
    %v557 = vmul.f32 %v171, %v548
    %v558 = vmul.f32 %v175, %v548
    %v559 = vmul.f32 %v182, %v548
    %v560 = vmul.f32 %v186, %v548
    %v561 = vmul.f32 %v193, %v548
    %v562 = vmul.f32 %v197, %v548
    %v563 = vmul.f32 %v204, %v548
    %v564 = vmul.f32 %v208, %v548
    %v565 = vmul.f32 %v215, %v548
    %v566 = vmul.f32 %v219, %v548
    %v567 = vmul.f32 %v226, %v548
    %v568 = vmul.f32 %v230, %v548
    %v569 = vmul.f32 %v237, %v548
    %v570 = vmul.f32 %v241, %v548
    %v571 = vmul.f32 %v248, %v548
    %v572 = vmul.f32 %v252, %v548
    %v573 = vmul.f32 %v259, %v548
    %v574 = vmul.f32 %v263, %v548
    %v575 = vmul.f32 %v270, %v548
    %v576 = vmul.f32 %v274, %v548
    %v577 = vmul.f32 %v281, %v548
    %v578 = vmul.f32 %v285, %v548
    %v579 = vmul.f32 %v292, %v548
    %v580 = vmul.f32 %v296, %v548
    %v581 = vmul.f32 %v303, %v548
    %v582 = vmul.f32 %v307, %v548
    %v583 = vmul.f32 %v314, %v548
    %v584 = vmul.f32 %v318, %v548
    %v585 = vmul.f32 %v325, %v548
    %v586 = vmul.f32 %v329, %v548
    %v587 = vmul.f32 %v336, %v548
    %v588 = vmul.f32 %v340, %v548
    %v589 = vmul.f32 %v347, %v548
    %v590 = vmul.f32 %v351, %v548
    %v591 = vmul.f32 %v358, %v548
    %v592 = vmul.f32 %v362, %v548
    %v593 = vmul.f32 %v369, %v548
    %v594 = vmul.f32 %v373, %v548
    %v595 = vmul.f32 %v380, %v548
    %v596 = vmul.f32 %v384, %v548
    %v597 = vmul.f32 %v391, %v548
    %v598 = vmul.f32 %v395, %v548
    %v599 = vmul.f32 %v402, %v548
    %v600 = vmul.f32 %v406, %v548
    %v601 = vmul.f32 %v413, %v548
    %v602 = vmul.f32 %v417, %v548
    %v603 = vmul.f32 %v540, %v548
    %v604 = vmul.f32 %v544, %v548
    %v605 = vadd.f32 %v478, %v549
    %v606 = vadd.f32 %v479, %v550
    %v607 = vadd.f32 %v480, %v551
    %v608 = vadd.f32 %v481, %v552
    %v609 = vadd.f32 %v482, %v553
    %v610 = vadd.f32 %v483, %v554
    %v611 = vadd.f32 %v484, %v555
    %v612 = vadd.f32 %v485, %v556
    %v613 = vadd.f32 %v486, %v557
    %v614 = vadd.f32 %v487, %v558
    %v615 = vadd.f32 %v488, %v559
    %v616 = vadd.f32 %v489, %v560
    %v617 = vadd.f32 %v490, %v561
    %v618 = vadd.f32 %v491, %v562
    %v619 = vadd.f32 %v492, %v563
    %v620 = vadd.f32 %v493, %v564
    %v621 = vadd.f32 %v494, %v565
    %v622 = vadd.f32 %v495, %v566
    %v623 = vadd.f32 %v496, %v567
    %v624 = vadd.f32 %v497, %v568
    %v625 = vadd.f32 %v498, %v569
    %v626 = vadd.f32 %v499, %v570
    %v627 = vadd.f32 %v500, %v571
    %v628 = vadd.f32 %v501, %v572
    %v629 = vadd.f32 %v502, %v573
    %v630 = vadd.f32 %v503, %v574
    %v631 = vadd.f32 %v504, %v575
    %v632 = vadd.f32 %v505, %v576
    %v633 = vadd.f32 %v506, %v577
    %v634 = vadd.f32 %v507, %v578
    %v635 = vadd.f32 %v508, %v579
    %v636 = vadd.f32 %v509, %v580
    %v637 = vadd.f32 %v510, %v581
    %v638 = vadd.f32 %v511, %v582
    %v639 = vadd.f32 %v512, %v583
    %v640 = vadd.f32 %v513, %v584
    %v641 = vadd.f32 %v514, %v585
    %v642 = vadd.f32 %v515, %v586
    %v643 = vadd.f32 %v516, %v587
    %v644 = vadd.f32 %v517, %v588
    %v645 = vadd.f32 %v518, %v589
    %v646 = vadd.f32 %v519, %v590
    %v647 = vadd.f32 %v520, %v591
    %v648 = vadd.f32 %v521, %v592
    %v649 = vadd.f32 %v522, %v593
    %v650 = vadd.f32 %v523, %v594
    %v651 = vadd.f32 %v524, %v595
    %v652 = vadd.f32 %v525, %v596
    %v653 = vadd.f32 %v526, %v597
    %v654 = vadd.f32 %v527, %v598
    %v655 = vadd.f32 %v528, %v599
    %v656 = vadd.f32 %v529, %v600
    %v657 = vadd.f32 %v530, %v601
    %v658 = vadd.f32 %v531, %v602
    %v659 = vadd.f32 %v532, %v603
    %v660 = vadd.f32 %v533, %v604
    %v661 = vlaneseq
    %v662 = vshrl.u32 %v661, 7
    %v663 = vsub.s32 5, %v662
    %v664 = vrot.slane %v96, %v663
    %666 = vbcast.lane.b32.xlu0 %v664, 256
    %v667 = vpop.permute.xlu0 %666
    %s669 = sor.u32 256, 8
    %670 = vbcast.lane.b32.xlu0 %v664, %s669
    %v671 = vpop.permute.xlu0 %670
    %v672 = vlaneseq
    %v673 = vshrl.u32 %v672, 7
    %v674 = vsub.s32 2, %v673
    %v675 = vrot.slane %v109, %v674
    %v676 = vmul.f32 %v138, %v675
    %v677 = vmul.f32 %v142, %v675
    %v678 = vmul.f32 %v149, %v675
    %v679 = vmul.f32 %v153, %v675
    %v680 = vmul.f32 %v160, %v675
    %v681 = vmul.f32 %v164, %v675
    %v682 = vmul.f32 %v171, %v675
    %v683 = vmul.f32 %v175, %v675
    %v684 = vmul.f32 %v182, %v675
    %v685 = vmul.f32 %v186, %v675
    %v686 = vmul.f32 %v193, %v675
    %v687 = vmul.f32 %v197, %v675
    %v688 = vmul.f32 %v204, %v675
    %v689 = vmul.f32 %v208, %v675
    %v690 = vmul.f32 %v215, %v675
    %v691 = vmul.f32 %v219, %v675
    %v692 = vmul.f32 %v226, %v675
    %v693 = vmul.f32 %v230, %v675
    %v694 = vmul.f32 %v237, %v675
    %v695 = vmul.f32 %v241, %v675
    %v696 = vmul.f32 %v248, %v675
    %v697 = vmul.f32 %v252, %v675
    %v698 = vmul.f32 %v259, %v675
    %v699 = vmul.f32 %v263, %v675
    %v700 = vmul.f32 %v270, %v675
    %v701 = vmul.f32 %v274, %v675
    %v702 = vmul.f32 %v281, %v675
    %v703 = vmul.f32 %v285, %v675
    %v704 = vmul.f32 %v292, %v675
    %v705 = vmul.f32 %v296, %v675
    %v706 = vmul.f32 %v303, %v675
    %v707 = vmul.f32 %v307, %v675
    %v708 = vmul.f32 %v314, %v675
    %v709 = vmul.f32 %v318, %v675
    %v710 = vmul.f32 %v325, %v675
    %v711 = vmul.f32 %v329, %v675
    %v712 = vmul.f32 %v336, %v675
    %v713 = vmul.f32 %v340, %v675
    %v714 = vmul.f32 %v347, %v675
    %v715 = vmul.f32 %v351, %v675
    %v716 = vmul.f32 %v358, %v675
    %v717 = vmul.f32 %v362, %v675
    %v718 = vmul.f32 %v369, %v675
    %v719 = vmul.f32 %v373, %v675
    %v720 = vmul.f32 %v380, %v675
    %v721 = vmul.f32 %v384, %v675
    %v722 = vmul.f32 %v391, %v675
    %v723 = vmul.f32 %v395, %v675
    %v724 = vmul.f32 %v402, %v675
    %v725 = vmul.f32 %v406, %v675
    %v726 = vmul.f32 %v413, %v675
    %v727 = vmul.f32 %v417, %v675
    %v728 = vmul.f32 %v540, %v675
    %v729 = vmul.f32 %v544, %v675
    %v730 = vmul.f32 %v667, %v675
    %v731 = vmul.f32 %v671, %v675
    %v732 = vadd.f32 %v605, %v676
    %v733 = vadd.f32 %v606, %v677
    %v734 = vadd.f32 %v607, %v678
    %v735 = vadd.f32 %v608, %v679
    %v736 = vadd.f32 %v609, %v680
    %v737 = vadd.f32 %v610, %v681
    %v738 = vadd.f32 %v611, %v682
    %v739 = vadd.f32 %v612, %v683
    %v740 = vadd.f32 %v613, %v684
    %v741 = vadd.f32 %v614, %v685
    %v742 = vadd.f32 %v615, %v686
    %v743 = vadd.f32 %v616, %v687
    %v744 = vadd.f32 %v617, %v688
    %v745 = vadd.f32 %v618, %v689
    %v746 = vadd.f32 %v619, %v690
    %v747 = vadd.f32 %v620, %v691
    %v748 = vadd.f32 %v621, %v692
    %v749 = vadd.f32 %v622, %v693
    %v750 = vadd.f32 %v623, %v694
    %v751 = vadd.f32 %v624, %v695
    %v752 = vadd.f32 %v625, %v696
    %v753 = vadd.f32 %v626, %v697
    %v754 = vadd.f32 %v627, %v698
    %v755 = vadd.f32 %v628, %v699
    %v756 = vadd.f32 %v629, %v700
    %v757 = vadd.f32 %v630, %v701
    %v758 = vadd.f32 %v631, %v702
    %v759 = vadd.f32 %v632, %v703
    %v760 = vadd.f32 %v633, %v704
    %v761 = vadd.f32 %v634, %v705
    %v762 = vadd.f32 %v635, %v706
    %v763 = vadd.f32 %v636, %v707
    %v764 = vadd.f32 %v637, %v708
    %v765 = vadd.f32 %v638, %v709
    %v766 = vadd.f32 %v639, %v710
    %v767 = vadd.f32 %v640, %v711
    %v768 = vadd.f32 %v641, %v712
    %v769 = vadd.f32 %v642, %v713
    %v770 = vadd.f32 %v643, %v714
    %v771 = vadd.f32 %v644, %v715
    %v772 = vadd.f32 %v645, %v716
    %v773 = vadd.f32 %v646, %v717
    %v774 = vadd.f32 %v647, %v718
    %v775 = vadd.f32 %v648, %v719
    %v776 = vadd.f32 %v649, %v720
    %v777 = vadd.f32 %v650, %v721
    %v778 = vadd.f32 %v651, %v722
    %v779 = vadd.f32 %v652, %v723
    %v780 = vadd.f32 %v653, %v724
    %v781 = vadd.f32 %v654, %v725
    %v782 = vadd.f32 %v655, %v726
    %v783 = vadd.f32 %v656, %v727
    %v784 = vadd.f32 %v657, %v728
    %v785 = vadd.f32 %v658, %v729
    %v786 = vadd.f32 %v659, %v730
    %v787 = vadd.f32 %v660, %v731
    %v788 = vlaneseq
    %v789 = vshrl.u32 %v788, 7
    %v790 = vsub.s32 6, %v789
    %v791 = vrot.slane %v96, %v790
    %793 = vbcast.lane.b32.xlu0 %v791, 256
    %v794 = vpop.permute.xlu0 %793
    %s796 = sor.u32 256, 8
    %797 = vbcast.lane.b32.xlu0 %v791, %s796
    %v798 = vpop.permute.xlu0 %797
    %v799 = vlaneseq
    %v800 = vshrl.u32 %v799, 7
    %v801 = vsub.s32 3, %v800
    %v802 = vrot.slane %v109, %v801
    %v803 = vmul.f32 %v149, %v802
    %v804 = vmul.f32 %v153, %v802
    %v805 = vmul.f32 %v160, %v802
    %v806 = vmul.f32 %v164, %v802
    %v807 = vmul.f32 %v171, %v802
    %v808 = vmul.f32 %v175, %v802
    %v809 = vmul.f32 %v182, %v802
    %v810 = vmul.f32 %v186, %v802
    %v811 = vmul.f32 %v193, %v802
    %v812 = vmul.f32 %v197, %v802
    %v813 = vmul.f32 %v204, %v802
    %v814 = vmul.f32 %v208, %v802
    %v815 = vmul.f32 %v215, %v802
    %v816 = vmul.f32 %v219, %v802
    %v817 = vmul.f32 %v226, %v802
    %v818 = vmul.f32 %v230, %v802
    %v819 = vmul.f32 %v237, %v802
    %v820 = vmul.f32 %v241, %v802
    %v821 = vmul.f32 %v248, %v802
    %v822 = vmul.f32 %v252, %v802
    %v823 = vmul.f32 %v259, %v802
    %v824 = vmul.f32 %v263, %v802
    %v825 = vmul.f32 %v270, %v802
    %v826 = vmul.f32 %v274, %v802
    %v827 = vmul.f32 %v281, %v802
    %v828 = vmul.f32 %v285, %v802
    %v829 = vmul.f32 %v292, %v802
    %v830 = vmul.f32 %v296, %v802
    %v831 = vmul.f32 %v303, %v802
    %v832 = vmul.f32 %v307, %v802
    %v833 = vmul.f32 %v314, %v802
    %v834 = vmul.f32 %v318, %v802
    %v835 = vmul.f32 %v325, %v802
    %v836 = vmul.f32 %v329, %v802
    %v837 = vmul.f32 %v336, %v802
    %v838 = vmul.f32 %v340, %v802
    %v839 = vmul.f32 %v347, %v802
    %v840 = vmul.f32 %v351, %v802
    %v841 = vmul.f32 %v358, %v802
    %v842 = vmul.f32 %v362, %v802
    %v843 = vmul.f32 %v369, %v802
    %v844 = vmul.f32 %v373, %v802
    %v845 = vmul.f32 %v380, %v802
    %v846 = vmul.f32 %v384, %v802
    %v847 = vmul.f32 %v391, %v802
    %v848 = vmul.f32 %v395, %v802
    %v849 = vmul.f32 %v402, %v802
    %v850 = vmul.f32 %v406, %v802
    %v851 = vmul.f32 %v413, %v802
    %v852 = vmul.f32 %v417, %v802
    %v853 = vmul.f32 %v540, %v802
    %v854 = vmul.f32 %v544, %v802
    %v855 = vmul.f32 %v667, %v802
    %v856 = vmul.f32 %v671, %v802
    %v857 = vmul.f32 %v794, %v802
    %v858 = vmul.f32 %v798, %v802
    %v859 = vadd.f32 %v732, %v803
    %v860 = vadd.f32 %v733, %v804
    %v861 = vadd.f32 %v734, %v805
    %v862 = vadd.f32 %v735, %v806
    %v863 = vadd.f32 %v736, %v807
    %v864 = vadd.f32 %v737, %v808
    %v865 = vadd.f32 %v738, %v809
    %v866 = vadd.f32 %v739, %v810
    %v867 = vadd.f32 %v740, %v811
    %v868 = vadd.f32 %v741, %v812
    %v869 = vadd.f32 %v742, %v813
    %v870 = vadd.f32 %v743, %v814
    %v871 = vadd.f32 %v744, %v815
    %v872 = vadd.f32 %v745, %v816
    %v873 = vadd.f32 %v746, %v817
    %v874 = vadd.f32 %v747, %v818
    %v875 = vadd.f32 %v748, %v819
    %v876 = vadd.f32 %v749, %v820
    %v877 = vadd.f32 %v750, %v821
    %v878 = vadd.f32 %v751, %v822
    %v879 = vadd.f32 %v752, %v823
    %v880 = vadd.f32 %v753, %v824
    %v881 = vadd.f32 %v754, %v825
    %v882 = vadd.f32 %v755, %v826
    %v883 = vadd.f32 %v756, %v827
    %v884 = vadd.f32 %v757, %v828
    %v885 = vadd.f32 %v758, %v829
    %v886 = vadd.f32 %v759, %v830
    %v887 = vadd.f32 %v760, %v831
    %v888 = vadd.f32 %v761, %v832
    %v889 = vadd.f32 %v762, %v833
    %v890 = vadd.f32 %v763, %v834
    %v891 = vadd.f32 %v764, %v835
    %v892 = vadd.f32 %v765, %v836
    %v893 = vadd.f32 %v766, %v837
    %v894 = vadd.f32 %v767, %v838
    %v895 = vadd.f32 %v768, %v839
    %v896 = vadd.f32 %v769, %v840
    %v897 = vadd.f32 %v770, %v841
    %v898 = vadd.f32 %v771, %v842
    %v899 = vadd.f32 %v772, %v843
    %v900 = vadd.f32 %v773, %v844
    %v901 = vadd.f32 %v774, %v845
    %v902 = vadd.f32 %v775, %v846
    %v903 = vadd.f32 %v776, %v847
    %v904 = vadd.f32 %v777, %v848
    %v905 = vadd.f32 %v778, %v849
    %v906 = vadd.f32 %v779, %v850
    %v907 = vadd.f32 %v780, %v851
    %v908 = vadd.f32 %v781, %v852
    %v909 = vadd.f32 %v782, %v853
    %v910 = vadd.f32 %v783, %v854
    %v911 = vadd.f32 %v784, %v855
    %v912 = vadd.f32 %v785, %v856
    %v913 = vadd.f32 %v786, %v857
    %v914 = vadd.f32 %v787, %v858
    %v915 = vlaneseq
    %v916 = vshrl.u32 %v915, 7
    %v917 = vsub.s32 7, %v916
    %v918 = vrot.slane %v96, %v917
    %920 = vbcast.lane.b32.xlu0 %v918, 256
    %v921 = vpop.permute.xlu0 %920
    %s923 = sor.u32 256, 8
    %924 = vbcast.lane.b32.xlu0 %v918, %s923
    %v925 = vpop.permute.xlu0 %924
    %v926 = vlaneseq
    %v927 = vshrl.u32 %v926, 7
    %v928 = vsub.s32 4, %v927
    %v929 = vrot.slane %v109, %v928
    %v930 = vmul.f32 %v160, %v929
    %v931 = vmul.f32 %v164, %v929
    %v932 = vmul.f32 %v171, %v929
    %v933 = vmul.f32 %v175, %v929
    %v934 = vmul.f32 %v182, %v929
    %v935 = vmul.f32 %v186, %v929
    %v936 = vmul.f32 %v193, %v929
    %v937 = vmul.f32 %v197, %v929
    %v938 = vmul.f32 %v204, %v929
    %v939 = vmul.f32 %v208, %v929
    %v940 = vmul.f32 %v215, %v929
    %v941 = vmul.f32 %v219, %v929
    %v942 = vmul.f32 %v226, %v929
    %v943 = vmul.f32 %v230, %v929
    %v944 = vmul.f32 %v237, %v929
    %v945 = vmul.f32 %v241, %v929
    %v946 = vmul.f32 %v248, %v929
    %v947 = vmul.f32 %v252, %v929
    %v948 = vmul.f32 %v259, %v929
    %v949 = vmul.f32 %v263, %v929
    %v950 = vmul.f32 %v270, %v929
    %v951 = vmul.f32 %v274, %v929
    %v952 = vmul.f32 %v281, %v929
    %v953 = vmul.f32 %v285, %v929
    %v954 = vmul.f32 %v292, %v929
    %v955 = vmul.f32 %v296, %v929
    %v956 = vmul.f32 %v303, %v929
    %v957 = vmul.f32 %v307, %v929
    %v958 = vmul.f32 %v314, %v929
    %v959 = vmul.f32 %v318, %v929
    %v960 = vmul.f32 %v325, %v929
    %v961 = vmul.f32 %v329, %v929
    %v962 = vmul.f32 %v336, %v929
    %v963 = vmul.f32 %v340, %v929
    %v964 = vmul.f32 %v347, %v929
    %v965 = vmul.f32 %v351, %v929
    %v966 = vmul.f32 %v358, %v929
    %v967 = vmul.f32 %v362, %v929
    %v968 = vmul.f32 %v369, %v929
    %v969 = vmul.f32 %v373, %v929
    %v970 = vmul.f32 %v380, %v929
    %v971 = vmul.f32 %v384, %v929
    %v972 = vmul.f32 %v391, %v929
    %v973 = vmul.f32 %v395, %v929
    %v974 = vmul.f32 %v402, %v929
    %v975 = vmul.f32 %v406, %v929
    %v976 = vmul.f32 %v413, %v929
    %v977 = vmul.f32 %v417, %v929
    %v978 = vmul.f32 %v540, %v929
    %v979 = vmul.f32 %v544, %v929
    %v980 = vmul.f32 %v667, %v929
    %v981 = vmul.f32 %v671, %v929
    %v982 = vmul.f32 %v794, %v929
    %v983 = vmul.f32 %v798, %v929
    %v984 = vmul.f32 %v921, %v929
    %v985 = vmul.f32 %v925, %v929
    %v986 = vadd.f32 %v859, %v930
    %v987 = vadd.f32 %v860, %v931
    %v988 = vadd.f32 %v861, %v932
    %v989 = vadd.f32 %v862, %v933
    %v990 = vadd.f32 %v863, %v934
    %v991 = vadd.f32 %v864, %v935
    %v992 = vadd.f32 %v865, %v936
    %v993 = vadd.f32 %v866, %v937
    %v994 = vadd.f32 %v867, %v938
    %v995 = vadd.f32 %v868, %v939
    %v996 = vadd.f32 %v869, %v940
    %v997 = vadd.f32 %v870, %v941
    %v998 = vadd.f32 %v871, %v942
    %v999 = vadd.f32 %v872, %v943
    %v1000 = vadd.f32 %v873, %v944
    %v1001 = vadd.f32 %v874, %v945
    %v1002 = vadd.f32 %v875, %v946
    %v1003 = vadd.f32 %v876, %v947
    %v1004 = vadd.f32 %v877, %v948
    %v1005 = vadd.f32 %v878, %v949
    %v1006 = vadd.f32 %v879, %v950
    %v1007 = vadd.f32 %v880, %v951
    %v1008 = vadd.f32 %v881, %v952
    %v1009 = vadd.f32 %v882, %v953
    %v1010 = vadd.f32 %v883, %v954
    %v1011 = vadd.f32 %v884, %v955
    %v1012 = vadd.f32 %v885, %v956
    %v1013 = vadd.f32 %v886, %v957
    %v1014 = vadd.f32 %v887, %v958
    %v1015 = vadd.f32 %v888, %v959
    %v1016 = vadd.f32 %v889, %v960
    %v1017 = vadd.f32 %v890, %v961
    %v1018 = vadd.f32 %v891, %v962
    %v1019 = vadd.f32 %v892, %v963
    %v1020 = vadd.f32 %v893, %v964
    %v1021 = vadd.f32 %v894, %v965
    %v1022 = vadd.f32 %v895, %v966
    %v1023 = vadd.f32 %v896, %v967
    %v1024 = vadd.f32 %v897, %v968
    %v1025 = vadd.f32 %v898, %v969
    %v1026 = vadd.f32 %v899, %v970
    %v1027 = vadd.f32 %v900, %v971
    %v1028 = vadd.f32 %v901, %v972
    %v1029 = vadd.f32 %v902, %v973
    %v1030 = vadd.f32 %v903, %v974
    %v1031 = vadd.f32 %v904, %v975
    %v1032 = vadd.f32 %v905, %v976
    %v1033 = vadd.f32 %v906, %v977
    %v1034 = vadd.f32 %v907, %v978
    %v1035 = vadd.f32 %v908, %v979
    %v1036 = vadd.f32 %v909, %v980
    %v1037 = vadd.f32 %v910, %v981
    %v1038 = vadd.f32 %v911, %v982
    %v1039 = vadd.f32 %v912, %v983
    %v1040 = vadd.f32 %v913, %v984
    %v1041 = vadd.f32 %v914, %v985
    %v1042 = vld [vmem:[%s2] sm:$0x1]
    %v1044 = vlaneseq
    %v1045 = vshrl.u32 %v1044, 7
    %v1046 = vsub.s32 0, %v1045
    %v1047 = vrot.slane %v1042, %v1046
    %v1049 = vadd.f32 %v986, %v1047
    %v1050 = vadd.f32 %v987, %v1047
    %v1051 = vadd.f32 %v988, %v1047
    %v1052 = vadd.f32 %v989, %v1047
    %v1053 = vadd.f32 %v990, %v1047
    %v1054 = vadd.f32 %v991, %v1047
    %v1055 = vadd.f32 %v992, %v1047
    %v1056 = vadd.f32 %v993, %v1047
    %v1057 = vadd.f32 %v994, %v1047
    %v1058 = vadd.f32 %v995, %v1047
    %v1059 = vadd.f32 %v996, %v1047
    %v1060 = vadd.f32 %v997, %v1047
    %v1061 = vadd.f32 %v998, %v1047
    %v1062 = vadd.f32 %v999, %v1047
    %v1063 = vadd.f32 %v1000, %v1047
    %v1064 = vadd.f32 %v1001, %v1047
    %v1065 = vadd.f32 %v1002, %v1047
    %v1066 = vadd.f32 %v1003, %v1047
    %v1067 = vadd.f32 %v1004, %v1047
    %v1068 = vadd.f32 %v1005, %v1047
    %v1069 = vadd.f32 %v1006, %v1047
    %v1070 = vadd.f32 %v1007, %v1047
    %v1071 = vadd.f32 %v1008, %v1047
    %v1072 = vadd.f32 %v1009, %v1047
    %v1073 = vadd.f32 %v1010, %v1047
    %v1074 = vadd.f32 %v1011, %v1047
    %v1075 = vadd.f32 %v1012, %v1047
    %v1076 = vadd.f32 %v1013, %v1047
    %v1077 = vadd.f32 %v1014, %v1047
    %v1078 = vadd.f32 %v1015, %v1047
    %v1079 = vadd.f32 %v1016, %v1047
    %v1080 = vadd.f32 %v1017, %v1047
    %v1081 = vadd.f32 %v1018, %v1047
    %v1082 = vadd.f32 %v1019, %v1047
    %v1083 = vadd.f32 %v1020, %v1047
    %v1084 = vadd.f32 %v1021, %v1047
    %v1085 = vadd.f32 %v1022, %v1047
    %v1086 = vadd.f32 %v1023, %v1047
    %v1087 = vadd.f32 %v1024, %v1047
    %v1088 = vadd.f32 %v1025, %v1047
    %v1089 = vadd.f32 %v1026, %v1047
    %v1090 = vadd.f32 %v1027, %v1047
    %v1091 = vadd.f32 %v1028, %v1047
    %v1092 = vadd.f32 %v1029, %v1047
    %v1093 = vadd.f32 %v1030, %v1047
    %v1094 = vadd.f32 %v1031, %v1047
    %v1095 = vadd.f32 %v1032, %v1047
    %v1096 = vadd.f32 %v1033, %v1047
    %v1097 = vadd.f32 %v1034, %v1047
    %v1098 = vadd.f32 %v1035, %v1047
    %v1099 = vadd.f32 %v1036, %v1047
    %v1100 = vadd.f32 %v1037, %v1047
    %v1101 = vadd.f32 %v1038, %v1047
    %v1102 = vadd.f32 %v1039, %v1047
    %v1103 = vadd.f32 %v1040, %v1047
    %v1104 = vadd.f32 %v1041, %v1047
    %v1105 = vmax.f32 %v1049, 0.0
    %v1106 = vmax.f32 %v1050, 0.0
    %v1107 = vmax.f32 %v1051, 0.0
    %v1108 = vmax.f32 %v1052, 0.0
    %v1109 = vmax.f32 %v1053, 0.0
    %v1110 = vmax.f32 %v1054, 0.0
    %v1111 = vmax.f32 %v1055, 0.0
    %v1112 = vmax.f32 %v1056, 0.0
    %v1113 = vmax.f32 %v1057, 0.0
    %v1114 = vmax.f32 %v1058, 0.0
    %v1115 = vmax.f32 %v1059, 0.0
    %v1116 = vmax.f32 %v1060, 0.0
    %v1117 = vmax.f32 %v1061, 0.0
    %v1118 = vmax.f32 %v1062, 0.0
    %v1119 = vmax.f32 %v1063, 0.0
    %v1120 = vmax.f32 %v1064, 0.0
    %v1121 = vmax.f32 %v1065, 0.0
    %v1122 = vmax.f32 %v1066, 0.0
    %v1123 = vmax.f32 %v1067, 0.0
    %v1124 = vmax.f32 %v1068, 0.0
    %v1125 = vmax.f32 %v1069, 0.0
    %v1126 = vmax.f32 %v1070, 0.0
    %v1127 = vmax.f32 %v1071, 0.0
    %v1128 = vmax.f32 %v1072, 0.0
    %v1129 = vmax.f32 %v1073, 0.0
    %v1130 = vmax.f32 %v1074, 0.0
    %v1131 = vmax.f32 %v1075, 0.0
    %v1132 = vmax.f32 %v1076, 0.0
    %v1133 = vmax.f32 %v1077, 0.0
    %v1134 = vmax.f32 %v1078, 0.0
    %v1135 = vmax.f32 %v1079, 0.0
    %v1136 = vmax.f32 %v1080, 0.0
    %v1137 = vmax.f32 %v1081, 0.0
    %v1138 = vmax.f32 %v1082, 0.0
    %v1139 = vmax.f32 %v1083, 0.0
    %v1140 = vmax.f32 %v1084, 0.0
    %v1141 = vmax.f32 %v1085, 0.0
    %v1142 = vmax.f32 %v1086, 0.0
    %v1143 = vmax.f32 %v1087, 0.0
    %v1144 = vmax.f32 %v1088, 0.0
    %v1145 = vmax.f32 %v1089, 0.0
    %v1146 = vmax.f32 %v1090, 0.0
    %v1147 = vmax.f32 %v1091, 0.0
    %v1148 = vmax.f32 %v1092, 0.0
    %v1149 = vmax.f32 %v1093, 0.0
    %v1150 = vmax.f32 %v1094, 0.0
    %v1151 = vmax.f32 %v1095, 0.0
    %v1152 = vmax.f32 %v1096, 0.0
    %v1153 = vmax.f32 %v1097, 0.0
    %v1154 = vmax.f32 %v1098, 0.0
    %v1155 = vmax.f32 %v1099, 0.0
    %v1156 = vmax.f32 %v1100, 0.0
    %v1157 = vmax.f32 %v1101, 0.0
    %v1158 = vmax.f32 %v1102, 0.0
    %v1159 = vmax.f32 %v1103, 0.0
    %v1160 = vmax.f32 %v1104, 0.0
    %v1161 = vpack.c.bf16 %v1160, %v1159
    %v1162 = vld [vmem:[%s6] sm:$0xf]
    %v1163 = vld [vmem:[%s6 + $0x4] sm:$0xf]
    %v1164 = vld [vmem:[%s6 + $0x8] sm:$0xf]
    %v1165 = vld [vmem:[%s6 + $0xc] sm:$0xf]
    %v1166 = vld [vmem:[%s7] sm:$0x1]
    %v1168 = vlaneseq
    %v1169 = vshrl.u32 %v1168, 7
    %v1170 = vsub.s32 0, %v1169
    %v1171 = vrot.slane %v1166, %v1170
    %v1177 = vunpack.c.l.b16 %v1162
    %v1178 = vunpack.c.l.b16 %v1163
    %v1179 = vunpack.c.l.b16 %v1164
    %v1180 = vunpack.c.l.b16 %v1165
    %v1181 = vpack.c.b16 %v1178, %v1177
    %v1182 = vpack.c.b16 %v1180, %v1179
    %vm1185 = vcmask 261120
    %v1187 = vsel %vm1185, %v1161, 0
    %1189 = vmatprep.subr.bf16.mxu0 0
    %1190 = vmatpush1.bf16.msra.mxu0 %v1181
    %1191 = vmatprep.subr.bf16.mxu0 0
    %1192 = vmatpush1.bf16.msra.mxu0 %v1182
    %1193 = vmatprep.subr.bf16.mxu0 0
    %1194 = vmatpush1.bf16.msra.mxu0 0
    %1195 = vmatprep.subr.bf16.mxu0 0
    %1196 = vmatpush1.bf16.msra.mxu0 0
    %1197 = vmatprep.subr.bf16.mxu0 0
    %1198 = vmatpush1.bf16.msra.mxu0 0
    %1199 = vmatprep.subr.bf16.mxu0 0
    %1200 = vmatpush1.bf16.msra.mxu0 0
    %1201 = vmatprep.subr.bf16.mxu0 0
    %1202 = vmatpush1.bf16.msra.mxu0 0
    %1203 = vmatprep.subr.bf16.mxu0 0
    %1204 = vmatpush1.bf16.msra.mxu0 0
    %1205 = vmatprep.subr.bf16.mxu0 0
    %1206 = vmatpush1.bf16.msra.mxu0 0
    %1207 = vmatprep.subr.bf16.mxu0 0
    %1208 = vmatpush1.bf16.msra.mxu0 0
    %1209 = vmatprep.subr.bf16.mxu0 0
    %1210 = vmatpush1.bf16.msra.mxu0 0
    %1211 = vmatprep.subr.bf16.mxu0 0
    %1212 = vmatpush1.bf16.msra.mxu0 0
    %1213 = vmatprep.subr.bf16.mxu0 0
    %1214 = vmatpush1.bf16.msra.mxu0 0
    %1215 = vmatprep.subr.bf16.mxu0 0
    %1216 = vmatpush1.bf16.msra.mxu0 0
    %1217 = vmatprep.subr.bf16.mxu0 0
    %1218 = vmatpush1.bf16.msra.mxu0 0
    %1219 = vmatprep.subr.bf16.mxu0 0
    %1220 = vmatpush1.bf16.msra.mxu0 0
    %1221 = vmatprep.mubr.bf16.mxu0 0
    %1222 = vmatmul.mubr.bf16.gmra.mrb[0].mxu0 %v1187
    %v1223 = vpop.f32.mrb[0].mxu0
    %v1224 = vadd.f32 %v1171, %v1223
    %v1225 = vpop.f32.mrb[0].mxu0
    %v1226 = vpop.f32.mrb[0].mxu0
    %v1227 = vadd.f32 %v1171, %v1226
    %v1228 = vpop.f32.mrb[0].mxu0
    %1229 = vdwg.mxu0
    %v1230 = vtanh.pop %v1224
    %v1231 = vtanh.pop %v1227
    %v1232 = vmul.f32 %v1230, 0.5
    %v1233 = vmul.f32 %v1231, 0.5
    %v1234 = vadd.f32 %v1232, 0.5
    %v1235 = vadd.f32 %v1233, 0.5
    %1238 = vrot.lane.b32.xlu0 %v1230, 80
    %v1239 = vpop.permute.xlu0 %1238
    %1240 = vrot.lane.b32.xlu0 %v1231, 80
    %v1241 = vpop.permute.xlu0 %1240
    %v1244 = vmul.f32 %v1234, %v1239
    %v1245 = vmul.f32 %v1235, %v1241
    %v1246 = vtanh.pop %v1244
    %v1247 = vtanh.pop %v1245
    %1250 = vrot.lane.b32.xlu0 %v1246, 32
    %v1251 = vpop.permute.xlu0 %1250
    %1252 = vrot.lane.b32.xlu0 %v1247, 32
    %v1253 = vpop.permute.xlu0 %1252
    %v1256 = vmul.f32 %v1234, %v1251
    %v1257 = vmul.f32 %v1235, %v1253
    %v1258 = vpack.c.bf16 %v1106, %v1105
    %v1259 = vpack.c.bf16 %v1108, %v1107
    %v1260 = vpack.c.bf16 %v1110, %v1109
    %v1261 = vpack.c.bf16 %v1112, %v1111
    %v1262 = vpack.c.bf16 %v1114, %v1113
    %v1263 = vpack.c.bf16 %v1116, %v1115
    %v1264 = vpack.c.bf16 %v1118, %v1117
    %v1265 = vpack.c.bf16 %v1120, %v1119
    %v1266 = vpack.c.bf16 %v1122, %v1121
    %v1267 = vpack.c.bf16 %v1124, %v1123
    %v1268 = vpack.c.bf16 %v1126, %v1125
    %v1269 = vpack.c.bf16 %v1128, %v1127
    %v1270 = vpack.c.bf16 %v1130, %v1129
    %v1271 = vpack.c.bf16 %v1132, %v1131
    %v1272 = vpack.c.bf16 %v1134, %v1133
    %v1273 = vpack.c.bf16 %v1136, %v1135
    %v1274 = vpack.c.bf16 %v1138, %v1137
    %v1275 = vpack.c.bf16 %v1140, %v1139
    %v1276 = vpack.c.bf16 %v1142, %v1141
    %v1277 = vpack.c.bf16 %v1144, %v1143
    %v1278 = vpack.c.bf16 %v1146, %v1145
    %v1279 = vpack.c.bf16 %v1148, %v1147
    %v1280 = vpack.c.bf16 %v1150, %v1149
    %v1281 = vpack.c.bf16 %v1152, %v1151
    %v1282 = vpack.c.bf16 %v1154, %v1153
    %v1283 = vpack.c.bf16 %v1156, %v1155
    %v1284 = vpack.c.bf16 %v1158, %v1157
    %v1285 = vld [vmem:[#allocation5] sm:$0xf]
    %v1286 = vld [vmem:[#allocation5 + $0x4] sm:$0xf]
    %v1287 = vld [vmem:[#allocation5 + $0x8] sm:$0xf]
    %v1288 = vld [vmem:[#allocation5 + $0xc] sm:$0xf]
    %v1289 = vld [vmem:[%s5] sm:$0x1]
    %v1291 = vlaneseq
    %v1292 = vshrl.u32 %v1291, 7
    %v1293 = vsub.s32 0, %v1292
    %v1294 = vrot.slane %v1289, %v1293
    %v1300 = vunpack.c.l.b16 %v1285
    %v1301 = vunpack.c.l.b16 %v1286
    %v1302 = vunpack.c.l.b16 %v1287
    %v1303 = vunpack.c.l.b16 %v1288
    %v1304 = vpack.c.b16 %v1301, %v1300
    %v1305 = vpack.c.b16 %v1303, %v1302
    %v1309 = vsel %vm1185, %v1258, 0
    %v1312 = vsel %vm1185, %v1259, 0
    %v1315 = vsel %vm1185, %v1260, 0
    %v1318 = vsel %vm1185, %v1261, 0
    %v1321 = vsel %vm1185, %v1262, 0
    %v1324 = vsel %vm1185, %v1263, 0
    %v1327 = vsel %vm1185, %v1264, 0
    %v1330 = vsel %vm1185, %v1265, 0
    %v1333 = vsel %vm1185, %v1266, 0
    %v1336 = vsel %vm1185, %v1267, 0
    %v1339 = vsel %vm1185, %v1268, 0
    %v1342 = vsel %vm1185, %v1269, 0
    %v1345 = vsel %vm1185, %v1270, 0
    %v1348 = vsel %vm1185, %v1271, 0
    %v1351 = vsel %vm1185, %v1272, 0
    %v1354 = vsel %vm1185, %v1273, 0
    %v1357 = vsel %vm1185, %v1274, 0
    %v1360 = vsel %vm1185, %v1275, 0
    %v1363 = vsel %vm1185, %v1276, 0
    %v1366 = vsel %vm1185, %v1277, 0
    %v1369 = vsel %vm1185, %v1278, 0
    %v1372 = vsel %vm1185, %v1279, 0
    %v1375 = vsel %vm1185, %v1280, 0
    %v1378 = vsel %vm1185, %v1281, 0
    %v1381 = vsel %vm1185, %v1282, 0
    %v1384 = vsel %vm1185, %v1283, 0
    %v1387 = vsel %vm1185, %v1284, 0
    %1389 = vmatprep.subr.bf16.mxu0 0
    %1390 = vmatpush1.bf16.msra.mxu0 %v1304
    %1391 = vmatprep.subr.bf16.mxu0 0
    %1392 = vmatpush1.bf16.msra.mxu0 %v1305
    %1393 = vmatprep.subr.bf16.mxu0 0
    %1394 = vmatpush1.bf16.msra.mxu0 0
    %1395 = vmatprep.subr.bf16.mxu0 0
    %1396 = vmatpush1.bf16.msra.mxu0 0
    %1397 = vmatprep.subr.bf16.mxu0 0
    %1398 = vmatpush1.bf16.msra.mxu0 0
    %1399 = vmatprep.subr.bf16.mxu0 0
    %1400 = vmatpush1.bf16.msra.mxu0 0
    %1401 = vmatprep.subr.bf16.mxu0 0
    %1402 = vmatpush1.bf16.msra.mxu0 0
    %1403 = vmatprep.subr.bf16.mxu0 0
    %1404 = vmatpush1.bf16.msra.mxu0 0
    %1405 = vmatprep.subr.bf16.mxu0 0
    %1406 = vmatpush1.bf16.msra.mxu0 0
    %1407 = vmatprep.subr.bf16.mxu0 0
    %1408 = vmatpush1.bf16.msra.mxu0 0
    %1409 = vmatprep.subr.bf16.mxu0 0
    %1410 = vmatpush1.bf16.msra.mxu0 0
    %1411 = vmatprep.subr.bf16.mxu0 0
    %1412 = vmatpush1.bf16.msra.mxu0 0
    %1413 = vmatprep.subr.bf16.mxu0 0
    %1414 = vmatpush1.bf16.msra.mxu0 0
    %1415 = vmatprep.subr.bf16.mxu0 0
    %1416 = vmatpush1.bf16.msra.mxu0 0
    %1417 = vmatprep.subr.bf16.mxu0 0
    %1418 = vmatpush1.bf16.msra.mxu0 0
    %1419 = vmatprep.subr.bf16.mxu0 0
    %1420 = vmatpush1.bf16.msra.mxu0 0
    %1421 = vmatprep.mubr.bf16.mxu0 0
    %1422 = vmatmul.mubr.bf16.gmra.mrb[0].mxu0 %v1309
    %v1423 = vpop.f32.mrb[0].mxu0
    %v1424 = vadd.f32 %v1294, %v1423
    %v1425 = vpop.f32.mrb[0].mxu0
    %v1426 = vpop.f32.mrb[0].mxu0
    %v1427 = vadd.f32 %v1294, %v1426
    %v1428 = vpop.f32.mrb[0].mxu0
    %1429 = vmatprep.mubr.bf16.mxu0 0
    %1430 = vmatmul.mubr.bf16.gmra.mrb[0].mxu0 %v1312
    %v1431 = vpop.f32.mrb[0].mxu0
    %v1432 = vadd.f32 %v1294, %v1431
    %v1433 = vpop.f32.mrb[0].mxu0
    %v1434 = vpop.f32.mrb[0].mxu0
    %v1435 = vadd.f32 %v1294, %v1434
    %v1436 = vpop.f32.mrb[0].mxu0
    %1437 = vmatprep.mubr.bf16.mxu0 0
    %1438 = vmatmul.mubr.bf16.gmra.mrb[0].mxu0 %v1315
    %v1439 = vpop.f32.mrb[0].mxu0
    %v1440 = vadd.f32 %v1294, %v1439
    %v1441 = vpop.f32.mrb[0].mxu0
    %v1442 = vpop.f32.mrb[0].mxu0
    %v1443 = vadd.f32 %v1294, %v1442
    %v1444 = vpop.f32.mrb[0].mxu0
    %1445 = vmatprep.mubr.bf16.mxu0 0
    %1446 = vmatmul.mubr.bf16.gmra.mrb[0].mxu0 %v1318
    %v1447 = vpop.f32.mrb[0].mxu0
    %v1448 = vadd.f32 %v1294, %v1447
    %v1449 = vpop.f32.mrb[0].mxu0
    %v1450 = vpop.f32.mrb[0].mxu0
    %v1451 = vadd.f32 %v1294, %v1450
    %v1452 = vpop.f32.mrb[0].mxu0
    %1453 = vmatprep.mubr.bf16.mxu0 0
    %1454 = vmatmul.mubr.bf16.gmra.mrb[0].mxu0 %v1321
    %v1455 = vpop.f32.mrb[0].mxu0
    %v1456 = vadd.f32 %v1294, %v1455
    %v1457 = vpop.f32.mrb[0].mxu0
    %v1458 = vpop.f32.mrb[0].mxu0
    %v1459 = vadd.f32 %v1294, %v1458
    %v1460 = vpop.f32.mrb[0].mxu0
    %1461 = vmatprep.mubr.bf16.mxu0 0
    %1462 = vmatmul.mubr.bf16.gmra.mrb[0].mxu0 %v1324
    %v1463 = vpop.f32.mrb[0].mxu0
    %v1464 = vadd.f32 %v1294, %v1463
    %v1465 = vpop.f32.mrb[0].mxu0
    %v1466 = vpop.f32.mrb[0].mxu0
    %v1467 = vadd.f32 %v1294, %v1466
    %v1468 = vpop.f32.mrb[0].mxu0
    %1469 = vmatprep.mubr.bf16.mxu0 0
    %1470 = vmatmul.mubr.bf16.gmra.mrb[0].mxu0 %v1327
    %v1471 = vpop.f32.mrb[0].mxu0
    %v1472 = vadd.f32 %v1294, %v1471
    %v1473 = vpop.f32.mrb[0].mxu0
    %v1474 = vpop.f32.mrb[0].mxu0
    %v1475 = vadd.f32 %v1294, %v1474
    %v1476 = vpop.f32.mrb[0].mxu0
    %1477 = vmatprep.mubr.bf16.mxu0 0
    %1478 = vmatmul.mubr.bf16.gmra.mrb[0].mxu0 %v1330
    %v1479 = vpop.f32.mrb[0].mxu0
    %v1480 = vadd.f32 %v1294, %v1479
    %v1481 = vpop.f32.mrb[0].mxu0
    %v1482 = vpop.f32.mrb[0].mxu0
    %v1483 = vadd.f32 %v1294, %v1482
    %v1484 = vpop.f32.mrb[0].mxu0
    %1485 = vmatprep.mubr.bf16.mxu0 0
    %1486 = vmatmul.mubr.bf16.gmra.mrb[0].mxu0 %v1333
    %v1487 = vpop.f32.mrb[0].mxu0
    %v1488 = vadd.f32 %v1294, %v1487
    %v1489 = vpop.f32.mrb[0].mxu0
    %v1490 = vpop.f32.mrb[0].mxu0
    %v1491 = vadd.f32 %v1294, %v1490
    %v1492 = vpop.f32.mrb[0].mxu0
    %1493 = vmatprep.mubr.bf16.mxu0 0
    %1494 = vmatmul.mubr.bf16.gmra.mrb[0].mxu0 %v1336
    %v1495 = vpop.f32.mrb[0].mxu0
    %v1496 = vadd.f32 %v1294, %v1495
    %v1497 = vpop.f32.mrb[0].mxu0
    %v1498 = vpop.f32.mrb[0].mxu0
    %v1499 = vadd.f32 %v1294, %v1498
    %v1500 = vpop.f32.mrb[0].mxu0
    %1501 = vmatprep.mubr.bf16.mxu0 0
    %1502 = vmatmul.mubr.bf16.gmra.mrb[0].mxu0 %v1339
    %v1503 = vpop.f32.mrb[0].mxu0
    %v1504 = vadd.f32 %v1294, %v1503
    %v1505 = vpop.f32.mrb[0].mxu0
    %v1506 = vpop.f32.mrb[0].mxu0
    %v1507 = vadd.f32 %v1294, %v1506
    %v1508 = vpop.f32.mrb[0].mxu0
    %1509 = vmatprep.mubr.bf16.mxu0 0
    %1510 = vmatmul.mubr.bf16.gmra.mrb[0].mxu0 %v1342
    %v1511 = vpop.f32.mrb[0].mxu0
    %v1512 = vadd.f32 %v1294, %v1511
    %v1513 = vpop.f32.mrb[0].mxu0
    %v1514 = vpop.f32.mrb[0].mxu0
    %v1515 = vadd.f32 %v1294, %v1514
    %v1516 = vpop.f32.mrb[0].mxu0
    %1517 = vmatprep.mubr.bf16.mxu0 0
    %1518 = vmatmul.mubr.bf16.gmra.mrb[0].mxu0 %v1345
    %v1519 = vpop.f32.mrb[0].mxu0
    %v1520 = vadd.f32 %v1294, %v1519
    %v1521 = vpop.f32.mrb[0].mxu0
    %v1522 = vpop.f32.mrb[0].mxu0
    %v1523 = vadd.f32 %v1294, %v1522
    %v1524 = vpop.f32.mrb[0].mxu0
    %1525 = vmatprep.mubr.bf16.mxu0 0
    %1526 = vmatmul.mubr.bf16.gmra.mrb[0].mxu0 %v1348
    %v1527 = vpop.f32.mrb[0].mxu0
    %v1528 = vadd.f32 %v1294, %v1527
    %v1529 = vpop.f32.mrb[0].mxu0
    %v1530 = vpop.f32.mrb[0].mxu0
    %v1531 = vadd.f32 %v1294, %v1530
    %v1532 = vpop.f32.mrb[0].mxu0
    %1533 = vmatprep.mubr.bf16.mxu0 0
    %1534 = vmatmul.mubr.bf16.gmra.mrb[0].mxu0 %v1351
    %v1535 = vpop.f32.mrb[0].mxu0
    %v1536 = vadd.f32 %v1294, %v1535
    %v1537 = vpop.f32.mrb[0].mxu0
    %v1538 = vpop.f32.mrb[0].mxu0
    %v1539 = vadd.f32 %v1294, %v1538
    %v1540 = vpop.f32.mrb[0].mxu0
    %1541 = vmatprep.mubr.bf16.mxu0 0
    %1542 = vmatmul.mubr.bf16.gmra.mrb[0].mxu0 %v1354
    %v1543 = vpop.f32.mrb[0].mxu0
    %v1544 = vadd.f32 %v1294, %v1543
    %v1545 = vpop.f32.mrb[0].mxu0
    %v1546 = vpop.f32.mrb[0].mxu0
    %v1547 = vadd.f32 %v1294, %v1546
    %v1548 = vpop.f32.mrb[0].mxu0
    %1549 = vmatprep.mubr.bf16.mxu0 0
    %1550 = vmatmul.mubr.bf16.gmra.mrb[0].mxu0 %v1357
    %v1551 = vpop.f32.mrb[0].mxu0
    %v1552 = vadd.f32 %v1294, %v1551
    %v1553 = vpop.f32.mrb[0].mxu0
    %v1554 = vpop.f32.mrb[0].mxu0
    %v1555 = vadd.f32 %v1294, %v1554
    %v1556 = vpop.f32.mrb[0].mxu0
    %1557 = vmatprep.mubr.bf16.mxu0 0
    %1558 = vmatmul.mubr.bf16.gmra.mrb[0].mxu0 %v1360
    %v1559 = vpop.f32.mrb[0].mxu0
    %v1560 = vadd.f32 %v1294, %v1559
    %v1561 = vpop.f32.mrb[0].mxu0
    %v1562 = vpop.f32.mrb[0].mxu0
    %v1563 = vadd.f32 %v1294, %v1562
    %v1564 = vpop.f32.mrb[0].mxu0
    %1565 = vmatprep.mubr.bf16.mxu0 0
    %1566 = vmatmul.mubr.bf16.gmra.mrb[0].mxu0 %v1363
    %v1567 = vpop.f32.mrb[0].mxu0
    %v1568 = vadd.f32 %v1294, %v1567
    %v1569 = vpop.f32.mrb[0].mxu0
    %v1570 = vpop.f32.mrb[0].mxu0
    %v1571 = vadd.f32 %v1294, %v1570
    %v1572 = vpop.f32.mrb[0].mxu0
    %1573 = vmatprep.mubr.bf16.mxu0 0
    %1574 = vmatmul.mubr.bf16.gmra.mrb[0].mxu0 %v1366
    %v1575 = vpop.f32.mrb[0].mxu0
    %v1576 = vadd.f32 %v1294, %v1575
    %v1577 = vpop.f32.mrb[0].mxu0
    %v1578 = vpop.f32.mrb[0].mxu0
    %v1579 = vadd.f32 %v1294, %v1578
    %v1580 = vpop.f32.mrb[0].mxu0
    %1581 = vmatprep.mubr.bf16.mxu0 0
    %1582 = vmatmul.mubr.bf16.gmra.mrb[0].mxu0 %v1369
    %v1583 = vpop.f32.mrb[0].mxu0
    %v1584 = vadd.f32 %v1294, %v1583
    %v1585 = vpop.f32.mrb[0].mxu0
    %v1586 = vpop.f32.mrb[0].mxu0
    %v1587 = vadd.f32 %v1294, %v1586
    %v1588 = vpop.f32.mrb[0].mxu0
    %1589 = vmatprep.mubr.bf16.mxu0 0
    %1590 = vmatmul.mubr.bf16.gmra.mrb[0].mxu0 %v1372
    %v1591 = vpop.f32.mrb[0].mxu0
    %v1592 = vadd.f32 %v1294, %v1591
    %v1593 = vpop.f32.mrb[0].mxu0
    %v1594 = vpop.f32.mrb[0].mxu0
    %v1595 = vadd.f32 %v1294, %v1594
    %v1596 = vpop.f32.mrb[0].mxu0
    %1597 = vmatprep.mubr.bf16.mxu0 0
    %1598 = vmatmul.mubr.bf16.gmra.mrb[0].mxu0 %v1375
    %v1599 = vpop.f32.mrb[0].mxu0
    %v1600 = vadd.f32 %v1294, %v1599
    %v1601 = vpop.f32.mrb[0].mxu0
    %v1602 = vpop.f32.mrb[0].mxu0
    %v1603 = vadd.f32 %v1294, %v1602
    %v1604 = vpop.f32.mrb[0].mxu0
    %1605 = vmatprep.mubr.bf16.mxu0 0
    %1606 = vmatmul.mubr.bf16.gmra.mrb[0].mxu0 %v1378
    %v1607 = vpop.f32.mrb[0].mxu0
    %v1608 = vadd.f32 %v1294, %v1607
    %v1609 = vpop.f32.mrb[0].mxu0
    %v1610 = vpop.f32.mrb[0].mxu0
    %v1611 = vadd.f32 %v1294, %v1610
    %v1612 = vpop.f32.mrb[0].mxu0
    %1613 = vmatprep.mubr.bf16.mxu0 0
    %1614 = vmatmul.mubr.bf16.gmra.mrb[0].mxu0 %v1381
    %v1615 = vpop.f32.mrb[0].mxu0
    %v1616 = vadd.f32 %v1294, %v1615
    %v1617 = vpop.f32.mrb[0].mxu0
    %v1618 = vpop.f32.mrb[0].mxu0
    %v1619 = vadd.f32 %v1294, %v1618
    %v1620 = vpop.f32.mrb[0].mxu0
    %1621 = vmatprep.mubr.bf16.mxu0 0
    %1622 = vmatmul.mubr.bf16.gmra.mrb[0].mxu0 %v1384
    %v1623 = vpop.f32.mrb[0].mxu0
    %v1624 = vadd.f32 %v1294, %v1623
    %v1625 = vpop.f32.mrb[0].mxu0
    %v1626 = vpop.f32.mrb[0].mxu0
    %v1627 = vadd.f32 %v1294, %v1626
    %v1628 = vpop.f32.mrb[0].mxu0
    %1629 = vmatprep.mubr.bf16.mxu0 0
    %1630 = vmatmul.mubr.bf16.gmra.mrb[0].mxu0 %v1387
    %v1631 = vpop.f32.mrb[0].mxu0
    %v1632 = vadd.f32 %v1294, %v1631
    %v1633 = vpop.f32.mrb[0].mxu0
    %v1634 = vpop.f32.mrb[0].mxu0
    %v1635 = vadd.f32 %v1294, %v1634
    %v1636 = vpop.f32.mrb[0].mxu0
    %1637 = vmatprep.mubr.bf16.mxu0 0
    %1638 = vmatmul.mubr.bf16.gmra.mrb[0].mxu0 %v1187
    %v1639 = vpop.f32.mrb[0].mxu0
    %v1640 = vadd.f32 %v1294, %v1639
    %v1641 = vpop.f32.mrb[0].mxu0
    %v1642 = vpop.f32.mrb[0].mxu0
    %v1643 = vadd.f32 %v1294, %v1642
    %v1644 = vpop.f32.mrb[0].mxu0
    %1645 = vdwg.mxu0
    %vm1646 = vcmask 523264
    %1647 = vst.msk [vmem:[#allocation2] sm:$0xff] %vm1646, %v1424
    %1648 = vst.msk [vmem:[#allocation2 + $0x8] sm:$0xff] %vm1646, %v1427
    %1649 = vst.msk [vmem:[#allocation2 + $0x10] sm:$0xff] %vm1646, %v1432
    %1650 = vst.msk [vmem:[#allocation2 + $0x18] sm:$0xff] %vm1646, %v1435
    %1651 = vst.msk [vmem:[#allocation2 + $0x20] sm:$0xff] %vm1646, %v1440
    %1652 = vst.msk [vmem:[#allocation2 + $0x28] sm:$0xff] %vm1646, %v1443
    %1653 = vst.msk [vmem:[#allocation2 + $0x30] sm:$0xff] %vm1646, %v1448
    %1654 = vst.msk [vmem:[#allocation2 + $0x38] sm:$0xff] %vm1646, %v1451
    %1655 = vst.msk [vmem:[#allocation2 + $0x40] sm:$0xff] %vm1646, %v1456
    %1656 = vst.msk [vmem:[#allocation2 + $0x48] sm:$0xff] %vm1646, %v1459
    %1657 = vst.msk [vmem:[#allocation2 + $0x50] sm:$0xff] %vm1646, %v1464
    %1658 = vst.msk [vmem:[#allocation2 + $0x58] sm:$0xff] %vm1646, %v1467
    %1659 = vst.msk [vmem:[#allocation2 + $0x60] sm:$0xff] %vm1646, %v1472
    %1660 = vst.msk [vmem:[#allocation2 + $0x68] sm:$0xff] %vm1646, %v1475
    %1661 = vst.msk [vmem:[#allocation2 + $0x70] sm:$0xff] %vm1646, %v1480
    %1662 = vst.msk [vmem:[#allocation2 + $0x78] sm:$0xff] %vm1646, %v1483
    %1663 = vst.msk [vmem:[#allocation2 + $0x80] sm:$0xff] %vm1646, %v1488
    %1664 = vst.msk [vmem:[#allocation2 + $0x88] sm:$0xff] %vm1646, %v1491
    %1665 = vst.msk [vmem:[#allocation2 + $0x90] sm:$0xff] %vm1646, %v1496
    %1666 = vst.msk [vmem:[#allocation2 + $0x98] sm:$0xff] %vm1646, %v1499
    %1667 = vst.msk [vmem:[#allocation2 + $0xa0] sm:$0xff] %vm1646, %v1504
    %1668 = vst.msk [vmem:[#allocation2 + $0xa8] sm:$0xff] %vm1646, %v1507
    %1669 = vst.msk [vmem:[#allocation2 + $0xb0] sm:$0xff] %vm1646, %v1512
    %1670 = vst.msk [vmem:[#allocation2 + $0xb8] sm:$0xff] %vm1646, %v1515
    %1671 = vst.msk [vmem:[#allocation2 + $0xc0] sm:$0xff] %vm1646, %v1520
    %1672 = vst.msk [vmem:[#allocation2 + $0xc8] sm:$0xff] %vm1646, %v1523
    %1673 = vst.msk [vmem:[#allocation2 + $0xd0] sm:$0xff] %vm1646, %v1528
    %1674 = vst.msk [vmem:[#allocation2 + $0xd8] sm:$0xff] %vm1646, %v1531
    %1675 = vst.msk [vmem:[#allocation2 + $0xe0] sm:$0xff] %vm1646, %v1536
    %1676 = vst.msk [vmem:[#allocation2 + $0xe8] sm:$0xff] %vm1646, %v1539
    %1677 = vst.msk [vmem:[#allocation2 + $0xf0] sm:$0xff] %vm1646, %v1544
    %1678 = vst.msk [vmem:[#allocation2 + $0xf8] sm:$0xff] %vm1646, %v1547
    %1679 = vst.msk [vmem:[#allocation2 + $0x100] sm:$0xff] %vm1646, %v1552
    %1680 = vst.msk [vmem:[#allocation2 + $0x108] sm:$0xff] %vm1646, %v1555
    %1681 = vst.msk [vmem:[#allocation2 + $0x110] sm:$0xff] %vm1646, %v1560
    %1682 = vst.msk [vmem:[#allocation2 + $0x118] sm:$0xff] %vm1646, %v1563
    %1683 = vst.msk [vmem:[#allocation2 + $0x120] sm:$0xff] %vm1646, %v1568
    %1684 = vst.msk [vmem:[#allocation2 + $0x128] sm:$0xff] %vm1646, %v1571
    %1685 = vst.msk [vmem:[#allocation2 + $0x130] sm:$0xff] %vm1646, %v1576
    %1686 = vst.msk [vmem:[#allocation2 + $0x138] sm:$0xff] %vm1646, %v1579
    %1687 = vst.msk [vmem:[#allocation2 + $0x140] sm:$0xff] %vm1646, %v1584
    %1688 = vst.msk [vmem:[#allocation2 + $0x148] sm:$0xff] %vm1646, %v1587
    %1689 = vst.msk [vmem:[#allocation2 + $0x150] sm:$0xff] %vm1646, %v1592
    %1690 = vst.msk [vmem:[#allocation2 + $0x158] sm:$0xff] %vm1646, %v1595
    %1691 = vst.msk [vmem:[#allocation2 + $0x160] sm:$0xff] %vm1646, %v1600
    %1692 = vst.msk [vmem:[#allocation2 + $0x168] sm:$0xff] %vm1646, %v1603
    %1693 = vst.msk [vmem:[#allocation2 + $0x170] sm:$0xff] %vm1646, %v1608
    %1694 = vst.msk [vmem:[#allocation2 + $0x178] sm:$0xff] %vm1646, %v1611
    %1695 = vst.msk [vmem:[#allocation2 + $0x180] sm:$0xff] %vm1646, %v1616
    %1696 = vst.msk [vmem:[#allocation2 + $0x188] sm:$0xff] %vm1646, %v1619
    %1697 = vst.msk [vmem:[#allocation2 + $0x190] sm:$0xff] %vm1646, %v1624
    %1698 = vst.msk [vmem:[#allocation2 + $0x198] sm:$0xff] %vm1646, %v1627
    %1699 = vst.msk [vmem:[#allocation2 + $0x1a0] sm:$0xff] %vm1646, %v1632
    %1700 = vst.msk [vmem:[#allocation2 + $0x1a8] sm:$0xff] %vm1646, %v1635
    %1701 = vst.msk [vmem:[#allocation2 + $0x1b0] sm:$0xff] %vm1646, %v1640
    %1702 = vst.msk [vmem:[#allocation2 + $0x1b8] sm:$0xff] %vm1646, %v1643
    %v1703 = vld [vmem:[#allocation7] sm:$0xf]
    %v1704 = vld [vmem:[#allocation7 + $0x4] sm:$0xf]
    %v1705 = vld [vmem:[#allocation2] sm:$0xff]
    %v1706 = vld [vmem:[#allocation2 + $0x8] sm:$0xff]
    %v1709 = vunpack.c.l.b16 %v1703
    %v1710 = vunpack.c.l.b16 %v1704
    %v1711 = vpack.c.b16 %v1710, %v1709
    %vm1713 = vcmask 130048
    %v1715 = vsel %vm1713, 0, 0
    %1717 = vmatprep.subr.bf16.mxu0 0
    %1718 = vmatpush1.bf16.msra.mxu0 %v1711
    %1719 = vmatprep.subr.bf16.mxu0 0
    %1720 = vmatpush1.bf16.msra.mxu0 0
    %1721 = vmatprep.subr.bf16.mxu0 0
    %1722 = vmatpush1.bf16.msra.mxu0 0
    %1723 = vmatprep.subr.bf16.mxu0 0
    %1724 = vmatpush1.bf16.msra.mxu0 0
    %1725 = vmatprep.subr.bf16.mxu0 0
    %1726 = vmatpush1.bf16.msra.mxu0 0
    %1727 = vmatprep.subr.bf16.mxu0 0
    %1728 = vmatpush1.bf16.msra.mxu0 0
    %1729 = vmatprep.subr.bf16.mxu0 0
    %1730 = vmatpush1.bf16.msra.mxu0 0
    %1731 = vmatprep.subr.bf16.mxu0 0
    %1732 = vmatpush1.bf16.msra.mxu0 0
    %1733 = vmatprep.subr.bf16.mxu0 0
    %1734 = vmatpush1.bf16.msra.mxu0 0
    %1735 = vmatprep.subr.bf16.mxu0 0
    %1736 = vmatpush1.bf16.msra.mxu0 0
    %1737 = vmatprep.subr.bf16.mxu0 0
    %1738 = vmatpush1.bf16.msra.mxu0 0
    %1739 = vmatprep.subr.bf16.mxu0 0
    %1740 = vmatpush1.bf16.msra.mxu0 0
    %1741 = vmatprep.subr.bf16.mxu0 0
    %1742 = vmatpush1.bf16.msra.mxu0 0
    %1743 = vmatprep.subr.bf16.mxu0 0
    %1744 = vmatpush1.bf16.msra.mxu0 0
    %1745 = vmatprep.subr.bf16.mxu0 0
    %1746 = vmatpush1.bf16.msra.mxu0 0
    %1747 = vmatprep.subr.bf16.mxu0 0
    %1748 = vmatpush1.bf16.msra.mxu0 0
    %1749 = vmatprep.mubr.bf16.mxu0 0
    %1750 = vmatmul.mubr.bf16.gmra.mrb[0].mxu0 %v1715
    %v1751 = vpop.f32.mrb[0].mxu0
    %v1752 = vadd.f32 0.0, %v1751
    %v1753 = vpop.f32.mrb[0].mxu0
    %v1754 = vpop.f32.mrb[0].mxu0
    %v1755 = vadd.f32 0.0, %v1754
    %v1756 = vpop.f32.mrb[0].mxu0
    %1757 = vdwg.mxu0
    %v1758 = vadd.f32 %v1705, %v1752
    %v1759 = vadd.f32 %v1706, %v1755
    %v1760 = vtanh.pop %v1758
    %v1761 = vtanh.pop %v1759
    %v1762 = vmul.f32 %v1760, 0.5
    %v1763 = vmul.f32 %v1761, 0.5
    %v1764 = vadd.f32 %v1762, 0.5
    %v1765 = vadd.f32 %v1763, 0.5
    %v1766 = vmul.f32 %v1764, 0.0
    %v1767 = vmul.f32 %v1765, 0.0
    %1770 = vrot.lane.b32.xlu0 %v1760, 80
    %v1771 = vpop.permute.xlu0 %1770
    %1772 = vrot.lane.b32.xlu0 %v1761, 80
    %v1773 = vpop.permute.xlu0 %1772
    %v1776 = vmul.f32 %v1764, %v1771
    %v1777 = vmul.f32 %v1765, %v1773
    %1780 = vrot.lane.b32.xlu0 %v1776, 16
    %v1781 = vpop.permute.xlu0 %1780
    %1782 = vrot.lane.b32.xlu0 %v1777, 16
    %v1783 = vpop.permute.xlu0 %1782
    %v1786 = vadd.f32 %v1766, %v1781
    %v1787 = vadd.f32 %v1767, %v1783
    %v1788 = vtanh.pop %v1786
    %v1789 = vtanh.pop %v1787
    %1792 = vrot.lane.b32.xlu0 %v1788, 16
    %v1793 = vpop.permute.xlu0 %1792
    %1794 = vrot.lane.b32.xlu0 %v1789, 16
    %v1795 = vpop.permute.xlu0 %1794
    %v1798 = vmul.f32 %v1764, %v1793
    %v1799 = vmul.f32 %v1765, %v1795
    %s1800 = scalar_lea.vmem [#allocation2], 16
    %v1801 = vld [vmem:[%s1800] sm:$0xff]
    %v1802 = vld [vmem:[%s1800 + $0x8] sm:$0xff]
    %v1803 = vpack.c.bf16 %v1799, %v1798
    %1805 = vrot.lane.b32.xlu0 %v1803, 96
    %v1806 = vpop.permute.xlu0 %1805
    %v1808 = vsel %vm1713, %v1806, 0
    %1810 = vmatprep.subr.bf16.mxu0 0
    %1811 = vmatpush1.bf16.msra.mxu0 %v1711
    %1812 = vmatprep.subr.bf16.mxu0 0
    %1813 = vmatpush1.bf16.msra.mxu0 0
    %1814 = vmatprep.subr.bf16.mxu0 0
    %1815 = vmatpush1.bf16.msra.mxu0 0
    %1816 = vmatprep.subr.bf16.mxu0 0
    %1817 = vmatpush1.bf16.msra.mxu0 0
    %1818 = vmatprep.subr.bf16.mxu0 0
    %1819 = vmatpush1.bf16.msra.mxu0 0
    %1820 = vmatprep.subr.bf16.mxu0 0
    %1821 = vmatpush1.bf16.msra.mxu0 0
    %1822 = vmatprep.subr.bf16.mxu0 0
    %1823 = vmatpush1.bf16.msra.mxu0 0
    %1824 = vmatprep.subr.bf16.mxu0 0
    %1825 = vmatpush1.bf16.msra.mxu0 0
    %1826 = vmatprep.subr.bf16.mxu0 0
    %1827 = vmatpush1.bf16.msra.mxu0 0
    %1828 = vmatprep.subr.bf16.mxu0 0
    %1829 = vmatpush1.bf16.msra.mxu0 0
    %1830 = vmatprep.subr.bf16.mxu0 0
    %1831 = vmatpush1.bf16.msra.mxu0 0
    %1832 = vmatprep.subr.bf16.mxu0 0
    %1833 = vmatpush1.bf16.msra.mxu0 0
    %1834 = vmatprep.subr.bf16.mxu0 0
    %1835 = vmatpush1.bf16.msra.mxu0 0
    %1836 = vmatprep.subr.bf16.mxu0 0
    %1837 = vmatpush1.bf16.msra.mxu0 0
    %1838 = vmatprep.subr.bf16.mxu0 0
    %1839 = vmatpush1.bf16.msra.mxu0 0
    %1840 = vmatprep.subr.bf16.mxu0 0
    %1841 = vmatpush1.bf16.msra.mxu0 0
    %1842 = vmatprep.mubr.bf16.mxu0 0
    %1843 = vmatmul.mubr.bf16.gmra.mrb[0].mxu0 %v1808
    %v1844 = vpop.f32.mrb[0].mxu0
    %v1845 = vadd.f32 0.0, %v1844
    %v1846 = vpop.f32.mrb[0].mxu0
    %v1847 = vpop.f32.mrb[0].mxu0
    %v1848 = vadd.f32 0.0, %v1847
    %v1849 = vpop.f32.mrb[0].mxu0
    %1850 = vdwg.mxu0
    %v1851 = vadd.f32 %v1801, %v1845
    %v1852 = vadd.f32 %v1802, %v1848
    %v1853 = vtanh.pop %v1851
    %v1854 = vtanh.pop %v1852
    %v1855 = vmul.f32 %v1853, 0.5
    %v1856 = vmul.f32 %v1854, 0.5
    %v1857 = vadd.f32 %v1855, 0.5
    %v1858 = vadd.f32 %v1856, 0.5
    %v1859 = vmul.f32 %v1857, %v1786
    %v1860 = vmul.f32 %v1858, %v1787
    %1863 = vrot.lane.b32.xlu0 %v1853, 80
    %v1864 = vpop.permute.xlu0 %1863
    %1865 = vrot.lane.b32.xlu0 %v1854, 80
    %v1866 = vpop.permute.xlu0 %1865
    %v1869 = vmul.f32 %v1857, %v1864
    %v1870 = vmul.f32 %v1858, %v1866
    %1873 = vrot.lane.b32.xlu0 %v1869, 16
    %v1874 = vpop.permute.xlu0 %1873
    %1875 = vrot.lane.b32.xlu0 %v1870, 16
    %v1876 = vpop.permute.xlu0 %1875
    %v1879 = vadd.f32 %v1859, %v1874
    %v1880 = vadd.f32 %v1860, %v1876
    %v1881 = vtanh.pop %v1879
    %v1882 = vtanh.pop %v1880
    %1885 = vrot.lane.b32.xlu0 %v1881, 16
    %v1886 = vpop.permute.xlu0 %1885
    %1887 = vrot.lane.b32.xlu0 %v1882, 16
    %v1888 = vpop.permute.xlu0 %1887
    %v1891 = vmul.f32 %v1857, %v1886
    %v1892 = vmul.f32 %v1858, %v1888
    %s1893 = scalar_lea.vmem [#allocation2], 32
    %v1894 = vld [vmem:[%s1893] sm:$0xff]
    %v1895 = vld [vmem:[%s1893 + $0x8] sm:$0xff]
    %v1896 = vpack.c.bf16 %v1892, %v1891
    %1898 = vrot.lane.b32.xlu0 %v1896, 96
    %v1899 = vpop.permute.xlu0 %1898
    %v1901 = vsel %vm1713, %v1899, 0
    %1903 = vmatprep.subr.bf16.mxu0 0
    %1904 = vmatpush1.bf16.msra.mxu0 %v1711
    %1905 = vmatprep.subr.bf16.mxu0 0
    %1906 = vmatpush1.bf16.msra.mxu0 0
    %1907 = vmatprep.subr.bf16.mxu0 0
    %1908 = vmatpush1.bf16.msra.mxu0 0
    %1909 = vmatprep.subr.bf16.mxu0 0
    %1910 = vmatpush1.bf16.msra.mxu0 0
    %1911 = vmatprep.subr.bf16.mxu0 0
    %1912 = vmatpush1.bf16.msra.mxu0 0
    %1913 = vmatprep.subr.bf16.mxu0 0
    %1914 = vmatpush1.bf16.msra.mxu0 0
    %1915 = vmatprep.subr.bf16.mxu0 0
    %1916 = vmatpush1.bf16.msra.mxu0 0
    %1917 = vmatprep.subr.bf16.mxu0 0
    %1918 = vmatpush1.bf16.msra.mxu0 0
    %1919 = vmatprep.subr.bf16.mxu0 0
    %1920 = vmatpush1.bf16.msra.mxu0 0
    %1921 = vmatprep.subr.bf16.mxu0 0
    %1922 = vmatpush1.bf16.msra.mxu0 0
    %1923 = vmatprep.subr.bf16.mxu0 0
    %1924 = vmatpush1.bf16.msra.mxu0 0
    %1925 = vmatprep.subr.bf16.mxu0 0
    %1926 = vmatpush1.bf16.msra.mxu0 0
    %1927 = vmatprep.subr.bf16.mxu0 0
    %1928 = vmatpush1.bf16.msra.mxu0 0
    %1929 = vmatprep.subr.bf16.mxu0 0
    %1930 = vmatpush1.bf16.msra.mxu0 0
    %1931 = vmatprep.subr.bf16.mxu0 0
    %1932 = vmatpush1.bf16.msra.mxu0 0
    %1933 = vmatprep.subr.bf16.mxu0 0
    %1934 = vmatpush1.bf16.msra.mxu0 0
    %1935 = vmatprep.mubr.bf16.mxu0 0
    %1936 = vmatmul.mubr.bf16.gmra.mrb[0].mxu0 %v1901
    %v1937 = vpop.f32.mrb[0].mxu0
    %v1938 = vadd.f32 0.0, %v1937
    %v1939 = vpop.f32.mrb[0].mxu0
    %v1940 = vpop.f32.mrb[0].mxu0
    %v1941 = vadd.f32 0.0, %v1940
    %v1942 = vpop.f32.mrb[0].mxu0
    %1943 = vdwg.mxu0
    %v1944 = vadd.f32 %v1894, %v1938
    %v1945 = vadd.f32 %v1895, %v1941
    %v1946 = vtanh.pop %v1944
    %v1947 = vtanh.pop %v1945
    %v1948 = vmul.f32 %v1946, 0.5
    %v1949 = vmul.f32 %v1947, 0.5
    %v1950 = vadd.f32 %v1948, 0.5
    %v1951 = vadd.f32 %v1949, 0.5
    %v1952 = vmul.f32 %v1950, %v1879
    %v1953 = vmul.f32 %v1951, %v1880
    %1956 = vrot.lane.b32.xlu0 %v1946, 80
    %v1957 = vpop.permute.xlu0 %1956
    %1958 = vrot.lane.b32.xlu0 %v1947, 80
    %v1959 = vpop.permute.xlu0 %1958
    %v1962 = vmul.f32 %v1950, %v1957
    %v1963 = vmul.f32 %v1951, %v1959
    %1966 = vrot.lane.b32.xlu0 %v1962, 16
    %v1967 = vpop.permute.xlu0 %1966
    %1968 = vrot.lane.b32.xlu0 %v1963, 16
    %v1969 = vpop.permute.xlu0 %1968
    %v1972 = vadd.f32 %v1952, %v1967
    %v1973 = vadd.f32 %v1953, %v1969
    %v1974 = vtanh.pop %v1972
    %v1975 = vtanh.pop %v1973
    %1978 = vrot.lane.b32.xlu0 %v1974, 16
    %v1979 = vpop.permute.xlu0 %1978
    %1980 = vrot.lane.b32.xlu0 %v1975, 16
    %v1981 = vpop.permute.xlu0 %1980
    %v1984 = vmul.f32 %v1950, %v1979
    %v1985 = vmul.f32 %v1951, %v1981
    %s1986 = scalar_lea.vmem [#allocation2], 48
    %v1987 = vld [vmem:[%s1986] sm:$0xff]
    %v1988 = vld [vmem:[%s1986 + $0x8] sm:$0xff]
    %v1989 = vpack.c.bf16 %v1985, %v1984
    %1991 = vrot.lane.b32.xlu0 %v1989, 96
    %v1992 = vpop.permute.xlu0 %1991
    %v1994 = vsel %vm1713, %v1992, 0
    %1996 = vmatprep.subr.bf16.mxu0 0
    %1997 = vmatpush1.bf16.msra.mxu0 %v1711
    %1998 = vmatprep.subr.bf16.mxu0 0
    %1999 = vmatpush1.bf16.msra.mxu0 0
    %2000 = vmatprep.subr.bf16.mxu0 0
    %2001 = vmatpush1.bf16.msra.mxu0 0
    %2002 = vmatprep.subr.bf16.mxu0 0
    %2003 = vmatpush1.bf16.msra.mxu0 0
    %2004 = vmatprep.subr.bf16.mxu0 0
    %2005 = vmatpush1.bf16.msra.mxu0 0
    %2006 = vmatprep.subr.bf16.mxu0 0
    %2007 = vmatpush1.bf16.msra.mxu0 0
    %2008 = vmatprep.subr.bf16.mxu0 0
    %2009 = vmatpush1.bf16.msra.mxu0 0
    %2010 = vmatprep.subr.bf16.mxu0 0
    %2011 = vmatpush1.bf16.msra.mxu0 0
    %2012 = vmatprep.subr.bf16.mxu0 0
    %2013 = vmatpush1.bf16.msra.mxu0 0
    %2014 = vmatprep.subr.bf16.mxu0 0
    %2015 = vmatpush1.bf16.msra.mxu0 0
    %2016 = vmatprep.subr.bf16.mxu0 0
    %2017 = vmatpush1.bf16.msra.mxu0 0
    %2018 = vmatprep.subr.bf16.mxu0 0
    %2019 = vmatpush1.bf16.msra.mxu0 0
    %2020 = vmatprep.subr.bf16.mxu0 0
    %2021 = vmatpush1.bf16.msra.mxu0 0
    %2022 = vmatprep.subr.bf16.mxu0 0
    %2023 = vmatpush1.bf16.msra.mxu0 0
    %2024 = vmatprep.subr.bf16.mxu0 0
    %2025 = vmatpush1.bf16.msra.mxu0 0
    %2026 = vmatprep.subr.bf16.mxu0 0
    %2027 = vmatpush1.bf16.msra.mxu0 0
    %2028 = vmatprep.mubr.bf16.mxu0 0
    %2029 = vmatmul.mubr.bf16.gmra.mrb[0].mxu0 %v1994
    %v2030 = vpop.f32.mrb[0].mxu0
    %v2031 = vadd.f32 0.0, %v2030
    %v2032 = vpop.f32.mrb[0].mxu0
    %v2033 = vpop.f32.mrb[0].mxu0
    %v2034 = vadd.f32 0.0, %v2033
    %v2035 = vpop.f32.mrb[0].mxu0
    %2036 = vdwg.mxu0
    %v2037 = vadd.f32 %v1987, %v2031
    %v2038 = vadd.f32 %v1988, %v2034
    %v2039 = vtanh.pop %v2037
    %v2040 = vtanh.pop %v2038
    %v2041 = vmul.f32 %v2039, 0.5
    %v2042 = vmul.f32 %v2040, 0.5
    %v2043 = vadd.f32 %v2041, 0.5
    %v2044 = vadd.f32 %v2042, 0.5
    %v2045 = vmul.f32 %v2043, %v1972
    %v2046 = vmul.f32 %v2044, %v1973
    %2049 = vrot.lane.b32.xlu0 %v2039, 80
    %v2050 = vpop.permute.xlu0 %2049
    %2051 = vrot.lane.b32.xlu0 %v2040, 80
    %v2052 = vpop.permute.xlu0 %2051
    %v2055 = vmul.f32 %v2043, %v2050
    %v2056 = vmul.f32 %v2044, %v2052
    %2059 = vrot.lane.b32.xlu0 %v2055, 16
    %v2060 = vpop.permute.xlu0 %2059
    %2061 = vrot.lane.b32.xlu0 %v2056, 16
    %v2062 = vpop.permute.xlu0 %2061
    %v2065 = vadd.f32 %v2045, %v2060
    %v2066 = vadd.f32 %v2046, %v2062
    %v2067 = vtanh.pop %v2065
    %v2068 = vtanh.pop %v2066
    %2071 = vrot.lane.b32.xlu0 %v2067, 16
    %v2072 = vpop.permute.xlu0 %2071
    %2073 = vrot.lane.b32.xlu0 %v2068, 16
    %v2074 = vpop.permute.xlu0 %2073
    %v2077 = vmul.f32 %v2043, %v2072
    %v2078 = vmul.f32 %v2044, %v2074
    %s2079 = scalar_lea.vmem [#allocation2], 64
    %v2080 = vld [vmem:[%s2079] sm:$0xff]
    %v2081 = vld [vmem:[%s2079 + $0x8] sm:$0xff]
    %v2082 = vpack.c.bf16 %v2078, %v2077
    %2084 = vrot.lane.b32.xlu0 %v2082, 96
    %v2085 = vpop.permute.xlu0 %2084
    %v2087 = vsel %vm1713, %v2085, 0
    %2089 = vmatprep.subr.bf16.mxu0 0
    %2090 = vmatpush1.bf16.msra.mxu0 %v1711
    %2091 = vmatprep.subr.bf16.mxu0 0
    %2092 = vmatpush1.bf16.msra.mxu0 0
    %2093 = vmatprep.subr.bf16.mxu0 0
    %2094 = vmatpush1.bf16.msra.mxu0 0
    %2095 = vmatprep.subr.bf16.mxu0 0
    %2096 = vmatpush1.bf16.msra.mxu0 0
    %2097 = vmatprep.subr.bf16.mxu0 0
    %2098 = vmatpush1.bf16.msra.mxu0 0
    %2099 = vmatprep.subr.bf16.mxu0 0
    %2100 = vmatpush1.bf16.msra.mxu0 0
    %2101 = vmatprep.subr.bf16.mxu0 0
    %2102 = vmatpush1.bf16.msra.mxu0 0
    %2103 = vmatprep.subr.bf16.mxu0 0
    %2104 = vmatpush1.bf16.msra.mxu0 0
    %2105 = vmatprep.subr.bf16.mxu0 0
    %2106 = vmatpush1.bf16.msra.mxu0 0
    %2107 = vmatprep.subr.bf16.mxu0 0
    %2108 = vmatpush1.bf16.msra.mxu0 0
    %2109 = vmatprep.subr.bf16.mxu0 0
    %2110 = vmatpush1.bf16.msra.mxu0 0
    %2111 = vmatprep.subr.bf16.mxu0 0
    %2112 = vmatpush1.bf16.msra.mxu0 0
    %2113 = vmatprep.subr.bf16.mxu0 0
    %2114 = vmatpush1.bf16.msra.mxu0 0
    %2115 = vmatprep.subr.bf16.mxu0 0
    %2116 = vmatpush1.bf16.msra.mxu0 0
    %2117 = vmatprep.subr.bf16.mxu0 0
    %2118 = vmatpush1.bf16.msra.mxu0 0
    %2119 = vmatprep.subr.bf16.mxu0 0
    %2120 = vmatpush1.bf16.msra.mxu0 0
    %2121 = vmatprep.mubr.bf16.mxu0 0
    %2122 = vmatmul.mubr.bf16.gmra.mrb[0].mxu0 %v2087
    %v2123 = vpop.f32.mrb[0].mxu0
    %v2124 = vadd.f32 0.0, %v2123
    %v2125 = vpop.f32.mrb[0].mxu0
    %v2126 = vpop.f32.mrb[0].mxu0
    %v2127 = vadd.f32 0.0, %v2126
    %v2128 = vpop.f32.mrb[0].mxu0
    %2129 = vdwg.mxu0
    %v2130 = vadd.f32 %v2080, %v2124
    %v2131 = vadd.f32 %v2081, %v2127
    %v2132 = vtanh.pop %v2130
    %v2133 = vtanh.pop %v2131
    %v2134 = vmul.f32 %v2132, 0.5
    %v2135 = vmul.f32 %v2133, 0.5
    %v2136 = vadd.f32 %v2134, 0.5
    %v2137 = vadd.f32 %v2135, 0.5
    %v2138 = vmul.f32 %v2136, %v2065
    %v2139 = vmul.f32 %v2137, %v2066
    %2142 = vrot.lane.b32.xlu0 %v2132, 80
    %v2143 = vpop.permute.xlu0 %2142
    %2144 = vrot.lane.b32.xlu0 %v2133, 80
    %v2145 = vpop.permute.xlu0 %2144
    %v2148 = vmul.f32 %v2136, %v2143
    %v2149 = vmul.f32 %v2137, %v2145
    %2152 = vrot.lane.b32.xlu0 %v2148, 16
    %v2153 = vpop.permute.xlu0 %2152
    %2154 = vrot.lane.b32.xlu0 %v2149, 16
    %v2155 = vpop.permute.xlu0 %2154
    %v2158 = vadd.f32 %v2138, %v2153
    %v2159 = vadd.f32 %v2139, %v2155
    %v2160 = vtanh.pop %v2158
    %v2161 = vtanh.pop %v2159
    %2164 = vrot.lane.b32.xlu0 %v2160, 16
    %v2165 = vpop.permute.xlu0 %2164
    %2166 = vrot.lane.b32.xlu0 %v2161, 16
    %v2167 = vpop.permute.xlu0 %2166
    %v2170 = vmul.f32 %v2136, %v2165
    %v2171 = vmul.f32 %v2137, %v2167
    %s2172 = scalar_lea.vmem [#allocation2], 80
    %v2173 = vld [vmem:[%s2172] sm:$0xff]
    %v2174 = vld [vmem:[%s2172 + $0x8] sm:$0xff]
    %v2175 = vpack.c.bf16 %v2171, %v2170
    %2177 = vrot.lane.b32.xlu0 %v2175, 96
    %v2178 = vpop.permute.xlu0 %2177
    %v2180 = vsel %vm1713, %v2178, 0
    %2182 = vmatprep.subr.bf16.mxu0 0
    %2183 = vmatpush1.bf16.msra.mxu0 %v1711
    %2184 = vmatprep.subr.bf16.mxu0 0
    %2185 = vmatpush1.bf16.msra.mxu0 0
    %2186 = vmatprep.subr.bf16.mxu0 0
    %2187 = vmatpush1.bf16.msra.mxu0 0
    %2188 = vmatprep.subr.bf16.mxu0 0
    %2189 = vmatpush1.bf16.msra.mxu0 0
    %2190 = vmatprep.subr.bf16.mxu0 0
    %2191 = vmatpush1.bf16.msra.mxu0 0
    %2192 = vmatprep.subr.bf16.mxu0 0
    %2193 = vmatpush1.bf16.msra.mxu0 0
    %2194 = vmatprep.subr.bf16.mxu0 0
    %2195 = vmatpush1.bf16.msra.mxu0 0
    %2196 = vmatprep.subr.bf16.mxu0 0
    %2197 = vmatpush1.bf16.msra.mxu0 0
    %2198 = vmatprep.subr.bf16.mxu0 0
    %2199 = vmatpush1.bf16.msra.mxu0 0
    %2200 = vmatprep.subr.bf16.mxu0 0
    %2201 = vmatpush1.bf16.msra.mxu0 0
    %2202 = vmatprep.subr.bf16.mxu0 0
    %2203 = vmatpush1.bf16.msra.mxu0 0
    %2204 = vmatprep.subr.bf16.mxu0 0
    %2205 = vmatpush1.bf16.msra.mxu0 0
    %2206 = vmatprep.subr.bf16.mxu0 0
    %2207 = vmatpush1.bf16.msra.mxu0 0
    %2208 = vmatprep.subr.bf16.mxu0 0
    %2209 = vmatpush1.bf16.msra.mxu0 0
    %2210 = vmatprep.subr.bf16.mxu0 0
    %2211 = vmatpush1.bf16.msra.mxu0 0
    %2212 = vmatprep.subr.bf16.mxu0 0
    %2213 = vmatpush1.bf16.msra.mxu0 0
    %2214 = vmatprep.mubr.bf16.mxu0 0
    %2215 = vmatmul.mubr.bf16.gmra.mrb[0].mxu0 %v2180
    %v2216 = vpop.f32.mrb[0].mxu0
    %v2217 = vadd.f32 0.0, %v2216
    %v2218 = vpop.f32.mrb[0].mxu0
    %v2219 = vpop.f32.mrb[0].mxu0
    %v2220 = vadd.f32 0.0, %v2219
    %v2221 = vpop.f32.mrb[0].mxu0
    %2222 = vdwg.mxu0
    %v2223 = vadd.f32 %v2173, %v2217
    %v2224 = vadd.f32 %v2174, %v2220
    %v2225 = vtanh.pop %v2223
    %v2226 = vtanh.pop %v2224
    %v2227 = vmul.f32 %v2225, 0.5
    %v2228 = vmul.f32 %v2226, 0.5
    %v2229 = vadd.f32 %v2227, 0.5
    %v2230 = vadd.f32 %v2228, 0.5
    %v2231 = vmul.f32 %v2229, %v2158
    %v2232 = vmul.f32 %v2230, %v2159
    %2235 = vrot.lane.b32.xlu0 %v2225, 80
    %v2236 = vpop.permute.xlu0 %2235
    %2237 = vrot.lane.b32.xlu0 %v2226, 80
    %v2238 = vpop.permute.xlu0 %2237
    %v2241 = vmul.f32 %v2229, %v2236
    %v2242 = vmul.f32 %v2230, %v2238
    %2245 = vrot.lane.b32.xlu0 %v2241, 16
    %v2246 = vpop.permute.xlu0 %2245
    %2247 = vrot.lane.b32.xlu0 %v2242, 16
    %v2248 = vpop.permute.xlu0 %2247
    %v2251 = vadd.f32 %v2231, %v2246
    %v2252 = vadd.f32 %v2232, %v2248
    %v2253 = vtanh.pop %v2251
    %v2254 = vtanh.pop %v2252
    %2257 = vrot.lane.b32.xlu0 %v2253, 16
    %v2258 = vpop.permute.xlu0 %2257
    %2259 = vrot.lane.b32.xlu0 %v2254, 16
    %v2260 = vpop.permute.xlu0 %2259
    %v2263 = vmul.f32 %v2229, %v2258
    %v2264 = vmul.f32 %v2230, %v2260
    %s2265 = scalar_lea.vmem [#allocation2], 96
    %v2266 = vld [vmem:[%s2265] sm:$0xff]
    %v2267 = vld [vmem:[%s2265 + $0x8] sm:$0xff]
    %v2268 = vpack.c.bf16 %v2264, %v2263
    %2270 = vrot.lane.b32.xlu0 %v2268, 96
    %v2271 = vpop.permute.xlu0 %2270
    %v2273 = vsel %vm1713, %v2271, 0
    %2275 = vmatprep.subr.bf16.mxu0 0
    %2276 = vmatpush1.bf16.msra.mxu0 %v1711
    %2277 = vmatprep.subr.bf16.mxu0 0
    %2278 = vmatpush1.bf16.msra.mxu0 0
    %2279 = vmatprep.subr.bf16.mxu0 0
    %2280 = vmatpush1.bf16.msra.mxu0 0
    %2281 = vmatprep.subr.bf16.mxu0 0
    %2282 = vmatpush1.bf16.msra.mxu0 0
    %2283 = vmatprep.subr.bf16.mxu0 0
    %2284 = vmatpush1.bf16.msra.mxu0 0
    %2285 = vmatprep.subr.bf16.mxu0 0
    %2286 = vmatpush1.bf16.msra.mxu0 0
    %2287 = vmatprep.subr.bf16.mxu0 0
    %2288 = vmatpush1.bf16.msra.mxu0 0
    %2289 = vmatprep.subr.bf16.mxu0 0
    %2290 = vmatpush1.bf16.msra.mxu0 0
    %2291 = vmatprep.subr.bf16.mxu0 0
    %2292 = vmatpush1.bf16.msra.mxu0 0
    %2293 = vmatprep.subr.bf16.mxu0 0
    %2294 = vmatpush1.bf16.msra.mxu0 0
    %2295 = vmatprep.subr.bf16.mxu0 0
    %2296 = vmatpush1.bf16.msra.mxu0 0
    %2297 = vmatprep.subr.bf16.mxu0 0
    %2298 = vmatpush1.bf16.msra.mxu0 0
    %2299 = vmatprep.subr.bf16.mxu0 0
    %2300 = vmatpush1.bf16.msra.mxu0 0
    %2301 = vmatprep.subr.bf16.mxu0 0
    %2302 = vmatpush1.bf16.msra.mxu0 0
    %2303 = vmatprep.subr.bf16.mxu0 0
    %2304 = vmatpush1.bf16.msra.mxu0 0
    %2305 = vmatprep.subr.bf16.mxu0 0
    %2306 = vmatpush1.bf16.msra.mxu0 0
    %2307 = vmatprep.mubr.bf16.mxu0 0
    %2308 = vmatmul.mubr.bf16.gmra.mrb[0].mxu0 %v2273
    %v2309 = vpop.f32.mrb[0].mxu0
    %v2310 = vadd.f32 0.0, %v2309
    %v2311 = vpop.f32.mrb[0].mxu0
    %v2312 = vpop.f32.mrb[0].mxu0
    %v2313 = vadd.f32 0.0, %v2312
    %v2314 = vpop.f32.mrb[0].mxu0
    %2315 = vdwg.mxu0
    %v2316 = vadd.f32 %v2266, %v2310
    %v2317 = vadd.f32 %v2267, %v2313
    %v2318 = vtanh.pop %v2316
    %v2319 = vtanh.pop %v2317
    %v2320 = vmul.f32 %v2318, 0.5
    %v2321 = vmul.f32 %v2319, 0.5
    %v2322 = vadd.f32 %v2320, 0.5
    %v2323 = vadd.f32 %v2321, 0.5
    %v2324 = vmul.f32 %v2322, %v2251
    %v2325 = vmul.f32 %v2323, %v2252
    %2328 = vrot.lane.b32.xlu0 %v2318, 80
    %v2329 = vpop.permute.xlu0 %2328
    %2330 = vrot.lane.b32.xlu0 %v2319, 80
    %v2331 = vpop.permute.xlu0 %2330
    %v2334 = vmul.f32 %v2322, %v2329
    %v2335 = vmul.f32 %v2323, %v2331
    %2338 = vrot.lane.b32.xlu0 %v2334, 16
    %v2339 = vpop.permute.xlu0 %2338
    %2340 = vrot.lane.b32.xlu0 %v2335, 16
    %v2341 = vpop.permute.xlu0 %2340
    %v2344 = vadd.f32 %v2324, %v2339
    %v2345 = vadd.f32 %v2325, %v2341
    %v2346 = vtanh.pop %v2344
    %v2347 = vtanh.pop %v2345
    %2350 = vrot.lane.b32.xlu0 %v2346, 16
    %v2351 = vpop.permute.xlu0 %2350
    %2352 = vrot.lane.b32.xlu0 %v2347, 16
    %v2353 = vpop.permute.xlu0 %2352
    %v2356 = vmul.f32 %v2322, %v2351
    %v2357 = vmul.f32 %v2323, %v2353
    %s2358 = scalar_lea.vmem [#allocation2], 112
    %v2359 = vld [vmem:[%s2358] sm:$0xff]
    %v2360 = vld [vmem:[%s2358 + $0x8] sm:$0xff]
    %v2361 = vpack.c.bf16 %v2357, %v2356
    %2363 = vrot.lane.b32.xlu0 %v2361, 96
    %v2364 = vpop.permute.xlu0 %2363
    %v2366 = vsel %vm1713, %v2364, 0
    %2368 = vmatprep.subr.bf16.mxu0 0
    %2369 = vmatpush1.bf16.msra.mxu0 %v1711
    %2370 = vmatprep.subr.bf16.mxu0 0
    %2371 = vmatpush1.bf16.msra.mxu0 0
    %2372 = vmatprep.subr.bf16.mxu0 0
    %2373 = vmatpush1.bf16.msra.mxu0 0
    %2374 = vmatprep.subr.bf16.mxu0 0
    %2375 = vmatpush1.bf16.msra.mxu0 0
    %2376 = vmatprep.subr.bf16.mxu0 0
    %2377 = vmatpush1.bf16.msra.mxu0 0
    %2378 = vmatprep.subr.bf16.mxu0 0
    %2379 = vmatpush1.bf16.msra.mxu0 0
    %2380 = vmatprep.subr.bf16.mxu0 0
    %2381 = vmatpush1.bf16.msra.mxu0 0
    %2382 = vmatprep.subr.bf16.mxu0 0
    %2383 = vmatpush1.bf16.msra.mxu0 0
    %2384 = vmatprep.subr.bf16.mxu0 0
    %2385 = vmatpush1.bf16.msra.mxu0 0
    %2386 = vmatprep.subr.bf16.mxu0 0
    %2387 = vmatpush1.bf16.msra.mxu0 0
    %2388 = vmatprep.subr.bf16.mxu0 0
    %2389 = vmatpush1.bf16.msra.mxu0 0
    %2390 = vmatprep.subr.bf16.mxu0 0
    %2391 = vmatpush1.bf16.msra.mxu0 0
    %2392 = vmatprep.subr.bf16.mxu0 0
    %2393 = vmatpush1.bf16.msra.mxu0 0
    %2394 = vmatprep.subr.bf16.mxu0 0
    %2395 = vmatpush1.bf16.msra.mxu0 0
    %2396 = vmatprep.subr.bf16.mxu0 0
    %2397 = vmatpush1.bf16.msra.mxu0 0
    %2398 = vmatprep.subr.bf16.mxu0 0
    %2399 = vmatpush1.bf16.msra.mxu0 0
    %2400 = vmatprep.mubr.bf16.mxu0 0
    %2401 = vmatmul.mubr.bf16.gmra.mrb[0].mxu0 %v2366
    %v2402 = vpop.f32.mrb[0].mxu0
    %v2403 = vadd.f32 0.0, %v2402
    %v2404 = vpop.f32.mrb[0].mxu0
    %v2405 = vpop.f32.mrb[0].mxu0
    %v2406 = vadd.f32 0.0, %v2405
    %v2407 = vpop.f32.mrb[0].mxu0
    %2408 = vdwg.mxu0
    %v2409 = vadd.f32 %v2359, %v2403
    %v2410 = vadd.f32 %v2360, %v2406
    %v2411 = vtanh.pop %v2409
    %v2412 = vtanh.pop %v2410
    %v2413 = vmul.f32 %v2411, 0.5
    %v2414 = vmul.f32 %v2412, 0.5
    %v2415 = vadd.f32 %v2413, 0.5
    %v2416 = vadd.f32 %v2414, 0.5
    %v2417 = vmul.f32 %v2415, %v2344
    %v2418 = vmul.f32 %v2416, %v2345
    %2421 = vrot.lane.b32.xlu0 %v2411, 80
    %v2422 = vpop.permute.xlu0 %2421
    %2423 = vrot.lane.b32.xlu0 %v2412, 80
    %v2424 = vpop.permute.xlu0 %2423
    %v2427 = vmul.f32 %v2415, %v2422
    %v2428 = vmul.f32 %v2416, %v2424
    %2431 = vrot.lane.b32.xlu0 %v2427, 16
    %v2432 = vpop.permute.xlu0 %2431
    %2433 = vrot.lane.b32.xlu0 %v2428, 16
    %v2434 = vpop.permute.xlu0 %2433
    %v2437 = vadd.f32 %v2417, %v2432
    %v2438 = vadd.f32 %v2418, %v2434
    %v2439 = vtanh.pop %v2437
    %v2440 = vtanh.pop %v2438
    %2443 = vrot.lane.b32.xlu0 %v2439, 16
    %v2444 = vpop.permute.xlu0 %2443
    %2445 = vrot.lane.b32.xlu0 %v2440, 16
    %v2446 = vpop.permute.xlu0 %2445
    %v2449 = vmul.f32 %v2415, %v2444
    %v2450 = vmul.f32 %v2416, %v2446
    %s2451 = scalar_lea.vmem [#allocation2], 128
    %v2452 = vld [vmem:[%s2451] sm:$0xff]
    %v2453 = vld [vmem:[%s2451 + $0x8] sm:$0xff]
    %v2454 = vpack.c.bf16 %v2450, %v2449
    %2456 = vrot.lane.b32.xlu0 %v2454, 96
    %v2457 = vpop.permute.xlu0 %2456
    %v2459 = vsel %vm1713, %v2457, 0
    %2461 = vmatprep.subr.bf16.mxu0 0
    %2462 = vmatpush1.bf16.msra.mxu0 %v1711
    %2463 = vmatprep.subr.bf16.mxu0 0
    %2464 = vmatpush1.bf16.msra.mxu0 0
    %2465 = vmatprep.subr.bf16.mxu0 0
    %2466 = vmatpush1.bf16.msra.mxu0 0
    %2467 = vmatprep.subr.bf16.mxu0 0
    %2468 = vmatpush1.bf16.msra.mxu0 0
    %2469 = vmatprep.subr.bf16.mxu0 0
    %2470 = vmatpush1.bf16.msra.mxu0 0
    %2471 = vmatprep.subr.bf16.mxu0 0
    %2472 = vmatpush1.bf16.msra.mxu0 0
    %2473 = vmatprep.subr.bf16.mxu0 0
    %2474 = vmatpush1.bf16.msra.mxu0 0
    %2475 = vmatprep.subr.bf16.mxu0 0
    %2476 = vmatpush1.bf16.msra.mxu0 0
    %2477 = vmatprep.subr.bf16.mxu0 0
    %2478 = vmatpush1.bf16.msra.mxu0 0
    %2479 = vmatprep.subr.bf16.mxu0 0
    %2480 = vmatpush1.bf16.msra.mxu0 0
    %2481 = vmatprep.subr.bf16.mxu0 0
    %2482 = vmatpush1.bf16.msra.mxu0 0
    %2483 = vmatprep.subr.bf16.mxu0 0
    %2484 = vmatpush1.bf16.msra.mxu0 0
    %2485 = vmatprep.subr.bf16.mxu0 0
    %2486 = vmatpush1.bf16.msra.mxu0 0
    %2487 = vmatprep.subr.bf16.mxu0 0
    %2488 = vmatpush1.bf16.msra.mxu0 0
    %2489 = vmatprep.subr.bf16.mxu0 0
    %2490 = vmatpush1.bf16.msra.mxu0 0
    %2491 = vmatprep.subr.bf16.mxu0 0
    %2492 = vmatpush1.bf16.msra.mxu0 0
    %2493 = vmatprep.mubr.bf16.mxu0 0
    %2494 = vmatmul.mubr.bf16.gmra.mrb[0].mxu0 %v2459
    %v2495 = vpop.f32.mrb[0].mxu0
    %v2496 = vadd.f32 0.0, %v2495
    %v2497 = vpop.f32.mrb[0].mxu0
    %v2498 = vpop.f32.mrb[0].mxu0
    %v2499 = vadd.f32 0.0, %v2498
    %v2500 = vpop.f32.mrb[0].mxu0
    %2501 = vdwg.mxu0
    %v2502 = vadd.f32 %v2452, %v2496
    %v2503 = vadd.f32 %v2453, %v2499
    %v2504 = vtanh.pop %v2502
    %v2505 = vtanh.pop %v2503
    %v2506 = vmul.f32 %v2504, 0.5
    %v2507 = vmul.f32 %v2505, 0.5
    %v2508 = vadd.f32 %v2506, 0.5
    %v2509 = vadd.f32 %v2507, 0.5
    %v2510 = vmul.f32 %v2508, %v2437
    %v2511 = vmul.f32 %v2509, %v2438
    %2514 = vrot.lane.b32.xlu0 %v2504, 80
    %v2515 = vpop.permute.xlu0 %2514
    %2516 = vrot.lane.b32.xlu0 %v2505, 80
    %v2517 = vpop.permute.xlu0 %2516
    %v2520 = vmul.f32 %v2508, %v2515
    %v2521 = vmul.f32 %v2509, %v2517
    %2524 = vrot.lane.b32.xlu0 %v2520, 16
    %v2525 = vpop.permute.xlu0 %2524
    %2526 = vrot.lane.b32.xlu0 %v2521, 16
    %v2527 = vpop.permute.xlu0 %2526
    %v2530 = vadd.f32 %v2510, %v2525
    %v2531 = vadd.f32 %v2511, %v2527
    %v2532 = vtanh.pop %v2530
    %v2533 = vtanh.pop %v2531
    %2536 = vrot.lane.b32.xlu0 %v2532, 16
    %v2537 = vpop.permute.xlu0 %2536
    %2538 = vrot.lane.b32.xlu0 %v2533, 16
    %v2539 = vpop.permute.xlu0 %2538
    %v2542 = vmul.f32 %v2508, %v2537
    %v2543 = vmul.f32 %v2509, %v2539
    %s2544 = scalar_lea.vmem [#allocation2], 144
    %v2545 = vld [vmem:[%s2544] sm:$0xff]
    %v2546 = vld [vmem:[%s2544 + $0x8] sm:$0xff]
    %v2547 = vpack.c.bf16 %v2543, %v2542
    %2549 = vrot.lane.b32.xlu0 %v2547, 96
    %v2550 = vpop.permute.xlu0 %2549
    %v2552 = vsel %vm1713, %v2550, 0
    %2554 = vmatprep.subr.bf16.mxu0 0
    %2555 = vmatpush1.bf16.msra.mxu0 %v1711
    %2556 = vmatprep.subr.bf16.mxu0 0
    %2557 = vmatpush1.bf16.msra.mxu0 0
    %2558 = vmatprep.subr.bf16.mxu0 0
    %2559 = vmatpush1.bf16.msra.mxu0 0
    %2560 = vmatprep.subr.bf16.mxu0 0
    %2561 = vmatpush1.bf16.msra.mxu0 0
    %2562 = vmatprep.subr.bf16.mxu0 0
    %2563 = vmatpush1.bf16.msra.mxu0 0
    %2564 = vmatprep.subr.bf16.mxu0 0
    %2565 = vmatpush1.bf16.msra.mxu0 0
    %2566 = vmatprep.subr.bf16.mxu0 0
    %2567 = vmatpush1.bf16.msra.mxu0 0
    %2568 = vmatprep.subr.bf16.mxu0 0
    %2569 = vmatpush1.bf16.msra.mxu0 0
    %2570 = vmatprep.subr.bf16.mxu0 0
    %2571 = vmatpush1.bf16.msra.mxu0 0
    %2572 = vmatprep.subr.bf16.mxu0 0
    %2573 = vmatpush1.bf16.msra.mxu0 0
    %2574 = vmatprep.subr.bf16.mxu0 0
    %2575 = vmatpush1.bf16.msra.mxu0 0
    %2576 = vmatprep.subr.bf16.mxu0 0
    %2577 = vmatpush1.bf16.msra.mxu0 0
    %2578 = vmatprep.subr.bf16.mxu0 0
    %2579 = vmatpush1.bf16.msra.mxu0 0
    %2580 = vmatprep.subr.bf16.mxu0 0
    %2581 = vmatpush1.bf16.msra.mxu0 0
    %2582 = vmatprep.subr.bf16.mxu0 0
    %2583 = vmatpush1.bf16.msra.mxu0 0
    %2584 = vmatprep.subr.bf16.mxu0 0
    %2585 = vmatpush1.bf16.msra.mxu0 0
    %2586 = vmatprep.mubr.bf16.mxu0 0
    %2587 = vmatmul.mubr.bf16.gmra.mrb[0].mxu0 %v2552
    %v2588 = vpop.f32.mrb[0].mxu0
    %v2589 = vadd.f32 0.0, %v2588
    %v2590 = vpop.f32.mrb[0].mxu0
    %v2591 = vpop.f32.mrb[0].mxu0
    %v2592 = vadd.f32 0.0, %v2591
    %v2593 = vpop.f32.mrb[0].mxu0
    %2594 = vdwg.mxu0
    %v2595 = vadd.f32 %v2545, %v2589
    %v2596 = vadd.f32 %v2546, %v2592
    %v2597 = vtanh.pop %v2595
    %v2598 = vtanh.pop %v2596
    %v2599 = vmul.f32 %v2597, 0.5
    %v2600 = vmul.f32 %v2598, 0.5
    %v2601 = vadd.f32 %v2599, 0.5
    %v2602 = vadd.f32 %v2600, 0.5
    %v2603 = vmul.f32 %v2601, %v2530
    %v2604 = vmul.f32 %v2602, %v2531
    %2607 = vrot.lane.b32.xlu0 %v2597, 80
    %v2608 = vpop.permute.xlu0 %2607
    %2609 = vrot.lane.b32.xlu0 %v2598, 80
    %v2610 = vpop.permute.xlu0 %2609
    %v2613 = vmul.f32 %v2601, %v2608
    %v2614 = vmul.f32 %v2602, %v2610
    %2617 = vrot.lane.b32.xlu0 %v2613, 16
    %v2618 = vpop.permute.xlu0 %2617
    %2619 = vrot.lane.b32.xlu0 %v2614, 16
    %v2620 = vpop.permute.xlu0 %2619
    %v2623 = vadd.f32 %v2603, %v2618
    %v2624 = vadd.f32 %v2604, %v2620
    %v2625 = vtanh.pop %v2623
    %v2626 = vtanh.pop %v2624
    %2629 = vrot.lane.b32.xlu0 %v2625, 16
    %v2630 = vpop.permute.xlu0 %2629
    %2631 = vrot.lane.b32.xlu0 %v2626, 16
    %v2632 = vpop.permute.xlu0 %2631
    %v2635 = vmul.f32 %v2601, %v2630
    %v2636 = vmul.f32 %v2602, %v2632
    %s2637 = scalar_lea.vmem [#allocation2], 160
    %v2638 = vld [vmem:[%s2637] sm:$0xff]
    %v2639 = vld [vmem:[%s2637 + $0x8] sm:$0xff]
    %v2640 = vpack.c.bf16 %v2636, %v2635
    %2642 = vrot.lane.b32.xlu0 %v2640, 96
    %v2643 = vpop.permute.xlu0 %2642
    %v2645 = vsel %vm1713, %v2643, 0
    %2647 = vmatprep.subr.bf16.mxu0 0
    %2648 = vmatpush1.bf16.msra.mxu0 %v1711
    %2649 = vmatprep.subr.bf16.mxu0 0
    %2650 = vmatpush1.bf16.msra.mxu0 0
    %2651 = vmatprep.subr.bf16.mxu0 0
    %2652 = vmatpush1.bf16.msra.mxu0 0
    %2653 = vmatprep.subr.bf16.mxu0 0
    %2654 = vmatpush1.bf16.msra.mxu0 0
    %2655 = vmatprep.subr.bf16.mxu0 0
    %2656 = vmatpush1.bf16.msra.mxu0 0
    %2657 = vmatprep.subr.bf16.mxu0 0
    %2658 = vmatpush1.bf16.msra.mxu0 0
    %2659 = vmatprep.subr.bf16.mxu0 0
    %2660 = vmatpush1.bf16.msra.mxu0 0
    %2661 = vmatprep.subr.bf16.mxu0 0
    %2662 = vmatpush1.bf16.msra.mxu0 0
    %2663 = vmatprep.subr.bf16.mxu0 0
    %2664 = vmatpush1.bf16.msra.mxu0 0
    %2665 = vmatprep.subr.bf16.mxu0 0
    %2666 = vmatpush1.bf16.msra.mxu0 0
    %2667 = vmatprep.subr.bf16.mxu0 0
    %2668 = vmatpush1.bf16.msra.mxu0 0
    %2669 = vmatprep.subr.bf16.mxu0 0
    %2670 = vmatpush1.bf16.msra.mxu0 0
    %2671 = vmatprep.subr.bf16.mxu0 0
    %2672 = vmatpush1.bf16.msra.mxu0 0
    %2673 = vmatprep.subr.bf16.mxu0 0
    %2674 = vmatpush1.bf16.msra.mxu0 0
    %2675 = vmatprep.subr.bf16.mxu0 0
    %2676 = vmatpush1.bf16.msra.mxu0 0
    %2677 = vmatprep.subr.bf16.mxu0 0
    %2678 = vmatpush1.bf16.msra.mxu0 0
    %2679 = vmatprep.mubr.bf16.mxu0 0
    %2680 = vmatmul.mubr.bf16.gmra.mrb[0].mxu0 %v2645
    %v2681 = vpop.f32.mrb[0].mxu0
    %v2682 = vadd.f32 0.0, %v2681
    %v2683 = vpop.f32.mrb[0].mxu0
    %v2684 = vpop.f32.mrb[0].mxu0
    %v2685 = vadd.f32 0.0, %v2684
    %v2686 = vpop.f32.mrb[0].mxu0
    %2687 = vdwg.mxu0
    %v2688 = vadd.f32 %v2638, %v2682
    %v2689 = vadd.f32 %v2639, %v2685
    %v2690 = vtanh.pop %v2688
    %v2691 = vtanh.pop %v2689
    %v2692 = vmul.f32 %v2690, 0.5
    %v2693 = vmul.f32 %v2691, 0.5
    %v2694 = vadd.f32 %v2692, 0.5
    %v2695 = vadd.f32 %v2693, 0.5
    %v2696 = vmul.f32 %v2694, %v2623
    %v2697 = vmul.f32 %v2695, %v2624
    %2700 = vrot.lane.b32.xlu0 %v2690, 80
    %v2701 = vpop.permute.xlu0 %2700
    %2702 = vrot.lane.b32.xlu0 %v2691, 80
    %v2703 = vpop.permute.xlu0 %2702
    %v2706 = vmul.f32 %v2694, %v2701
    %v2707 = vmul.f32 %v2695, %v2703
    %2710 = vrot.lane.b32.xlu0 %v2706, 16
    %v2711 = vpop.permute.xlu0 %2710
    %2712 = vrot.lane.b32.xlu0 %v2707, 16
    %v2713 = vpop.permute.xlu0 %2712
    %v2716 = vadd.f32 %v2696, %v2711
    %v2717 = vadd.f32 %v2697, %v2713
    %v2718 = vtanh.pop %v2716
    %v2719 = vtanh.pop %v2717
    %2722 = vrot.lane.b32.xlu0 %v2718, 16
    %v2723 = vpop.permute.xlu0 %2722
    %2724 = vrot.lane.b32.xlu0 %v2719, 16
    %v2725 = vpop.permute.xlu0 %2724
    %v2728 = vmul.f32 %v2694, %v2723
    %v2729 = vmul.f32 %v2695, %v2725
    %s2730 = scalar_lea.vmem [#allocation2], 176
    %v2731 = vld [vmem:[%s2730] sm:$0xff]
    %v2732 = vld [vmem:[%s2730 + $0x8] sm:$0xff]
    %v2733 = vpack.c.bf16 %v2729, %v2728
    %2735 = vrot.lane.b32.xlu0 %v2733, 96
    %v2736 = vpop.permute.xlu0 %2735
    %v2738 = vsel %vm1713, %v2736, 0
    %2740 = vmatprep.subr.bf16.mxu0 0
    %2741 = vmatpush1.bf16.msra.mxu0 %v1711
    %2742 = vmatprep.subr.bf16.mxu0 0
    %2743 = vmatpush1.bf16.msra.mxu0 0
    %2744 = vmatprep.subr.bf16.mxu0 0
    %2745 = vmatpush1.bf16.msra.mxu0 0
    %2746 = vmatprep.subr.bf16.mxu0 0
    %2747 = vmatpush1.bf16.msra.mxu0 0
    %2748 = vmatprep.subr.bf16.mxu0 0
    %2749 = vmatpush1.bf16.msra.mxu0 0
    %2750 = vmatprep.subr.bf16.mxu0 0
    %2751 = vmatpush1.bf16.msra.mxu0 0
    %2752 = vmatprep.subr.bf16.mxu0 0
    %2753 = vmatpush1.bf16.msra.mxu0 0
    %2754 = vmatprep.subr.bf16.mxu0 0
    %2755 = vmatpush1.bf16.msra.mxu0 0
    %2756 = vmatprep.subr.bf16.mxu0 0
    %2757 = vmatpush1.bf16.msra.mxu0 0
    %2758 = vmatprep.subr.bf16.mxu0 0
    %2759 = vmatpush1.bf16.msra.mxu0 0
    %2760 = vmatprep.subr.bf16.mxu0 0
    %2761 = vmatpush1.bf16.msra.mxu0 0
    %2762 = vmatprep.subr.bf16.mxu0 0
    %2763 = vmatpush1.bf16.msra.mxu0 0
    %2764 = vmatprep.subr.bf16.mxu0 0
    %2765 = vmatpush1.bf16.msra.mxu0 0
    %2766 = vmatprep.subr.bf16.mxu0 0
    %2767 = vmatpush1.bf16.msra.mxu0 0
    %2768 = vmatprep.subr.bf16.mxu0 0
    %2769 = vmatpush1.bf16.msra.mxu0 0
    %2770 = vmatprep.subr.bf16.mxu0 0
    %2771 = vmatpush1.bf16.msra.mxu0 0
    %2772 = vmatprep.mubr.bf16.mxu0 0
    %2773 = vmatmul.mubr.bf16.gmra.mrb[0].mxu0 %v2738
    %v2774 = vpop.f32.mrb[0].mxu0
    %v2775 = vadd.f32 0.0, %v2774
    %v2776 = vpop.f32.mrb[0].mxu0
    %v2777 = vpop.f32.mrb[0].mxu0
    %v2778 = vadd.f32 0.0, %v2777
    %v2779 = vpop.f32.mrb[0].mxu0
    %2780 = vdwg.mxu0
    %v2781 = vadd.f32 %v2731, %v2775
    %v2782 = vadd.f32 %v2732, %v2778
    %v2783 = vtanh.pop %v2781
    %v2784 = vtanh.pop %v2782
    %v2785 = vmul.f32 %v2783, 0.5
    %v2786 = vmul.f32 %v2784, 0.5
    %v2787 = vadd.f32 %v2785, 0.5
    %v2788 = vadd.f32 %v2786, 0.5
    %v2789 = vmul.f32 %v2787, %v2716
    %v2790 = vmul.f32 %v2788, %v2717
    %2793 = vrot.lane.b32.xlu0 %v2783, 80
    %v2794 = vpop.permute.xlu0 %2793
    %2795 = vrot.lane.b32.xlu0 %v2784, 80
    %v2796 = vpop.permute.xlu0 %2795
    %v2799 = vmul.f32 %v2787, %v2794
    %v2800 = vmul.f32 %v2788, %v2796
    %2803 = vrot.lane.b32.xlu0 %v2799, 16
    %v2804 = vpop.permute.xlu0 %2803
    %2805 = vrot.lane.b32.xlu0 %v2800, 16
    %v2806 = vpop.permute.xlu0 %2805
    %v2809 = vadd.f32 %v2789, %v2804
    %v2810 = vadd.f32 %v2790, %v2806
    %v2811 = vtanh.pop %v2809
    %v2812 = vtanh.pop %v2810
    %2815 = vrot.lane.b32.xlu0 %v2811, 16
    %v2816 = vpop.permute.xlu0 %2815
    %2817 = vrot.lane.b32.xlu0 %v2812, 16
    %v2818 = vpop.permute.xlu0 %2817
    %v2821 = vmul.f32 %v2787, %v2816
    %v2822 = vmul.f32 %v2788, %v2818
    %s2823 = scalar_lea.vmem [#allocation2], 192
    %v2824 = vld [vmem:[%s2823] sm:$0xff]
    %v2825 = vld [vmem:[%s2823 + $0x8] sm:$0xff]
    %v2826 = vpack.c.bf16 %v2822, %v2821
    %2828 = vrot.lane.b32.xlu0 %v2826, 96
    %v2829 = vpop.permute.xlu0 %2828
    %v2831 = vsel %vm1713, %v2829, 0
    %2833 = vmatprep.subr.bf16.mxu0 0
    %2834 = vmatpush1.bf16.msra.mxu0 %v1711
    %2835 = vmatprep.subr.bf16.mxu0 0
    %2836 = vmatpush1.bf16.msra.mxu0 0
    %2837 = vmatprep.subr.bf16.mxu0 0
    %2838 = vmatpush1.bf16.msra.mxu0 0
    %2839 = vmatprep.subr.bf16.mxu0 0
    %2840 = vmatpush1.bf16.msra.mxu0 0
    %2841 = vmatprep.subr.bf16.mxu0 0
    %2842 = vmatpush1.bf16.msra.mxu0 0
    %2843 = vmatprep.subr.bf16.mxu0 0
    %2844 = vmatpush1.bf16.msra.mxu0 0
    %2845 = vmatprep.subr.bf16.mxu0 0
    %2846 = vmatpush1.bf16.msra.mxu0 0
    %2847 = vmatprep.subr.bf16.mxu0 0
    %2848 = vmatpush1.bf16.msra.mxu0 0
    %2849 = vmatprep.subr.bf16.mxu0 0
    %2850 = vmatpush1.bf16.msra.mxu0 0
    %2851 = vmatprep.subr.bf16.mxu0 0
    %2852 = vmatpush1.bf16.msra.mxu0 0
    %2853 = vmatprep.subr.bf16.mxu0 0
    %2854 = vmatpush1.bf16.msra.mxu0 0
    %2855 = vmatprep.subr.bf16.mxu0 0
    %2856 = vmatpush1.bf16.msra.mxu0 0
    %2857 = vmatprep.subr.bf16.mxu0 0
    %2858 = vmatpush1.bf16.msra.mxu0 0
    %2859 = vmatprep.subr.bf16.mxu0 0
    %2860 = vmatpush1.bf16.msra.mxu0 0
    %2861 = vmatprep.subr.bf16.mxu0 0
    %2862 = vmatpush1.bf16.msra.mxu0 0
    %2863 = vmatprep.subr.bf16.mxu0 0
    %2864 = vmatpush1.bf16.msra.mxu0 0
    %2865 = vmatprep.mubr.bf16.mxu0 0
    %2866 = vmatmul.mubr.bf16.gmra.mrb[0].mxu0 %v2831
    %v2867 = vpop.f32.mrb[0].mxu0
    %v2868 = vadd.f32 0.0, %v2867
    %v2869 = vpop.f32.mrb[0].mxu0
    %v2870 = vpop.f32.mrb[0].mxu0
    %v2871 = vadd.f32 0.0, %v2870
    %v2872 = vpop.f32.mrb[0].mxu0
    %2873 = vdwg.mxu0
    %v2874 = vadd.f32 %v2824, %v2868
    %v2875 = vadd.f32 %v2825, %v2871
    %v2876 = vtanh.pop %v2874
    %v2877 = vtanh.pop %v2875
    %v2878 = vmul.f32 %v2876, 0.5
    %v2879 = vmul.f32 %v2877, 0.5
    %v2880 = vadd.f32 %v2878, 0.5
    %v2881 = vadd.f32 %v2879, 0.5
    %v2882 = vmul.f32 %v2880, %v2809
    %v2883 = vmul.f32 %v2881, %v2810
    %2886 = vrot.lane.b32.xlu0 %v2876, 80
    %v2887 = vpop.permute.xlu0 %2886
    %2888 = vrot.lane.b32.xlu0 %v2877, 80
    %v2889 = vpop.permute.xlu0 %2888
    %v2892 = vmul.f32 %v2880, %v2887
    %v2893 = vmul.f32 %v2881, %v2889
    %2896 = vrot.lane.b32.xlu0 %v2892, 16
    %v2897 = vpop.permute.xlu0 %2896
    %2898 = vrot.lane.b32.xlu0 %v2893, 16
    %v2899 = vpop.permute.xlu0 %2898
    %v2902 = vadd.f32 %v2882, %v2897
    %v2903 = vadd.f32 %v2883, %v2899
    %v2904 = vtanh.pop %v2902
    %v2905 = vtanh.pop %v2903
    %2908 = vrot.lane.b32.xlu0 %v2904, 16
    %v2909 = vpop.permute.xlu0 %2908
    %2910 = vrot.lane.b32.xlu0 %v2905, 16
    %v2911 = vpop.permute.xlu0 %2910
    %v2914 = vmul.f32 %v2880, %v2909
    %v2915 = vmul.f32 %v2881, %v2911
    %s2916 = scalar_lea.vmem [#allocation2], 208
    %v2917 = vld [vmem:[%s2916] sm:$0xff]
    %v2918 = vld [vmem:[%s2916 + $0x8] sm:$0xff]
    %v2919 = vpack.c.bf16 %v2915, %v2914
    %2921 = vrot.lane.b32.xlu0 %v2919, 96
    %v2922 = vpop.permute.xlu0 %2921
    %v2924 = vsel %vm1713, %v2922, 0
    %2926 = vmatprep.subr.bf16.mxu0 0
    %2927 = vmatpush1.bf16.msra.mxu0 %v1711
    %2928 = vmatprep.subr.bf16.mxu0 0
    %2929 = vmatpush1.bf16.msra.mxu0 0
    %2930 = vmatprep.subr.bf16.mxu0 0
    %2931 = vmatpush1.bf16.msra.mxu0 0
    %2932 = vmatprep.subr.bf16.mxu0 0
    %2933 = vmatpush1.bf16.msra.mxu0 0
    %2934 = vmatprep.subr.bf16.mxu0 0
    %2935 = vmatpush1.bf16.msra.mxu0 0
    %2936 = vmatprep.subr.bf16.mxu0 0
    %2937 = vmatpush1.bf16.msra.mxu0 0
    %2938 = vmatprep.subr.bf16.mxu0 0
    %2939 = vmatpush1.bf16.msra.mxu0 0
    %2940 = vmatprep.subr.bf16.mxu0 0
    %2941 = vmatpush1.bf16.msra.mxu0 0
    %2942 = vmatprep.subr.bf16.mxu0 0
    %2943 = vmatpush1.bf16.msra.mxu0 0
    %2944 = vmatprep.subr.bf16.mxu0 0
    %2945 = vmatpush1.bf16.msra.mxu0 0
    %2946 = vmatprep.subr.bf16.mxu0 0
    %2947 = vmatpush1.bf16.msra.mxu0 0
    %2948 = vmatprep.subr.bf16.mxu0 0
    %2949 = vmatpush1.bf16.msra.mxu0 0
    %2950 = vmatprep.subr.bf16.mxu0 0
    %2951 = vmatpush1.bf16.msra.mxu0 0
    %2952 = vmatprep.subr.bf16.mxu0 0
    %2953 = vmatpush1.bf16.msra.mxu0 0
    %2954 = vmatprep.subr.bf16.mxu0 0
    %2955 = vmatpush1.bf16.msra.mxu0 0
    %2956 = vmatprep.subr.bf16.mxu0 0
    %2957 = vmatpush1.bf16.msra.mxu0 0
    %2958 = vmatprep.mubr.bf16.mxu0 0
    %2959 = vmatmul.mubr.bf16.gmra.mrb[0].mxu0 %v2924
    %v2960 = vpop.f32.mrb[0].mxu0
    %v2961 = vadd.f32 0.0, %v2960
    %v2962 = vpop.f32.mrb[0].mxu0
    %v2963 = vpop.f32.mrb[0].mxu0
    %v2964 = vadd.f32 0.0, %v2963
    %v2965 = vpop.f32.mrb[0].mxu0
    %2966 = vdwg.mxu0
    %v2967 = vadd.f32 %v2917, %v2961
    %v2968 = vadd.f32 %v2918, %v2964
    %v2969 = vtanh.pop %v2967
    %v2970 = vtanh.pop %v2968
    %v2971 = vmul.f32 %v2969, 0.5
    %v2972 = vmul.f32 %v2970, 0.5
    %v2973 = vadd.f32 %v2971, 0.5
    %v2974 = vadd.f32 %v2972, 0.5
    %v2975 = vmul.f32 %v2973, %v2902
    %v2976 = vmul.f32 %v2974, %v2903
    %2979 = vrot.lane.b32.xlu0 %v2969, 80
    %v2980 = vpop.permute.xlu0 %2979
    %2981 = vrot.lane.b32.xlu0 %v2970, 80
    %v2982 = vpop.permute.xlu0 %2981
    %v2985 = vmul.f32 %v2973, %v2980
    %v2986 = vmul.f32 %v2974, %v2982
    %2989 = vrot.lane.b32.xlu0 %v2985, 16
    %v2990 = vpop.permute.xlu0 %2989
    %2991 = vrot.lane.b32.xlu0 %v2986, 16
    %v2992 = vpop.permute.xlu0 %2991
    %v2995 = vadd.f32 %v2975, %v2990
    %v2996 = vadd.f32 %v2976, %v2992
    %v2997 = vtanh.pop %v2995
    %v2998 = vtanh.pop %v2996
    %3001 = vrot.lane.b32.xlu0 %v2997, 16
    %v3002 = vpop.permute.xlu0 %3001
    %3003 = vrot.lane.b32.xlu0 %v2998, 16
    %v3004 = vpop.permute.xlu0 %3003
    %v3007 = vmul.f32 %v2973, %v3002
    %v3008 = vmul.f32 %v2974, %v3004
    %s3009 = scalar_lea.vmem [#allocation2], 224
    %v3010 = vld [vmem:[%s3009] sm:$0xff]
    %v3011 = vld [vmem:[%s3009 + $0x8] sm:$0xff]
    %v3012 = vpack.c.bf16 %v3008, %v3007
    %3014 = vrot.lane.b32.xlu0 %v3012, 96
    %v3015 = vpop.permute.xlu0 %3014
    %v3017 = vsel %vm1713, %v3015, 0
    %3019 = vmatprep.subr.bf16.mxu0 0
    %3020 = vmatpush1.bf16.msra.mxu0 %v1711
    %3021 = vmatprep.subr.bf16.mxu0 0
    %3022 = vmatpush1.bf16.msra.mxu0 0
    %3023 = vmatprep.subr.bf16.mxu0 0
    %3024 = vmatpush1.bf16.msra.mxu0 0
    %3025 = vmatprep.subr.bf16.mxu0 0
    %3026 = vmatpush1.bf16.msra.mxu0 0
    %3027 = vmatprep.subr.bf16.mxu0 0
    %3028 = vmatpush1.bf16.msra.mxu0 0
    %3029 = vmatprep.subr.bf16.mxu0 0
    %3030 = vmatpush1.bf16.msra.mxu0 0
    %3031 = vmatprep.subr.bf16.mxu0 0
    %3032 = vmatpush1.bf16.msra.mxu0 0
    %3033 = vmatprep.subr.bf16.mxu0 0
    %3034 = vmatpush1.bf16.msra.mxu0 0
    %3035 = vmatprep.subr.bf16.mxu0 0
    %3036 = vmatpush1.bf16.msra.mxu0 0
    %3037 = vmatprep.subr.bf16.mxu0 0
    %3038 = vmatpush1.bf16.msra.mxu0 0
    %3039 = vmatprep.subr.bf16.mxu0 0
    %3040 = vmatpush1.bf16.msra.mxu0 0
    %3041 = vmatprep.subr.bf16.mxu0 0
    %3042 = vmatpush1.bf16.msra.mxu0 0
    %3043 = vmatprep.subr.bf16.mxu0 0
    %3044 = vmatpush1.bf16.msra.mxu0 0
    %3045 = vmatprep.subr.bf16.mxu0 0
    %3046 = vmatpush1.bf16.msra.mxu0 0
    %3047 = vmatprep.subr.bf16.mxu0 0
    %3048 = vmatpush1.bf16.msra.mxu0 0
    %3049 = vmatprep.subr.bf16.mxu0 0
    %3050 = vmatpush1.bf16.msra.mxu0 0
    %3051 = vmatprep.mubr.bf16.mxu0 0
    %3052 = vmatmul.mubr.bf16.gmra.mrb[0].mxu0 %v3017
    %v3053 = vpop.f32.mrb[0].mxu0
    %v3054 = vadd.f32 0.0, %v3053
    %v3055 = vpop.f32.mrb[0].mxu0
    %v3056 = vpop.f32.mrb[0].mxu0
    %v3057 = vadd.f32 0.0, %v3056
    %v3058 = vpop.f32.mrb[0].mxu0
    %3059 = vdwg.mxu0
    %v3060 = vadd.f32 %v3010, %v3054
    %v3061 = vadd.f32 %v3011, %v3057
    %v3062 = vtanh.pop %v3060
    %v3063 = vtanh.pop %v3061
    %v3064 = vmul.f32 %v3062, 0.5
    %v3065 = vmul.f32 %v3063, 0.5
    %v3066 = vadd.f32 %v3064, 0.5
    %v3067 = vadd.f32 %v3065, 0.5
    %v3068 = vmul.f32 %v3066, %v2995
    %v3069 = vmul.f32 %v3067, %v2996
    %3072 = vrot.lane.b32.xlu0 %v3062, 80
    %v3073 = vpop.permute.xlu0 %3072
    %3074 = vrot.lane.b32.xlu0 %v3063, 80
    %v3075 = vpop.permute.xlu0 %3074
    %v3078 = vmul.f32 %v3066, %v3073
    %v3079 = vmul.f32 %v3067, %v3075
    %3082 = vrot.lane.b32.xlu0 %v3078, 16
    %v3083 = vpop.permute.xlu0 %3082
    %3084 = vrot.lane.b32.xlu0 %v3079, 16
    %v3085 = vpop.permute.xlu0 %3084
    %v3088 = vadd.f32 %v3068, %v3083
    %v3089 = vadd.f32 %v3069, %v3085
    %v3090 = vtanh.pop %v3088
    %v3091 = vtanh.pop %v3089
    %3094 = vrot.lane.b32.xlu0 %v3090, 16
    %v3095 = vpop.permute.xlu0 %3094
    %3096 = vrot.lane.b32.xlu0 %v3091, 16
    %v3097 = vpop.permute.xlu0 %3096
    %v3100 = vmul.f32 %v3066, %v3095
    %v3101 = vmul.f32 %v3067, %v3097
    %s3102 = scalar_lea.vmem [#allocation2], 240
    %v3103 = vld [vmem:[%s3102] sm:$0xff]
    %v3104 = vld [vmem:[%s3102 + $0x8] sm:$0xff]
    %v3105 = vpack.c.bf16 %v3101, %v3100
    %3107 = vrot.lane.b32.xlu0 %v3105, 96
    %v3108 = vpop.permute.xlu0 %3107
    %v3110 = vsel %vm1713, %v3108, 0
    %3112 = vmatprep.subr.bf16.mxu0 0
    %3113 = vmatpush1.bf16.msra.mxu0 %v1711
    %3114 = vmatprep.subr.bf16.mxu0 0
    %3115 = vmatpush1.bf16.msra.mxu0 0
    %3116 = vmatprep.subr.bf16.mxu0 0
    %3117 = vmatpush1.bf16.msra.mxu0 0
    %3118 = vmatprep.subr.bf16.mxu0 0
    %3119 = vmatpush1.bf16.msra.mxu0 0
    %3120 = vmatprep.subr.bf16.mxu0 0
    %3121 = vmatpush1.bf16.msra.mxu0 0
    %3122 = vmatprep.subr.bf16.mxu0 0
    %3123 = vmatpush1.bf16.msra.mxu0 0
    %3124 = vmatprep.subr.bf16.mxu0 0
    %3125 = vmatpush1.bf16.msra.mxu0 0
    %3126 = vmatprep.subr.bf16.mxu0 0
    %3127 = vmatpush1.bf16.msra.mxu0 0
    %3128 = vmatprep.subr.bf16.mxu0 0
    %3129 = vmatpush1.bf16.msra.mxu0 0
    %3130 = vmatprep.subr.bf16.mxu0 0
    %3131 = vmatpush1.bf16.msra.mxu0 0
    %3132 = vmatprep.subr.bf16.mxu0 0
    %3133 = vmatpush1.bf16.msra.mxu0 0
    %3134 = vmatprep.subr.bf16.mxu0 0
    %3135 = vmatpush1.bf16.msra.mxu0 0
    %3136 = vmatprep.subr.bf16.mxu0 0
    %3137 = vmatpush1.bf16.msra.mxu0 0
    %3138 = vmatprep.subr.bf16.mxu0 0
    %3139 = vmatpush1.bf16.msra.mxu0 0
    %3140 = vmatprep.subr.bf16.mxu0 0
    %3141 = vmatpush1.bf16.msra.mxu0 0
    %3142 = vmatprep.subr.bf16.mxu0 0
    %3143 = vmatpush1.bf16.msra.mxu0 0
    %3144 = vmatprep.mubr.bf16.mxu0 0
    %3145 = vmatmul.mubr.bf16.gmra.mrb[0].mxu0 %v3110
    %v3146 = vpop.f32.mrb[0].mxu0
    %v3147 = vadd.f32 0.0, %v3146
    %v3148 = vpop.f32.mrb[0].mxu0
    %v3149 = vpop.f32.mrb[0].mxu0
    %v3150 = vadd.f32 0.0, %v3149
    %v3151 = vpop.f32.mrb[0].mxu0
    %3152 = vdwg.mxu0
    %v3153 = vadd.f32 %v3103, %v3147
    %v3154 = vadd.f32 %v3104, %v3150
    %v3155 = vtanh.pop %v3153
    %v3156 = vtanh.pop %v3154
    %v3157 = vmul.f32 %v3155, 0.5
    %v3158 = vmul.f32 %v3156, 0.5
    %v3159 = vadd.f32 %v3157, 0.5
    %v3160 = vadd.f32 %v3158, 0.5
    %v3161 = vmul.f32 %v3159, %v3088
    %v3162 = vmul.f32 %v3160, %v3089
    %3165 = vrot.lane.b32.xlu0 %v3155, 80
    %v3166 = vpop.permute.xlu0 %3165
    %3167 = vrot.lane.b32.xlu0 %v3156, 80
    %v3168 = vpop.permute.xlu0 %3167
    %v3171 = vmul.f32 %v3159, %v3166
    %v3172 = vmul.f32 %v3160, %v3168
    %3175 = vrot.lane.b32.xlu0 %v3171, 16
    %v3176 = vpop.permute.xlu0 %3175
    %3177 = vrot.lane.b32.xlu0 %v3172, 16
    %v3178 = vpop.permute.xlu0 %3177
    %v3181 = vadd.f32 %v3161, %v3176
    %v3182 = vadd.f32 %v3162, %v3178
    %v3183 = vtanh.pop %v3181
    %v3184 = vtanh.pop %v3182
    %3187 = vrot.lane.b32.xlu0 %v3183, 16
    %v3188 = vpop.permute.xlu0 %3187
    %3189 = vrot.lane.b32.xlu0 %v3184, 16
    %v3190 = vpop.permute.xlu0 %3189
    %v3193 = vmul.f32 %v3159, %v3188
    %v3194 = vmul.f32 %v3160, %v3190
    %s3195 = scalar_lea.vmem [#allocation2], 256
    %v3196 = vld [vmem:[%s3195] sm:$0xff]
    %v3197 = vld [vmem:[%s3195 + $0x8] sm:$0xff]
    %v3198 = vpack.c.bf16 %v3194, %v3193
    %3200 = vrot.lane.b32.xlu0 %v3198, 96
    %v3201 = vpop.permute.xlu0 %3200
    %v3203 = vsel %vm1713, %v3201, 0
    %3205 = vmatprep.subr.bf16.mxu0 0
    %3206 = vmatpush1.bf16.msra.mxu0 %v1711
    %3207 = vmatprep.subr.bf16.mxu0 0
    %3208 = vmatpush1.bf16.msra.mxu0 0
    %3209 = vmatprep.subr.bf16.mxu0 0
    %3210 = vmatpush1.bf16.msra.mxu0 0
    %3211 = vmatprep.subr.bf16.mxu0 0
    %3212 = vmatpush1.bf16.msra.mxu0 0
    %3213 = vmatprep.subr.bf16.mxu0 0
    %3214 = vmatpush1.bf16.msra.mxu0 0
    %3215 = vmatprep.subr.bf16.mxu0 0
    %3216 = vmatpush1.bf16.msra.mxu0 0
    %3217 = vmatprep.subr.bf16.mxu0 0
    %3218 = vmatpush1.bf16.msra.mxu0 0
    %3219 = vmatprep.subr.bf16.mxu0 0
    %3220 = vmatpush1.bf16.msra.mxu0 0
    %3221 = vmatprep.subr.bf16.mxu0 0
    %3222 = vmatpush1.bf16.msra.mxu0 0
    %3223 = vmatprep.subr.bf16.mxu0 0
    %3224 = vmatpush1.bf16.msra.mxu0 0
    %3225 = vmatprep.subr.bf16.mxu0 0
    %3226 = vmatpush1.bf16.msra.mxu0 0
    %3227 = vmatprep.subr.bf16.mxu0 0
    %3228 = vmatpush1.bf16.msra.mxu0 0
    %3229 = vmatprep.subr.bf16.mxu0 0
    %3230 = vmatpush1.bf16.msra.mxu0 0
    %3231 = vmatprep.subr.bf16.mxu0 0
    %3232 = vmatpush1.bf16.msra.mxu0 0
    %3233 = vmatprep.subr.bf16.mxu0 0
    %3234 = vmatpush1.bf16.msra.mxu0 0
    %3235 = vmatprep.subr.bf16.mxu0 0
    %3236 = vmatpush1.bf16.msra.mxu0 0
    %3237 = vmatprep.mubr.bf16.mxu0 0
    %3238 = vmatmul.mubr.bf16.gmra.mrb[0].mxu0 %v3203
    %v3239 = vpop.f32.mrb[0].mxu0
    %v3240 = vadd.f32 0.0, %v3239
    %v3241 = vpop.f32.mrb[0].mxu0
    %v3242 = vpop.f32.mrb[0].mxu0
    %v3243 = vadd.f32 0.0, %v3242
    %v3244 = vpop.f32.mrb[0].mxu0
    %3245 = vdwg.mxu0
    %v3246 = vadd.f32 %v3196, %v3240
    %v3247 = vadd.f32 %v3197, %v3243
    %v3248 = vtanh.pop %v3246
    %v3249 = vtanh.pop %v3247
    %v3250 = vmul.f32 %v3248, 0.5
    %v3251 = vmul.f32 %v3249, 0.5
    %v3252 = vadd.f32 %v3250, 0.5
    %v3253 = vadd.f32 %v3251, 0.5
    %v3254 = vmul.f32 %v3252, %v3181
    %v3255 = vmul.f32 %v3253, %v3182
    %3258 = vrot.lane.b32.xlu0 %v3248, 80
    %v3259 = vpop.permute.xlu0 %3258
    %3260 = vrot.lane.b32.xlu0 %v3249, 80
    %v3261 = vpop.permute.xlu0 %3260
    %v3264 = vmul.f32 %v3252, %v3259
    %v3265 = vmul.f32 %v3253, %v3261
    %3268 = vrot.lane.b32.xlu0 %v3264, 16
    %v3269 = vpop.permute.xlu0 %3268
    %3270 = vrot.lane.b32.xlu0 %v3265, 16
    %v3271 = vpop.permute.xlu0 %3270
    %v3274 = vadd.f32 %v3254, %v3269
    %v3275 = vadd.f32 %v3255, %v3271
    %v3276 = vtanh.pop %v3274
    %v3277 = vtanh.pop %v3275
    %3280 = vrot.lane.b32.xlu0 %v3276, 16
    %v3281 = vpop.permute.xlu0 %3280
    %3282 = vrot.lane.b32.xlu0 %v3277, 16
    %v3283 = vpop.permute.xlu0 %3282
    %v3286 = vmul.f32 %v3252, %v3281
    %v3287 = vmul.f32 %v3253, %v3283
    %s3288 = scalar_lea.vmem [#allocation2], 272
    %v3289 = vld [vmem:[%s3288] sm:$0xff]
    %v3290 = vld [vmem:[%s3288 + $0x8] sm:$0xff]
    %v3291 = vpack.c.bf16 %v3287, %v3286
    %3293 = vrot.lane.b32.xlu0 %v3291, 96
    %v3294 = vpop.permute.xlu0 %3293
    %v3296 = vsel %vm1713, %v3294, 0
    %3298 = vmatprep.subr.bf16.mxu0 0
    %3299 = vmatpush1.bf16.msra.mxu0 %v1711
    %3300 = vmatprep.subr.bf16.mxu0 0
    %3301 = vmatpush1.bf16.msra.mxu0 0
    %3302 = vmatprep.subr.bf16.mxu0 0
    %3303 = vmatpush1.bf16.msra.mxu0 0
    %3304 = vmatprep.subr.bf16.mxu0 0
    %3305 = vmatpush1.bf16.msra.mxu0 0
    %3306 = vmatprep.subr.bf16.mxu0 0
    %3307 = vmatpush1.bf16.msra.mxu0 0
    %3308 = vmatprep.subr.bf16.mxu0 0
    %3309 = vmatpush1.bf16.msra.mxu0 0
    %3310 = vmatprep.subr.bf16.mxu0 0
    %3311 = vmatpush1.bf16.msra.mxu0 0
    %3312 = vmatprep.subr.bf16.mxu0 0
    %3313 = vmatpush1.bf16.msra.mxu0 0
    %3314 = vmatprep.subr.bf16.mxu0 0
    %3315 = vmatpush1.bf16.msra.mxu0 0
    %3316 = vmatprep.subr.bf16.mxu0 0
    %3317 = vmatpush1.bf16.msra.mxu0 0
    %3318 = vmatprep.subr.bf16.mxu0 0
    %3319 = vmatpush1.bf16.msra.mxu0 0
    %3320 = vmatprep.subr.bf16.mxu0 0
    %3321 = vmatpush1.bf16.msra.mxu0 0
    %3322 = vmatprep.subr.bf16.mxu0 0
    %3323 = vmatpush1.bf16.msra.mxu0 0
    %3324 = vmatprep.subr.bf16.mxu0 0
    %3325 = vmatpush1.bf16.msra.mxu0 0
    %3326 = vmatprep.subr.bf16.mxu0 0
    %3327 = vmatpush1.bf16.msra.mxu0 0
    %3328 = vmatprep.subr.bf16.mxu0 0
    %3329 = vmatpush1.bf16.msra.mxu0 0
    %3330 = vmatprep.mubr.bf16.mxu0 0
    %3331 = vmatmul.mubr.bf16.gmra.mrb[0].mxu0 %v3296
    %v3332 = vpop.f32.mrb[0].mxu0
    %v3333 = vadd.f32 0.0, %v3332
    %v3334 = vpop.f32.mrb[0].mxu0
    %v3335 = vpop.f32.mrb[0].mxu0
    %v3336 = vadd.f32 0.0, %v3335
    %v3337 = vpop.f32.mrb[0].mxu0
    %3338 = vdwg.mxu0
    %v3339 = vadd.f32 %v3289, %v3333
    %v3340 = vadd.f32 %v3290, %v3336
    %v3341 = vtanh.pop %v3339
    %v3342 = vtanh.pop %v3340
    %v3343 = vmul.f32 %v3341, 0.5
    %v3344 = vmul.f32 %v3342, 0.5
    %v3345 = vadd.f32 %v3343, 0.5
    %v3346 = vadd.f32 %v3344, 0.5
    %v3347 = vmul.f32 %v3345, %v3274
    %v3348 = vmul.f32 %v3346, %v3275
    %3351 = vrot.lane.b32.xlu0 %v3341, 80
    %v3352 = vpop.permute.xlu0 %3351
    %3353 = vrot.lane.b32.xlu0 %v3342, 80
    %v3354 = vpop.permute.xlu0 %3353
    %v3357 = vmul.f32 %v3345, %v3352
    %v3358 = vmul.f32 %v3346, %v3354
    %3361 = vrot.lane.b32.xlu0 %v3357, 16
    %v3362 = vpop.permute.xlu0 %3361
    %3363 = vrot.lane.b32.xlu0 %v3358, 16
    %v3364 = vpop.permute.xlu0 %3363
    %v3367 = vadd.f32 %v3347, %v3362
    %v3368 = vadd.f32 %v3348, %v3364
    %v3369 = vtanh.pop %v3367
    %v3370 = vtanh.pop %v3368
    %3373 = vrot.lane.b32.xlu0 %v3369, 16
    %v3374 = vpop.permute.xlu0 %3373
    %3375 = vrot.lane.b32.xlu0 %v3370, 16
    %v3376 = vpop.permute.xlu0 %3375
    %v3379 = vmul.f32 %v3345, %v3374
    %v3380 = vmul.f32 %v3346, %v3376
    %s3381 = scalar_lea.vmem [#allocation2], 288
    %v3382 = vld [vmem:[%s3381] sm:$0xff]
    %v3383 = vld [vmem:[%s3381 + $0x8] sm:$0xff]
    %v3384 = vpack.c.bf16 %v3380, %v3379
    %3386 = vrot.lane.b32.xlu0 %v3384, 96
    %v3387 = vpop.permute.xlu0 %3386
    %v3389 = vsel %vm1713, %v3387, 0
    %3391 = vmatprep.subr.bf16.mxu0 0
    %3392 = vmatpush1.bf16.msra.mxu0 %v1711
    %3393 = vmatprep.subr.bf16.mxu0 0
    %3394 = vmatpush1.bf16.msra.mxu0 0
    %3395 = vmatprep.subr.bf16.mxu0 0
    %3396 = vmatpush1.bf16.msra.mxu0 0
    %3397 = vmatprep.subr.bf16.mxu0 0
    %3398 = vmatpush1.bf16.msra.mxu0 0
    %3399 = vmatprep.subr.bf16.mxu0 0
    %3400 = vmatpush1.bf16.msra.mxu0 0
    %3401 = vmatprep.subr.bf16.mxu0 0
    %3402 = vmatpush1.bf16.msra.mxu0 0
    %3403 = vmatprep.subr.bf16.mxu0 0
    %3404 = vmatpush1.bf16.msra.mxu0 0
    %3405 = vmatprep.subr.bf16.mxu0 0
    %3406 = vmatpush1.bf16.msra.mxu0 0
    %3407 = vmatprep.subr.bf16.mxu0 0
    %3408 = vmatpush1.bf16.msra.mxu0 0
    %3409 = vmatprep.subr.bf16.mxu0 0
    %3410 = vmatpush1.bf16.msra.mxu0 0
    %3411 = vmatprep.subr.bf16.mxu0 0
    %3412 = vmatpush1.bf16.msra.mxu0 0
    %3413 = vmatprep.subr.bf16.mxu0 0
    %3414 = vmatpush1.bf16.msra.mxu0 0
    %3415 = vmatprep.subr.bf16.mxu0 0
    %3416 = vmatpush1.bf16.msra.mxu0 0
    %3417 = vmatprep.subr.bf16.mxu0 0
    %3418 = vmatpush1.bf16.msra.mxu0 0
    %3419 = vmatprep.subr.bf16.mxu0 0
    %3420 = vmatpush1.bf16.msra.mxu0 0
    %3421 = vmatprep.subr.bf16.mxu0 0
    %3422 = vmatpush1.bf16.msra.mxu0 0
    %3423 = vmatprep.mubr.bf16.mxu0 0
    %3424 = vmatmul.mubr.bf16.gmra.mrb[0].mxu0 %v3389
    %v3425 = vpop.f32.mrb[0].mxu0
    %v3426 = vadd.f32 0.0, %v3425
    %v3427 = vpop.f32.mrb[0].mxu0
    %v3428 = vpop.f32.mrb[0].mxu0
    %v3429 = vadd.f32 0.0, %v3428
    %v3430 = vpop.f32.mrb[0].mxu0
    %3431 = vdwg.mxu0
    %v3432 = vadd.f32 %v3382, %v3426
    %v3433 = vadd.f32 %v3383, %v3429
    %v3434 = vtanh.pop %v3432
    %v3435 = vtanh.pop %v3433
    %v3436 = vmul.f32 %v3434, 0.5
    %v3437 = vmul.f32 %v3435, 0.5
    %v3438 = vadd.f32 %v3436, 0.5
    %v3439 = vadd.f32 %v3437, 0.5
    %v3440 = vmul.f32 %v3438, %v3367
    %v3441 = vmul.f32 %v3439, %v3368
    %3444 = vrot.lane.b32.xlu0 %v3434, 80
    %v3445 = vpop.permute.xlu0 %3444
    %3446 = vrot.lane.b32.xlu0 %v3435, 80
    %v3447 = vpop.permute.xlu0 %3446
    %v3450 = vmul.f32 %v3438, %v3445
    %v3451 = vmul.f32 %v3439, %v3447
    %3454 = vrot.lane.b32.xlu0 %v3450, 16
    %v3455 = vpop.permute.xlu0 %3454
    %3456 = vrot.lane.b32.xlu0 %v3451, 16
    %v3457 = vpop.permute.xlu0 %3456
    %v3460 = vadd.f32 %v3440, %v3455
    %v3461 = vadd.f32 %v3441, %v3457
    %v3462 = vtanh.pop %v3460
    %v3463 = vtanh.pop %v3461
    %3466 = vrot.lane.b32.xlu0 %v3462, 16
    %v3467 = vpop.permute.xlu0 %3466
    %3468 = vrot.lane.b32.xlu0 %v3463, 16
    %v3469 = vpop.permute.xlu0 %3468
    %v3472 = vmul.f32 %v3438, %v3467
    %v3473 = vmul.f32 %v3439, %v3469
    %s3474 = scalar_lea.vmem [#allocation2], 304
    %v3475 = vld [vmem:[%s3474] sm:$0xff]
    %v3476 = vld [vmem:[%s3474 + $0x8] sm:$0xff]
    %v3477 = vpack.c.bf16 %v3473, %v3472
    %3479 = vrot.lane.b32.xlu0 %v3477, 96
    %v3480 = vpop.permute.xlu0 %3479
    %v3482 = vsel %vm1713, %v3480, 0
    %3484 = vmatprep.subr.bf16.mxu0 0
    %3485 = vmatpush1.bf16.msra.mxu0 %v1711
    %3486 = vmatprep.subr.bf16.mxu0 0
    %3487 = vmatpush1.bf16.msra.mxu0 0
    %3488 = vmatprep.subr.bf16.mxu0 0
    %3489 = vmatpush1.bf16.msra.mxu0 0
    %3490 = vmatprep.subr.bf16.mxu0 0
    %3491 = vmatpush1.bf16.msra.mxu0 0
    %3492 = vmatprep.subr.bf16.mxu0 0
    %3493 = vmatpush1.bf16.msra.mxu0 0
    %3494 = vmatprep.subr.bf16.mxu0 0
    %3495 = vmatpush1.bf16.msra.mxu0 0
    %3496 = vmatprep.subr.bf16.mxu0 0
    %3497 = vmatpush1.bf16.msra.mxu0 0
    %3498 = vmatprep.subr.bf16.mxu0 0
    %3499 = vmatpush1.bf16.msra.mxu0 0
    %3500 = vmatprep.subr.bf16.mxu0 0
    %3501 = vmatpush1.bf16.msra.mxu0 0
    %3502 = vmatprep.subr.bf16.mxu0 0
    %3503 = vmatpush1.bf16.msra.mxu0 0
    %3504 = vmatprep.subr.bf16.mxu0 0
    %3505 = vmatpush1.bf16.msra.mxu0 0
    %3506 = vmatprep.subr.bf16.mxu0 0
    %3507 = vmatpush1.bf16.msra.mxu0 0
    %3508 = vmatprep.subr.bf16.mxu0 0
    %3509 = vmatpush1.bf16.msra.mxu0 0
    %3510 = vmatprep.subr.bf16.mxu0 0
    %3511 = vmatpush1.bf16.msra.mxu0 0
    %3512 = vmatprep.subr.bf16.mxu0 0
    %3513 = vmatpush1.bf16.msra.mxu0 0
    %3514 = vmatprep.subr.bf16.mxu0 0
    %3515 = vmatpush1.bf16.msra.mxu0 0
    %3516 = vmatprep.mubr.bf16.mxu0 0
    %3517 = vmatmul.mubr.bf16.gmra.mrb[0].mxu0 %v3482
    %v3518 = vpop.f32.mrb[0].mxu0
    %v3519 = vadd.f32 0.0, %v3518
    %v3520 = vpop.f32.mrb[0].mxu0
    %v3521 = vpop.f32.mrb[0].mxu0
    %v3522 = vadd.f32 0.0, %v3521
    %v3523 = vpop.f32.mrb[0].mxu0
    %3524 = vdwg.mxu0
    %v3525 = vadd.f32 %v3475, %v3519
    %v3526 = vadd.f32 %v3476, %v3522
    %v3527 = vtanh.pop %v3525
    %v3528 = vtanh.pop %v3526
    %v3529 = vmul.f32 %v3527, 0.5
    %v3530 = vmul.f32 %v3528, 0.5
    %v3531 = vadd.f32 %v3529, 0.5
    %v3532 = vadd.f32 %v3530, 0.5
    %v3533 = vmul.f32 %v3531, %v3460
    %v3534 = vmul.f32 %v3532, %v3461
    %3537 = vrot.lane.b32.xlu0 %v3527, 80
    %v3538 = vpop.permute.xlu0 %3537
    %3539 = vrot.lane.b32.xlu0 %v3528, 80
    %v3540 = vpop.permute.xlu0 %3539
    %v3543 = vmul.f32 %v3531, %v3538
    %v3544 = vmul.f32 %v3532, %v3540
    %3547 = vrot.lane.b32.xlu0 %v3543, 16
    %v3548 = vpop.permute.xlu0 %3547
    %3549 = vrot.lane.b32.xlu0 %v3544, 16
    %v3550 = vpop.permute.xlu0 %3549
    %v3553 = vadd.f32 %v3533, %v3548
    %v3554 = vadd.f32 %v3534, %v3550
    %v3555 = vtanh.pop %v3553
    %v3556 = vtanh.pop %v3554
    %3559 = vrot.lane.b32.xlu0 %v3555, 16
    %v3560 = vpop.permute.xlu0 %3559
    %3561 = vrot.lane.b32.xlu0 %v3556, 16
    %v3562 = vpop.permute.xlu0 %3561
    %v3565 = vmul.f32 %v3531, %v3560
    %v3566 = vmul.f32 %v3532, %v3562
    %s3567 = scalar_lea.vmem [#allocation2], 320
    %v3568 = vld [vmem:[%s3567] sm:$0xff]
    %v3569 = vld [vmem:[%s3567 + $0x8] sm:$0xff]
    %v3570 = vpack.c.bf16 %v3566, %v3565
    %3572 = vrot.lane.b32.xlu0 %v3570, 96
    %v3573 = vpop.permute.xlu0 %3572
    %v3575 = vsel %vm1713, %v3573, 0
    %3577 = vmatprep.subr.bf16.mxu0 0
    %3578 = vmatpush1.bf16.msra.mxu0 %v1711
    %3579 = vmatprep.subr.bf16.mxu0 0
    %3580 = vmatpush1.bf16.msra.mxu0 0
    %3581 = vmatprep.subr.bf16.mxu0 0
    %3582 = vmatpush1.bf16.msra.mxu0 0
    %3583 = vmatprep.subr.bf16.mxu0 0
    %3584 = vmatpush1.bf16.msra.mxu0 0
    %3585 = vmatprep.subr.bf16.mxu0 0
    %3586 = vmatpush1.bf16.msra.mxu0 0
    %3587 = vmatprep.subr.bf16.mxu0 0
    %3588 = vmatpush1.bf16.msra.mxu0 0
    %3589 = vmatprep.subr.bf16.mxu0 0
    %3590 = vmatpush1.bf16.msra.mxu0 0
    %3591 = vmatprep.subr.bf16.mxu0 0
    %3592 = vmatpush1.bf16.msra.mxu0 0
    %3593 = vmatprep.subr.bf16.mxu0 0
    %3594 = vmatpush1.bf16.msra.mxu0 0
    %3595 = vmatprep.subr.bf16.mxu0 0
    %3596 = vmatpush1.bf16.msra.mxu0 0
    %3597 = vmatprep.subr.bf16.mxu0 0
    %3598 = vmatpush1.bf16.msra.mxu0 0
    %3599 = vmatprep.subr.bf16.mxu0 0
    %3600 = vmatpush1.bf16.msra.mxu0 0
    %3601 = vmatprep.subr.bf16.mxu0 0
    %3602 = vmatpush1.bf16.msra.mxu0 0
    %3603 = vmatprep.subr.bf16.mxu0 0
    %3604 = vmatpush1.bf16.msra.mxu0 0
    %3605 = vmatprep.subr.bf16.mxu0 0
    %3606 = vmatpush1.bf16.msra.mxu0 0
    %3607 = vmatprep.subr.bf16.mxu0 0
    %3608 = vmatpush1.bf16.msra.mxu0 0
    %3609 = vmatprep.mubr.bf16.mxu0 0
    %3610 = vmatmul.mubr.bf16.gmra.mrb[0].mxu0 %v3575
    %v3611 = vpop.f32.mrb[0].mxu0
    %v3612 = vadd.f32 0.0, %v3611
    %v3613 = vpop.f32.mrb[0].mxu0
    %v3614 = vpop.f32.mrb[0].mxu0
    %v3615 = vadd.f32 0.0, %v3614
    %v3616 = vpop.f32.mrb[0].mxu0
    %3617 = vdwg.mxu0
    %v3618 = vadd.f32 %v3568, %v3612
    %v3619 = vadd.f32 %v3569, %v3615
    %v3620 = vtanh.pop %v3618
    %v3621 = vtanh.pop %v3619
    %v3622 = vmul.f32 %v3620, 0.5
    %v3623 = vmul.f32 %v3621, 0.5
    %v3624 = vadd.f32 %v3622, 0.5
    %v3625 = vadd.f32 %v3623, 0.5
    %v3626 = vmul.f32 %v3624, %v3553
    %v3627 = vmul.f32 %v3625, %v3554
    %3630 = vrot.lane.b32.xlu0 %v3620, 80
    %v3631 = vpop.permute.xlu0 %3630
    %3632 = vrot.lane.b32.xlu0 %v3621, 80
    %v3633 = vpop.permute.xlu0 %3632
    %v3636 = vmul.f32 %v3624, %v3631
    %v3637 = vmul.f32 %v3625, %v3633
    %3640 = vrot.lane.b32.xlu0 %v3636, 16
    %v3641 = vpop.permute.xlu0 %3640
    %3642 = vrot.lane.b32.xlu0 %v3637, 16
    %v3643 = vpop.permute.xlu0 %3642
    %v3646 = vadd.f32 %v3626, %v3641
    %v3647 = vadd.f32 %v3627, %v3643
    %v3648 = vtanh.pop %v3646
    %v3649 = vtanh.pop %v3647
    %3652 = vrot.lane.b32.xlu0 %v3648, 16
    %v3653 = vpop.permute.xlu0 %3652
    %3654 = vrot.lane.b32.xlu0 %v3649, 16
    %v3655 = vpop.permute.xlu0 %3654
    %v3658 = vmul.f32 %v3624, %v3653
    %v3659 = vmul.f32 %v3625, %v3655
    %s3660 = scalar_lea.vmem [#allocation2], 336
    %v3661 = vld [vmem:[%s3660] sm:$0xff]
    %v3662 = vld [vmem:[%s3660 + $0x8] sm:$0xff]
    %v3663 = vpack.c.bf16 %v3659, %v3658
    %3665 = vrot.lane.b32.xlu0 %v3663, 96
    %v3666 = vpop.permute.xlu0 %3665
    %v3668 = vsel %vm1713, %v3666, 0
    %3670 = vmatprep.subr.bf16.mxu0 0
    %3671 = vmatpush1.bf16.msra.mxu0 %v1711
    %3672 = vmatprep.subr.bf16.mxu0 0
    %3673 = vmatpush1.bf16.msra.mxu0 0
    %3674 = vmatprep.subr.bf16.mxu0 0
    %3675 = vmatpush1.bf16.msra.mxu0 0
    %3676 = vmatprep.subr.bf16.mxu0 0
    %3677 = vmatpush1.bf16.msra.mxu0 0
    %3678 = vmatprep.subr.bf16.mxu0 0
    %3679 = vmatpush1.bf16.msra.mxu0 0
    %3680 = vmatprep.subr.bf16.mxu0 0
    %3681 = vmatpush1.bf16.msra.mxu0 0
    %3682 = vmatprep.subr.bf16.mxu0 0
    %3683 = vmatpush1.bf16.msra.mxu0 0
    %3684 = vmatprep.subr.bf16.mxu0 0
    %3685 = vmatpush1.bf16.msra.mxu0 0
    %3686 = vmatprep.subr.bf16.mxu0 0
    %3687 = vmatpush1.bf16.msra.mxu0 0
    %3688 = vmatprep.subr.bf16.mxu0 0
    %3689 = vmatpush1.bf16.msra.mxu0 0
    %3690 = vmatprep.subr.bf16.mxu0 0
    %3691 = vmatpush1.bf16.msra.mxu0 0
    %3692 = vmatprep.subr.bf16.mxu0 0
    %3693 = vmatpush1.bf16.msra.mxu0 0
    %3694 = vmatprep.subr.bf16.mxu0 0
    %3695 = vmatpush1.bf16.msra.mxu0 0
    %3696 = vmatprep.subr.bf16.mxu0 0
    %3697 = vmatpush1.bf16.msra.mxu0 0
    %3698 = vmatprep.subr.bf16.mxu0 0
    %3699 = vmatpush1.bf16.msra.mxu0 0
    %3700 = vmatprep.subr.bf16.mxu0 0
    %3701 = vmatpush1.bf16.msra.mxu0 0
    %3702 = vmatprep.mubr.bf16.mxu0 0
    %3703 = vmatmul.mubr.bf16.gmra.mrb[0].mxu0 %v3668
    %v3704 = vpop.f32.mrb[0].mxu0
    %v3705 = vadd.f32 0.0, %v3704
    %v3706 = vpop.f32.mrb[0].mxu0
    %v3707 = vpop.f32.mrb[0].mxu0
    %v3708 = vadd.f32 0.0, %v3707
    %v3709 = vpop.f32.mrb[0].mxu0
    %3710 = vdwg.mxu0
    %v3711 = vadd.f32 %v3661, %v3705
    %v3712 = vadd.f32 %v3662, %v3708
    %v3713 = vtanh.pop %v3711
    %v3714 = vtanh.pop %v3712
    %v3715 = vmul.f32 %v3713, 0.5
    %v3716 = vmul.f32 %v3714, 0.5
    %v3717 = vadd.f32 %v3715, 0.5
    %v3718 = vadd.f32 %v3716, 0.5
    %v3719 = vmul.f32 %v3717, %v3646
    %v3720 = vmul.f32 %v3718, %v3647
    %3723 = vrot.lane.b32.xlu0 %v3713, 80
    %v3724 = vpop.permute.xlu0 %3723
    %3725 = vrot.lane.b32.xlu0 %v3714, 80
    %v3726 = vpop.permute.xlu0 %3725
    %v3729 = vmul.f32 %v3717, %v3724
    %v3730 = vmul.f32 %v3718, %v3726
    %3733 = vrot.lane.b32.xlu0 %v3729, 16
    %v3734 = vpop.permute.xlu0 %3733
    %3735 = vrot.lane.b32.xlu0 %v3730, 16
    %v3736 = vpop.permute.xlu0 %3735
    %v3739 = vadd.f32 %v3719, %v3734
    %v3740 = vadd.f32 %v3720, %v3736
    %v3741 = vtanh.pop %v3739
    %v3742 = vtanh.pop %v3740
    %3745 = vrot.lane.b32.xlu0 %v3741, 16
    %v3746 = vpop.permute.xlu0 %3745
    %3747 = vrot.lane.b32.xlu0 %v3742, 16
    %v3748 = vpop.permute.xlu0 %3747
    %v3751 = vmul.f32 %v3717, %v3746
    %v3752 = vmul.f32 %v3718, %v3748
    %s3753 = scalar_lea.vmem [#allocation2], 352
    %v3754 = vld [vmem:[%s3753] sm:$0xff]
    %v3755 = vld [vmem:[%s3753 + $0x8] sm:$0xff]
    %v3756 = vpack.c.bf16 %v3752, %v3751
    %3758 = vrot.lane.b32.xlu0 %v3756, 96
    %v3759 = vpop.permute.xlu0 %3758
    %v3761 = vsel %vm1713, %v3759, 0
    %3763 = vmatprep.subr.bf16.mxu0 0
    %3764 = vmatpush1.bf16.msra.mxu0 %v1711
    %3765 = vmatprep.subr.bf16.mxu0 0
    %3766 = vmatpush1.bf16.msra.mxu0 0
    %3767 = vmatprep.subr.bf16.mxu0 0
    %3768 = vmatpush1.bf16.msra.mxu0 0
    %3769 = vmatprep.subr.bf16.mxu0 0
    %3770 = vmatpush1.bf16.msra.mxu0 0
    %3771 = vmatprep.subr.bf16.mxu0 0
    %3772 = vmatpush1.bf16.msra.mxu0 0
    %3773 = vmatprep.subr.bf16.mxu0 0
    %3774 = vmatpush1.bf16.msra.mxu0 0
    %3775 = vmatprep.subr.bf16.mxu0 0
    %3776 = vmatpush1.bf16.msra.mxu0 0
    %3777 = vmatprep.subr.bf16.mxu0 0
    %3778 = vmatpush1.bf16.msra.mxu0 0
    %3779 = vmatprep.subr.bf16.mxu0 0
    %3780 = vmatpush1.bf16.msra.mxu0 0
    %3781 = vmatprep.subr.bf16.mxu0 0
    %3782 = vmatpush1.bf16.msra.mxu0 0
    %3783 = vmatprep.subr.bf16.mxu0 0
    %3784 = vmatpush1.bf16.msra.mxu0 0
    %3785 = vmatprep.subr.bf16.mxu0 0
    %3786 = vmatpush1.bf16.msra.mxu0 0
    %3787 = vmatprep.subr.bf16.mxu0 0
    %3788 = vmatpush1.bf16.msra.mxu0 0
    %3789 = vmatprep.subr.bf16.mxu0 0
    %3790 = vmatpush1.bf16.msra.mxu0 0
    %3791 = vmatprep.subr.bf16.mxu0 0
    %3792 = vmatpush1.bf16.msra.mxu0 0
    %3793 = vmatprep.subr.bf16.mxu0 0
    %3794 = vmatpush1.bf16.msra.mxu0 0
    %3795 = vmatprep.mubr.bf16.mxu0 0
    %3796 = vmatmul.mubr.bf16.gmra.mrb[0].mxu0 %v3761
    %v3797 = vpop.f32.mrb[0].mxu0
    %v3798 = vadd.f32 0.0, %v3797
    %v3799 = vpop.f32.mrb[0].mxu0
    %v3800 = vpop.f32.mrb[0].mxu0
    %v3801 = vadd.f32 0.0, %v3800
    %v3802 = vpop.f32.mrb[0].mxu0
    %3803 = vdwg.mxu0
    %v3804 = vadd.f32 %v3754, %v3798
    %v3805 = vadd.f32 %v3755, %v3801
    %v3806 = vtanh.pop %v3804
    %v3807 = vtanh.pop %v3805
    %v3808 = vmul.f32 %v3806, 0.5
    %v3809 = vmul.f32 %v3807, 0.5
    %v3810 = vadd.f32 %v3808, 0.5
    %v3811 = vadd.f32 %v3809, 0.5
    %v3812 = vmul.f32 %v3810, %v3739
    %v3813 = vmul.f32 %v3811, %v3740
    %3816 = vrot.lane.b32.xlu0 %v3806, 80
    %v3817 = vpop.permute.xlu0 %3816
    %3818 = vrot.lane.b32.xlu0 %v3807, 80
    %v3819 = vpop.permute.xlu0 %3818
    %v3822 = vmul.f32 %v3810, %v3817
    %v3823 = vmul.f32 %v3811, %v3819
    %3826 = vrot.lane.b32.xlu0 %v3822, 16
    %v3827 = vpop.permute.xlu0 %3826
    %3828 = vrot.lane.b32.xlu0 %v3823, 16
    %v3829 = vpop.permute.xlu0 %3828
    %v3832 = vadd.f32 %v3812, %v3827
    %v3833 = vadd.f32 %v3813, %v3829
    %v3834 = vtanh.pop %v3832
    %v3835 = vtanh.pop %v3833
    %3838 = vrot.lane.b32.xlu0 %v3834, 16
    %v3839 = vpop.permute.xlu0 %3838
    %3840 = vrot.lane.b32.xlu0 %v3835, 16
    %v3841 = vpop.permute.xlu0 %3840
    %v3844 = vmul.f32 %v3810, %v3839
    %v3845 = vmul.f32 %v3811, %v3841
    %s3846 = scalar_lea.vmem [#allocation2], 368
    %v3847 = vld [vmem:[%s3846] sm:$0xff]
    %v3848 = vld [vmem:[%s3846 + $0x8] sm:$0xff]
    %v3849 = vpack.c.bf16 %v3845, %v3844
    %3851 = vrot.lane.b32.xlu0 %v3849, 96
    %v3852 = vpop.permute.xlu0 %3851
    %v3854 = vsel %vm1713, %v3852, 0
    %3856 = vmatprep.subr.bf16.mxu0 0
    %3857 = vmatpush1.bf16.msra.mxu0 %v1711
    %3858 = vmatprep.subr.bf16.mxu0 0
    %3859 = vmatpush1.bf16.msra.mxu0 0
    %3860 = vmatprep.subr.bf16.mxu0 0
    %3861 = vmatpush1.bf16.msra.mxu0 0
    %3862 = vmatprep.subr.bf16.mxu0 0
    %3863 = vmatpush1.bf16.msra.mxu0 0
    %3864 = vmatprep.subr.bf16.mxu0 0
    %3865 = vmatpush1.bf16.msra.mxu0 0
    %3866 = vmatprep.subr.bf16.mxu0 0
    %3867 = vmatpush1.bf16.msra.mxu0 0
    %3868 = vmatprep.subr.bf16.mxu0 0
    %3869 = vmatpush1.bf16.msra.mxu0 0
    %3870 = vmatprep.subr.bf16.mxu0 0
    %3871 = vmatpush1.bf16.msra.mxu0 0
    %3872 = vmatprep.subr.bf16.mxu0 0
    %3873 = vmatpush1.bf16.msra.mxu0 0
    %3874 = vmatprep.subr.bf16.mxu0 0
    %3875 = vmatpush1.bf16.msra.mxu0 0
    %3876 = vmatprep.subr.bf16.mxu0 0
    %3877 = vmatpush1.bf16.msra.mxu0 0
    %3878 = vmatprep.subr.bf16.mxu0 0
    %3879 = vmatpush1.bf16.msra.mxu0 0
    %3880 = vmatprep.subr.bf16.mxu0 0
    %3881 = vmatpush1.bf16.msra.mxu0 0
    %3882 = vmatprep.subr.bf16.mxu0 0
    %3883 = vmatpush1.bf16.msra.mxu0 0
    %3884 = vmatprep.subr.bf16.mxu0 0
    %3885 = vmatpush1.bf16.msra.mxu0 0
    %3886 = vmatprep.subr.bf16.mxu0 0
    %3887 = vmatpush1.bf16.msra.mxu0 0
    %3888 = vmatprep.mubr.bf16.mxu0 0
    %3889 = vmatmul.mubr.bf16.gmra.mrb[0].mxu0 %v3854
    %v3890 = vpop.f32.mrb[0].mxu0
    %v3891 = vadd.f32 0.0, %v3890
    %v3892 = vpop.f32.mrb[0].mxu0
    %v3893 = vpop.f32.mrb[0].mxu0
    %v3894 = vadd.f32 0.0, %v3893
    %v3895 = vpop.f32.mrb[0].mxu0
    %3896 = vdwg.mxu0
    %v3897 = vadd.f32 %v3847, %v3891
    %v3898 = vadd.f32 %v3848, %v3894
    %v3899 = vtanh.pop %v3897
    %v3900 = vtanh.pop %v3898
    %v3901 = vmul.f32 %v3899, 0.5
    %v3902 = vmul.f32 %v3900, 0.5
    %v3903 = vadd.f32 %v3901, 0.5
    %v3904 = vadd.f32 %v3902, 0.5
    %v3905 = vmul.f32 %v3903, %v3832
    %v3906 = vmul.f32 %v3904, %v3833
    %3909 = vrot.lane.b32.xlu0 %v3899, 80
    %v3910 = vpop.permute.xlu0 %3909
    %3911 = vrot.lane.b32.xlu0 %v3900, 80
    %v3912 = vpop.permute.xlu0 %3911
    %v3915 = vmul.f32 %v3903, %v3910
    %v3916 = vmul.f32 %v3904, %v3912
    %3919 = vrot.lane.b32.xlu0 %v3915, 16
    %v3920 = vpop.permute.xlu0 %3919
    %3921 = vrot.lane.b32.xlu0 %v3916, 16
    %v3922 = vpop.permute.xlu0 %3921
    %v3925 = vadd.f32 %v3905, %v3920
    %v3926 = vadd.f32 %v3906, %v3922
    %v3927 = vtanh.pop %v3925
    %v3928 = vtanh.pop %v3926
    %3931 = vrot.lane.b32.xlu0 %v3927, 16
    %v3932 = vpop.permute.xlu0 %3931
    %3933 = vrot.lane.b32.xlu0 %v3928, 16
    %v3934 = vpop.permute.xlu0 %3933
    %v3937 = vmul.f32 %v3903, %v3932
    %v3938 = vmul.f32 %v3904, %v3934
    %s3939 = scalar_lea.vmem [#allocation2], 384
    %v3940 = vld [vmem:[%s3939] sm:$0xff]
    %v3941 = vld [vmem:[%s3939 + $0x8] sm:$0xff]
    %v3942 = vpack.c.bf16 %v3938, %v3937
    %3944 = vrot.lane.b32.xlu0 %v3942, 96
    %v3945 = vpop.permute.xlu0 %3944
    %v3947 = vsel %vm1713, %v3945, 0
    %3949 = vmatprep.subr.bf16.mxu0 0
    %3950 = vmatpush1.bf16.msra.mxu0 %v1711
    %3951 = vmatprep.subr.bf16.mxu0 0
    %3952 = vmatpush1.bf16.msra.mxu0 0
    %3953 = vmatprep.subr.bf16.mxu0 0
    %3954 = vmatpush1.bf16.msra.mxu0 0
    %3955 = vmatprep.subr.bf16.mxu0 0
    %3956 = vmatpush1.bf16.msra.mxu0 0
    %3957 = vmatprep.subr.bf16.mxu0 0
    %3958 = vmatpush1.bf16.msra.mxu0 0
    %3959 = vmatprep.subr.bf16.mxu0 0
    %3960 = vmatpush1.bf16.msra.mxu0 0
    %3961 = vmatprep.subr.bf16.mxu0 0
    %3962 = vmatpush1.bf16.msra.mxu0 0
    %3963 = vmatprep.subr.bf16.mxu0 0
    %3964 = vmatpush1.bf16.msra.mxu0 0
    %3965 = vmatprep.subr.bf16.mxu0 0
    %3966 = vmatpush1.bf16.msra.mxu0 0
    %3967 = vmatprep.subr.bf16.mxu0 0
    %3968 = vmatpush1.bf16.msra.mxu0 0
    %3969 = vmatprep.subr.bf16.mxu0 0
    %3970 = vmatpush1.bf16.msra.mxu0 0
    %3971 = vmatprep.subr.bf16.mxu0 0
    %3972 = vmatpush1.bf16.msra.mxu0 0
    %3973 = vmatprep.subr.bf16.mxu0 0
    %3974 = vmatpush1.bf16.msra.mxu0 0
    %3975 = vmatprep.subr.bf16.mxu0 0
    %3976 = vmatpush1.bf16.msra.mxu0 0
    %3977 = vmatprep.subr.bf16.mxu0 0
    %3978 = vmatpush1.bf16.msra.mxu0 0
    %3979 = vmatprep.subr.bf16.mxu0 0
    %3980 = vmatpush1.bf16.msra.mxu0 0
    %3981 = vmatprep.mubr.bf16.mxu0 0
    %3982 = vmatmul.mubr.bf16.gmra.mrb[0].mxu0 %v3947
    %v3983 = vpop.f32.mrb[0].mxu0
    %v3984 = vadd.f32 0.0, %v3983
    %v3985 = vpop.f32.mrb[0].mxu0
    %v3986 = vpop.f32.mrb[0].mxu0
    %v3987 = vadd.f32 0.0, %v3986
    %v3988 = vpop.f32.mrb[0].mxu0
    %3989 = vdwg.mxu0
    %v3990 = vadd.f32 %v3940, %v3984
    %v3991 = vadd.f32 %v3941, %v3987
    %v3992 = vtanh.pop %v3990
    %v3993 = vtanh.pop %v3991
    %v3994 = vmul.f32 %v3992, 0.5
    %v3995 = vmul.f32 %v3993, 0.5
    %v3996 = vadd.f32 %v3994, 0.5
    %v3997 = vadd.f32 %v3995, 0.5
    %v3998 = vmul.f32 %v3996, %v3925
    %v3999 = vmul.f32 %v3997, %v3926
    %4002 = vrot.lane.b32.xlu0 %v3992, 80
    %v4003 = vpop.permute.xlu0 %4002
    %4004 = vrot.lane.b32.xlu0 %v3993, 80
    %v4005 = vpop.permute.xlu0 %4004
    %v4008 = vmul.f32 %v3996, %v4003
    %v4009 = vmul.f32 %v3997, %v4005
    %4012 = vrot.lane.b32.xlu0 %v4008, 16
    %v4013 = vpop.permute.xlu0 %4012
    %4014 = vrot.lane.b32.xlu0 %v4009, 16
    %v4015 = vpop.permute.xlu0 %4014
    %v4018 = vadd.f32 %v3998, %v4013
    %v4019 = vadd.f32 %v3999, %v4015
    %v4020 = vtanh.pop %v4018
    %v4021 = vtanh.pop %v4019
    %4024 = vrot.lane.b32.xlu0 %v4020, 16
    %v4025 = vpop.permute.xlu0 %4024
    %4026 = vrot.lane.b32.xlu0 %v4021, 16
    %v4027 = vpop.permute.xlu0 %4026
    %v4030 = vmul.f32 %v3996, %v4025
    %v4031 = vmul.f32 %v3997, %v4027
    %s4032 = scalar_lea.vmem [#allocation2], 400
    %v4033 = vld [vmem:[%s4032] sm:$0xff]
    %v4034 = vld [vmem:[%s4032 + $0x8] sm:$0xff]
    %v4035 = vpack.c.bf16 %v4031, %v4030
    %4037 = vrot.lane.b32.xlu0 %v4035, 96
    %v4038 = vpop.permute.xlu0 %4037
    %v4040 = vsel %vm1713, %v4038, 0
    %4042 = vmatprep.subr.bf16.mxu0 0
    %4043 = vmatpush1.bf16.msra.mxu0 %v1711
    %4044 = vmatprep.subr.bf16.mxu0 0
    %4045 = vmatpush1.bf16.msra.mxu0 0
    %4046 = vmatprep.subr.bf16.mxu0 0
    %4047 = vmatpush1.bf16.msra.mxu0 0
    %4048 = vmatprep.subr.bf16.mxu0 0
    %4049 = vmatpush1.bf16.msra.mxu0 0
    %4050 = vmatprep.subr.bf16.mxu0 0
    %4051 = vmatpush1.bf16.msra.mxu0 0
    %4052 = vmatprep.subr.bf16.mxu0 0
    %4053 = vmatpush1.bf16.msra.mxu0 0
    %4054 = vmatprep.subr.bf16.mxu0 0
    %4055 = vmatpush1.bf16.msra.mxu0 0
    %4056 = vmatprep.subr.bf16.mxu0 0
    %4057 = vmatpush1.bf16.msra.mxu0 0
    %4058 = vmatprep.subr.bf16.mxu0 0
    %4059 = vmatpush1.bf16.msra.mxu0 0
    %4060 = vmatprep.subr.bf16.mxu0 0
    %4061 = vmatpush1.bf16.msra.mxu0 0
    %4062 = vmatprep.subr.bf16.mxu0 0
    %4063 = vmatpush1.bf16.msra.mxu0 0
    %4064 = vmatprep.subr.bf16.mxu0 0
    %4065 = vmatpush1.bf16.msra.mxu0 0
    %4066 = vmatprep.subr.bf16.mxu0 0
    %4067 = vmatpush1.bf16.msra.mxu0 0
    %4068 = vmatprep.subr.bf16.mxu0 0
    %4069 = vmatpush1.bf16.msra.mxu0 0
    %4070 = vmatprep.subr.bf16.mxu0 0
    %4071 = vmatpush1.bf16.msra.mxu0 0
    %4072 = vmatprep.subr.bf16.mxu0 0
    %4073 = vmatpush1.bf16.msra.mxu0 0
    %4074 = vmatprep.mubr.bf16.mxu0 0
    %4075 = vmatmul.mubr.bf16.gmra.mrb[0].mxu0 %v4040
    %v4076 = vpop.f32.mrb[0].mxu0
    %v4077 = vadd.f32 0.0, %v4076
    %v4078 = vpop.f32.mrb[0].mxu0
    %v4079 = vpop.f32.mrb[0].mxu0
    %v4080 = vadd.f32 0.0, %v4079
    %v4081 = vpop.f32.mrb[0].mxu0
    %4082 = vdwg.mxu0
    %v4083 = vadd.f32 %v4033, %v4077
    %v4084 = vadd.f32 %v4034, %v4080
    %v4085 = vtanh.pop %v4083
    %v4086 = vtanh.pop %v4084
    %v4087 = vmul.f32 %v4085, 0.5
    %v4088 = vmul.f32 %v4086, 0.5
    %v4089 = vadd.f32 %v4087, 0.5
    %v4090 = vadd.f32 %v4088, 0.5
    %v4091 = vmul.f32 %v4089, %v4018
    %v4092 = vmul.f32 %v4090, %v4019
    %4095 = vrot.lane.b32.xlu0 %v4085, 80
    %v4096 = vpop.permute.xlu0 %4095
    %4097 = vrot.lane.b32.xlu0 %v4086, 80
    %v4098 = vpop.permute.xlu0 %4097
    %v4101 = vmul.f32 %v4089, %v4096
    %v4102 = vmul.f32 %v4090, %v4098
    %4105 = vrot.lane.b32.xlu0 %v4101, 16
    %v4106 = vpop.permute.xlu0 %4105
    %4107 = vrot.lane.b32.xlu0 %v4102, 16
    %v4108 = vpop.permute.xlu0 %4107
    %v4111 = vadd.f32 %v4091, %v4106
    %v4112 = vadd.f32 %v4092, %v4108
    %v4113 = vtanh.pop %v4111
    %v4114 = vtanh.pop %v4112
    %4117 = vrot.lane.b32.xlu0 %v4113, 16
    %v4118 = vpop.permute.xlu0 %4117
    %4119 = vrot.lane.b32.xlu0 %v4114, 16
    %v4120 = vpop.permute.xlu0 %4119
    %v4123 = vmul.f32 %v4089, %v4118
    %v4124 = vmul.f32 %v4090, %v4120
    %s4125 = scalar_lea.vmem [#allocation2], 416
    %v4126 = vld [vmem:[%s4125] sm:$0xff]
    %v4127 = vld [vmem:[%s4125 + $0x8] sm:$0xff]
    %v4128 = vpack.c.bf16 %v4124, %v4123
    %4130 = vrot.lane.b32.xlu0 %v4128, 96
    %v4131 = vpop.permute.xlu0 %4130
    %v4133 = vsel %vm1713, %v4131, 0
    %4135 = vmatprep.subr.bf16.mxu0 0
    %4136 = vmatpush1.bf16.msra.mxu0 %v1711
    %4137 = vmatprep.subr.bf16.mxu0 0
    %4138 = vmatpush1.bf16.msra.mxu0 0
    %4139 = vmatprep.subr.bf16.mxu0 0
    %4140 = vmatpush1.bf16.msra.mxu0 0
    %4141 = vmatprep.subr.bf16.mxu0 0
    %4142 = vmatpush1.bf16.msra.mxu0 0
    %4143 = vmatprep.subr.bf16.mxu0 0
    %4144 = vmatpush1.bf16.msra.mxu0 0
    %4145 = vmatprep.subr.bf16.mxu0 0
    %4146 = vmatpush1.bf16.msra.mxu0 0
    %4147 = vmatprep.subr.bf16.mxu0 0
    %4148 = vmatpush1.bf16.msra.mxu0 0
    %4149 = vmatprep.subr.bf16.mxu0 0
    %4150 = vmatpush1.bf16.msra.mxu0 0
    %4151 = vmatprep.subr.bf16.mxu0 0
    %4152 = vmatpush1.bf16.msra.mxu0 0
    %4153 = vmatprep.subr.bf16.mxu0 0
    %4154 = vmatpush1.bf16.msra.mxu0 0
    %4155 = vmatprep.subr.bf16.mxu0 0
    %4156 = vmatpush1.bf16.msra.mxu0 0
    %4157 = vmatprep.subr.bf16.mxu0 0
    %4158 = vmatpush1.bf16.msra.mxu0 0
    %4159 = vmatprep.subr.bf16.mxu0 0
    %4160 = vmatpush1.bf16.msra.mxu0 0
    %4161 = vmatprep.subr.bf16.mxu0 0
    %4162 = vmatpush1.bf16.msra.mxu0 0
    %4163 = vmatprep.subr.bf16.mxu0 0
    %4164 = vmatpush1.bf16.msra.mxu0 0
    %4165 = vmatprep.subr.bf16.mxu0 0
    %4166 = vmatpush1.bf16.msra.mxu0 0
    %4167 = vmatprep.mubr.bf16.mxu0 0
    %4168 = vmatmul.mubr.bf16.gmra.mrb[0].mxu0 %v4133
    %v4169 = vpop.f32.mrb[0].mxu0
    %v4170 = vadd.f32 0.0, %v4169
    %v4171 = vpop.f32.mrb[0].mxu0
    %v4172 = vpop.f32.mrb[0].mxu0
    %v4173 = vadd.f32 0.0, %v4172
    %v4174 = vpop.f32.mrb[0].mxu0
    %4175 = vdwg.mxu0
    %v4176 = vadd.f32 %v4126, %v4170
    %v4177 = vadd.f32 %v4127, %v4173
    %v4178 = vtanh.pop %v4176
    %v4179 = vtanh.pop %v4177
    %v4180 = vmul.f32 %v4178, 0.5
    %v4181 = vmul.f32 %v4179, 0.5
    %v4182 = vadd.f32 %v4180, 0.5
    %v4183 = vadd.f32 %v4181, 0.5
    %v4184 = vmul.f32 %v4182, %v4111
    %v4185 = vmul.f32 %v4183, %v4112
    %4188 = vrot.lane.b32.xlu0 %v4178, 80
    %v4189 = vpop.permute.xlu0 %4188
    %4190 = vrot.lane.b32.xlu0 %v4179, 80
    %v4191 = vpop.permute.xlu0 %4190
    %v4194 = vmul.f32 %v4182, %v4189
    %v4195 = vmul.f32 %v4183, %v4191
    %4198 = vrot.lane.b32.xlu0 %v4194, 16
    %v4199 = vpop.permute.xlu0 %4198
    %4200 = vrot.lane.b32.xlu0 %v4195, 16
    %v4201 = vpop.permute.xlu0 %4200
    %v4204 = vadd.f32 %v4184, %v4199
    %v4205 = vadd.f32 %v4185, %v4201
    %v4206 = vtanh.pop %v4204
    %v4207 = vtanh.pop %v4205
    %4210 = vrot.lane.b32.xlu0 %v4206, 16
    %v4211 = vpop.permute.xlu0 %4210
    %4212 = vrot.lane.b32.xlu0 %v4207, 16
    %v4213 = vpop.permute.xlu0 %4212
    %v4216 = vmul.f32 %v4182, %v4211
    %v4217 = vmul.f32 %v4183, %v4213
    %s4218 = scalar_lea.vmem [#allocation2], 432
    %v4219 = vld [vmem:[%s4218] sm:$0xff]
    %v4220 = vld [vmem:[%s4218 + $0x8] sm:$0xff]
    %v4221 = vpack.c.bf16 %v4217, %v4216
    %4223 = vrot.lane.b32.xlu0 %v4221, 96
    %v4224 = vpop.permute.xlu0 %4223
    %v4226 = vsel %vm1713, %v4224, 0
    %4228 = vmatprep.subr.bf16.mxu0 0
    %4229 = vmatpush1.bf16.msra.mxu0 %v1711
    %4230 = vmatprep.subr.bf16.mxu0 0
    %4231 = vmatpush1.bf16.msra.mxu0 0
    %4232 = vmatprep.subr.bf16.mxu0 0
    %4233 = vmatpush1.bf16.msra.mxu0 0
    %4234 = vmatprep.subr.bf16.mxu0 0
    %4235 = vmatpush1.bf16.msra.mxu0 0
    %4236 = vmatprep.subr.bf16.mxu0 0
    %4237 = vmatpush1.bf16.msra.mxu0 0
    %4238 = vmatprep.subr.bf16.mxu0 0
    %4239 = vmatpush1.bf16.msra.mxu0 0
    %4240 = vmatprep.subr.bf16.mxu0 0
    %4241 = vmatpush1.bf16.msra.mxu0 0
    %4242 = vmatprep.subr.bf16.mxu0 0
    %4243 = vmatpush1.bf16.msra.mxu0 0
    %4244 = vmatprep.subr.bf16.mxu0 0
    %4245 = vmatpush1.bf16.msra.mxu0 0
    %4246 = vmatprep.subr.bf16.mxu0 0
    %4247 = vmatpush1.bf16.msra.mxu0 0
    %4248 = vmatprep.subr.bf16.mxu0 0
    %4249 = vmatpush1.bf16.msra.mxu0 0
    %4250 = vmatprep.subr.bf16.mxu0 0
    %4251 = vmatpush1.bf16.msra.mxu0 0
    %4252 = vmatprep.subr.bf16.mxu0 0
    %4253 = vmatpush1.bf16.msra.mxu0 0
    %4254 = vmatprep.subr.bf16.mxu0 0
    %4255 = vmatpush1.bf16.msra.mxu0 0
    %4256 = vmatprep.subr.bf16.mxu0 0
    %4257 = vmatpush1.bf16.msra.mxu0 0
    %4258 = vmatprep.subr.bf16.mxu0 0
    %4259 = vmatpush1.bf16.msra.mxu0 0
    %4260 = vmatprep.mubr.bf16.mxu0 0
    %4261 = vmatmul.mubr.bf16.gmra.mrb[0].mxu0 %v4226
    %v4262 = vpop.f32.mrb[0].mxu0
    %v4263 = vadd.f32 0.0, %v4262
    %v4264 = vpop.f32.mrb[0].mxu0
    %v4265 = vpop.f32.mrb[0].mxu0
    %v4266 = vadd.f32 0.0, %v4265
    %v4267 = vpop.f32.mrb[0].mxu0
    %4268 = vdwg.mxu0
    %v4269 = vadd.f32 %v4219, %v4263
    %v4270 = vadd.f32 %v4220, %v4266
    %v4271 = vtanh.pop %v4269
    %v4272 = vtanh.pop %v4270
    %v4273 = vmul.f32 %v4271, 0.5
    %v4274 = vmul.f32 %v4272, 0.5
    %v4275 = vadd.f32 %v4273, 0.5
    %v4276 = vadd.f32 %v4274, 0.5
    %v4277 = vmul.f32 %v4275, %v4204
    %v4278 = vmul.f32 %v4276, %v4205
    %4281 = vrot.lane.b32.xlu0 %v4271, 80
    %v4282 = vpop.permute.xlu0 %4281
    %4283 = vrot.lane.b32.xlu0 %v4272, 80
    %v4284 = vpop.permute.xlu0 %4283
    %v4287 = vmul.f32 %v4275, %v4282
    %v4288 = vmul.f32 %v4276, %v4284
    %4291 = vrot.lane.b32.xlu0 %v4287, 16
    %v4292 = vpop.permute.xlu0 %4291
    %4293 = vrot.lane.b32.xlu0 %v4288, 16
    %v4294 = vpop.permute.xlu0 %4293
    %v4297 = vadd.f32 %v4277, %v4292
    %v4298 = vadd.f32 %v4278, %v4294
    %v4299 = vtanh.pop %v4297
    %v4300 = vtanh.pop %v4298
    %4303 = vrot.lane.b32.xlu0 %v4299, 16
    %v4304 = vpop.permute.xlu0 %4303
    %4305 = vrot.lane.b32.xlu0 %v4300, 16
    %v4306 = vpop.permute.xlu0 %4305
    %v4309 = vmul.f32 %v4275, %v4304
    %v4310 = vmul.f32 %v4276, %v4306
    %4313 = vrot.lane.b32.xlu0 %v4309, 96
    %v4314 = vpop.permute.xlu0 %4313
    %4315 = vrot.lane.b32.xlu0 %v4310, 96
    %v4316 = vpop.permute.xlu0 %4315
    %4321 = vrot.lane.b32.xlu0 %v1256, 112
    %v4322 = vpop.permute.xlu0 %4321
    %4323 = vrot.lane.b32.xlu0 %v1257, 112
    %v4324 = vpop.permute.xlu0 %4323
    %v4327 = vsel %vm1713, %v4314, %v4322
    %v4328 = vsel %vm1713, %v4316, %v4324
    %v4329 = vpack.c.bf16 %v4328, %v4327
    %v4330 = vld [vmem:[%s8] sm:$0xf]
    %v4331 = vld [vmem:[%s8 + $0x4] sm:$0xf]
    %v4332 = vld [vmem:[%s8 + $0x8] sm:$0xf]
    %v4333 = vld [vmem:[%s8 + $0xc] sm:$0xf]
    %v4334 = vld [vmem:[%s9] sm:$0x1]
    %v4336 = vlaneseq
    %v4337 = vshrl.u32 %v4336, 7
    %v4338 = vsub.s32 0, %v4337
    %v4339 = vrot.slane %v4334, %v4338
    %v4345 = vunpack.c.l.b16 %v4330
    %v4346 = vunpack.c.l.b16 %v4331
    %v4347 = vunpack.c.l.b16 %v4332
    %v4348 = vunpack.c.l.b16 %v4333
    %v4349 = vpack.c.b16 %v4346, %v4345
    %v4350 = vpack.c.b16 %v4348, %v4347
    %v4354 = vsel %vm1185, %v4329, 0
    %4356 = vmatprep.subr.bf16.mxu0 0
    %4357 = vmatpush1.bf16.msra.mxu0 %v4349
    %4358 = vmatprep.subr.bf16.mxu0 0
    %4359 = vmatpush1.bf16.msra.mxu0 %v4350
    %4360 = vmatprep.subr.bf16.mxu0 0
    %4361 = vmatpush1.bf16.msra.mxu0 0
    %4362 = vmatprep.subr.bf16.mxu0 0
    %4363 = vmatpush1.bf16.msra.mxu0 0
    %4364 = vmatprep.subr.bf16.mxu0 0
    %4365 = vmatpush1.bf16.msra.mxu0 0
    %4366 = vmatprep.subr.bf16.mxu0 0
    %4367 = vmatpush1.bf16.msra.mxu0 0
    %4368 = vmatprep.subr.bf16.mxu0 0
    %4369 = vmatpush1.bf16.msra.mxu0 0
    %4370 = vmatprep.subr.bf16.mxu0 0
    %4371 = vmatpush1.bf16.msra.mxu0 0
    %4372 = vmatprep.subr.bf16.mxu0 0
    %4373 = vmatpush1.bf16.msra.mxu0 0
    %4374 = vmatprep.subr.bf16.mxu0 0
    %4375 = vmatpush1.bf16.msra.mxu0 0
    %4376 = vmatprep.subr.bf16.mxu0 0
    %4377 = vmatpush1.bf16.msra.mxu0 0
    %4378 = vmatprep.subr.bf16.mxu0 0
    %4379 = vmatpush1.bf16.msra.mxu0 0
    %4380 = vmatprep.subr.bf16.mxu0 0
    %4381 = vmatpush1.bf16.msra.mxu0 0
    %4382 = vmatprep.subr.bf16.mxu0 0
    %4383 = vmatpush1.bf16.msra.mxu0 0
    %4384 = vmatprep.subr.bf16.mxu0 0
    %4385 = vmatpush1.bf16.msra.mxu0 0
    %4386 = vmatprep.subr.bf16.mxu0 0
    %4387 = vmatpush1.bf16.msra.mxu0 0
    %4388 = vmatprep.mubr.bf16.mxu0 0
    %4389 = vmatmul.mubr.bf16.gmra.mrb[0].mxu0 %v4354
    %v4390 = vpop.f32.mrb[0].mxu0
    %v4391 = vadd.f32 %v4339, %v4390
    %v4392 = vpop.f32.mrb[0].mxu0
    %v4393 = vpop.f32.mrb[0].mxu0
    %v4394 = vadd.f32 %v4339, %v4393
    %v4395 = vpop.f32.mrb[0].mxu0
    %4396 = vdwg.mxu0
    %vm4397 = vcmask 31744
    %v4398 = vsel %vm4397, %v4391, -inf
    %4399 = vmax.xlane.f32.xlu0 %v4398
    %v4400 = vpop.xlane.xlu0 %4399
    %v4401 = vsel %vm4397, %v4394, -inf
    %4402 = vmax.xlane.f32.xlu0 %v4401
    %v4403 = vpop.xlane.xlu0 %4402
    %v4404 = vsub.f32 %v4391, %v4400
    %v4405 = vsub.f32 %v4394, %v4403
    %v4406 = vmul.f32 %v4404, 1.442695
    %v4407 = vpow.pop %v4406
    %v4408 = vmul.f32 %v4405, 1.442695
    %v4409 = vpow.pop %v4408
    %v4410 = vsel %vm4397, %v4407, 0.0
    %4411 = vadd.xlane.f32.xlu0 %v4410
    %v4412 = vpop.xlane.xlu0 %4411
    %v4413 = vsel %vm4397, %v4409, 0.0
    %4414 = vadd.xlane.f32.xlu0 %v4413
    %v4415 = vpop.xlane.xlu0 %4414
    %v4416 = vrcp.pop %v4412
    %v4417 = vrcp.pop %v4415
    %v4418 = vmul.f32 %v4407, %v4416
    %v4419 = vmul.f32 %v4409, %v4417
    %4420 = vst.msk [vmem:[%s10] sm:$0xff] %vm4397, %v4418
    %4421 = vst.msk [vmem:[%s10 + $0x8] sm:$0xff] %vm4397, %v4419
    // Predicated region
    $region54: #{tpu_custom_call.1} parent=1 // pred_check
      _
    $region55: #{tpu_custom_call.1} parent=1 // pred_check_branch
      %4423 = sbr.rel (0) target = $region57
    $region56: #{tpu_custom_call.1} parent=1 // pred_region
      _
    $region57: #{tpu_custom_call.1} parent=1 // pred_fallthru
      _
    // Predicated region
    $region58: #{tpu_custom_call.1} parent=1 // pred_check
      _
    $region59: #{tpu_custom_call.1} parent=1 // pred_check_branch
      %4425 = sbr.rel (0) target = $region61
    $region60: #{tpu_custom_call.1} parent=1 // pred_region
      _
    $region61: #{tpu_custom_call.1} parent=1 // pred_fallthru
      _
    %4426 = vsyncpa [#allocation4], 1
    %4427 = vsyncpa [#allocation6], 1

</llo_original>
